<compile_context>
chip_gen: v7x
topology: tpu7x:2x2x1
jax: 0.10.0
libtpu: 0.0.40
codegen_flags: <defaults>
</compile_context>

<pallas_src>
import math
import numpy as np
import jax
import jax.numpy as jnp
from jax.experimental import pallas as pl
from jax.experimental.pallas import tpu as pltpu

# ----------------------------- configuration --------------------------------
IN_CHANNELS = 7          # DiT default action size
HIDDEN      = 32         # hidden_size (small)
DEPTH       = 2          # number of DiT blocks (small)
NUM_HEADS   = 4
MLP_RATIO   = 4.0
TOKEN_SIZE  = 64         # condition token size (small)
FREQ_EMB    = 256        # TimestepEmbedder.frequency_embedding_size (default)
FUTURE      = 7          # future_action_window_size -> T = FUTURE + 1 = 8
NUM_EXTRA   = 0
N_BATCH     = 2

T_SEQ       = FUTURE + 1                 # 8 action tokens
S_SEQ       = T_SEQ + 1 + NUM_EXTRA      # 9 tokens after prepending condition
S_ALL       = N_BATCH * S_SEQ            # 18 rows once batch is folded into M
MLP_HIDDEN  = int(HIDDEN * MLP_RATIO)    # 128
HEAD_DIM    = HIDDEN // NUM_HEADS        # 8
OUT_CH      = IN_CHANNELS                # learn_sigma=False
EPS         = 1e-6
LANE        = 128                        # lane-dense padded width

# Block-diagonal attention mask for the batch-folded token layout:
#   rows [0, N)               : condition token of batch b
#   rows [N + b*T, N+(b+1)*T) : action tokens of batch b
_BID = np.concatenate([np.arange(N_BATCH),
                       np.repeat(np.arange(N_BATCH), T_SEQ)]).astype(np.int32)
_MASK_NP = np.where(_BID[:, None] == _BID[None, :], 0.0, -1e30).astype(np.float32)


# ----------------------------- Pallas kernel ---------------------------------
def _layernorm(v):
    mu = jnp.mean(v, axis=-1, keepdims=True)
    var = jnp.mean((v - mu) ** 2, axis=-1, keepdims=True)
    return (v - mu) * jax.lax.rsqrt(var + EPS)


def dit_fused_kernel(xf_ref, tfreq_ref, zf_ref,
                     wx_ref, wt1_ref, tb1_ref, wt2_ref, wz_ref,
                     addvec_ref, mask_ref,
                     qkvw_ref, qkvb_ref, projw_ref, projb_ref,
                     w1_ref, b1_ref, w2_ref, b2_ref,
                     finw_ref, finb_ref,
                     o_ref, tok_s):
    f32 = jnp.float32

    # ------------------------------ embedders --------------------------------
    x_emb = jnp.dot(xf_ref[...], wx_ref[...], preferred_element_type=f32)   # (N*T, H)
    h1 = jnp.dot(tfreq_ref[...], wt1_ref[...], preferred_element_type=f32) + tb1_ref[...]
    h1 = h1 / (1.0 + jnp.exp(-h1))                                          # SiLU
    t_emb = jnp.dot(h1, wt2_ref[...], preferred_element_type=f32)           # (N, H)
    z_emb = jnp.dot(zf_ref[...], wz_ref[...], preferred_element_type=f32)   # (N, H)

    # assemble (N*S, H) tokens: [cond_0..cond_{N-1}, act_b0 (T rows), act_b1 ...]
    tok_s[0:N_BATCH, :] = t_emb + z_emb
    tok_s[N_BATCH:S_ALL, :] = x_emb
    h = tok_s[...] + addvec_ref[...]          # positional emb + folded embed biases

    mask = mask_ref[...]                      # (N*S, N*S) block-diagonal additive
    scale = HEAD_DIM ** -0.5

    # ----------------------------- DiT blocks --------------------------------
    for d in range(DEPTH):                    # static unroll; weights stay resident
        # ---- attention branch ----
        n1 = _layernorm(h)
        qkv = (jnp.dot(n1, qkvw_ref[d], preferred_element_type=f32)
               + qkvb_ref[d])                 # (N*S, 128): cols [q | k | v | pad]
        pw = projw_ref[d]                     # (H, H)

        acc = None
        for hd_i in range(NUM_HEADS):         # static; 8-lane-aligned slices
            lo = hd_i * HEAD_DIM
            q_h = qkv[:, lo:lo + HEAD_DIM]
            k_h = qkv[:, HIDDEN + lo:HIDDEN + lo + HEAD_DIM]
            v_h = qkv[:, 2 * HIDDEN + lo:2 * HIDDEN + lo + HEAD_DIM]
            s = jax.lax.dot_general(           # q @ k^T -> (N*S, N*S)
                q_h, k_h, dimension_numbers=(((1,), (1,)), ((), ())),
                preferred_element_type=f32) * scale + mask
            m = jnp.max(s, axis=-1, keepdims=True)
            p_att = jnp.exp(s - m)
            p_att = p_att * pl.reciprocal(
                jnp.sum(p_att, axis=-1, keepdims=True), approx=True)
            o_h = jnp.dot(p_att, v_h, preferred_element_type=f32)          # (N*S, hd)
            contrib = jnp.dot(o_h, pw[lo:lo + HEAD_DIM, :],                # (N*S, H)
                              preferred_element_type=f32)
            acc = contrib if acc is None else acc + contrib
        h = h + acc + projb_ref[d]

        # ---- MLP branch ----
        n2 = _layernorm(h)
        mh = jnp.dot(n2, w1_ref[d], preferred_element_type=f32) + b1_ref[d]
        mh = jax.nn.gelu(mh, approximate=True)                             # GELU(tanh)
        h = h + jnp.dot(mh, w2_ref[d], preferred_element_type=f32) + b2_ref[d]

    # ----------------------- final layer (lane-dense) ------------------------
    nf = _layernorm(h)
    o_ref[...] = (jnp.dot(nf, finw_ref[...], preferred_element_type=f32)
                  + finb_ref[...])


# ------------------------------- wrapper --------------------------------------
def dit_fused(x, t_freq, z, p):
    f32 = jnp.float32
    # --- host-side packing into kernel-friendly layouts (traced, tiny) -------
    xf = x.reshape(N_BATCH * T_SEQ, IN_CHANNELS).astype(f32)
    zf = z.reshape(N_BATCH, TOKEN_SIZE).astype(f32)
    tb1 = p["tb1"].reshape(1, HIDDEN)

    # positional embedding + embedder biases folded into one additive row table
    cond_row = p["pos"][0:1] + (p["tb2"] + p["bz"])[None, :]                # (1, H)
    act_rows = p["pos"][1 + NUM_EXTRA:] + p["bx"][None, :]                  # (T, H)
    addvec = jnp.concatenate([jnp.tile(cond_row, (N_BATCH, 1)),
                              jnp.tile(act_rows, (N_BATCH, 1))], axis=0)    # (N*S, H)

    # fused qkv weight / bias, zero-padded from 3H=96 to 128 lanes
    qkvw = jnp.zeros((DEPTH, HIDDEN, LANE), f32).at[:, :, :3 * HIDDEN].set(p["qkvw"])
    qkvb = jnp.zeros((DEPTH, 1, LANE), f32).at[:, :, :3 * HIDDEN].set(p["qkvb"])

    # final layer, lane-padded to 128 for a lane-dense output store
    finw = jnp.zeros((HIDDEN, LANE), f32).at[:, :OUT_CH].set(p["finw"])
    finb = jnp.zeros((1, LANE), f32).at[:, :OUT_CH].set(p["finb"])

    mask = jnp.asarray(_MASK_NP)

    operands = (xf, t_freq.astype(f32), zf,
                p["wx"], p["tw1"], tb1, p["tw2"], p["wz"],
                addvec, mask,
                qkvw, qkvb, p["projw"], p["projb"],
                p["w1"], p["b1"], p["w2"], p["b2"],
                finw, finb)

    in_specs = [pl.BlockSpec(op.shape, lambda i, nd=op.ndim: (0,) * nd)
                for op in operands]

    out = pl.pallas_call(
        dit_fused_kernel,
        out_shape=jax.ShapeDtypeStruct((S_ALL, LANE), f32),
        grid_spec=pltpu.PrefetchScalarGridSpec(
            num_scalar_prefetch=0,
            grid=(1,),                       # batch + depth folded: one grid step
            in_specs=in_specs,
            out_specs=pl.BlockSpec((S_ALL, LANE), lambda i: (0, 0)),
            scratch_shapes=[pltpu.VMEM((S_ALL, HIDDEN), f32)],
        ),
        compiler_params=pltpu.CompilerParams(
            dimension_semantics=("arbitrary",)),
    )(*operands)
    return out


def timestep_embedding(t, dim):
    half = dim // 2
    freqs = jnp.exp(-math.log(10000.0)
                    * jnp.arange(half, dtype=jnp.float32) / half)
    args = t[:, None].astype(jnp.float32) * freqs[None]
    return jnp.concatenate([jnp.cos(args), jnp.sin(args)], axis=-1)


@jax.jit
def dit_forward(x, t, z, p):
    # Sinusoidal timestep features stay in the wrapper (a handful of tiny
    # elementwise XLA ops); everything else runs inside one pallas_call.
    # TODO(synk): training-mode LabelEmbedder token_drop (CFG dropout) uses
    # torch.rand and is not reproduced; this is the eval path.
    t_freq = timestep_embedding(t, FREQ_EMB)                      # (N, 256)
    out = dit_fused(x, t_freq, z, p)                              # (N*S, 128)
    act = out[N_BATCH:].reshape(N_BATCH, T_SEQ, LANE)
    return act[:, :, :OUT_CH]                                     # (N, T, out_ch)


# ---------------------------- pure-JAX reference ------------------------------
def ref_forward(x, t, z, p):
    x_emb = x.astype(jnp.float32) @ p["wx"] + p["bx"]             # (N,T,H)
    t_freq = timestep_embedding(t, FREQ_EMB)
    h1 = t_freq @ p["tw1"] + p["tb1"]
    h1 = h1 * jax.nn.sigmoid(h1)
    t_emb = h1 @ p["tw2"] + p["tb2"]                              # (N,H)
    z_emb = z.astype(jnp.float32) @ p["wz"] + p["bz"]             # (N,1,H)
    c = t_emb[:, None, :] + z_emb
    h = jnp.concatenate([c, x_emb], axis=1) + p["pos"][None]      # (N,S,H)

    def ln(v):
        mu = v.mean(-1, keepdims=True)
        var = ((v - mu) ** 2).mean(-1, keepdims=True)
        return (v - mu) / jnp.sqrt(var + EPS)

    scale = HEAD_DIM ** -0.5
    for d in range(DEPTH):
        n1 = ln(h)
        qkv = n1 @ p["qkvw"][d] + p["qkvb"][d, 0]
        q, k, v = jnp.split(qkv, 3, axis=-1)
        q = q.reshape(N_BATCH, S_SEQ, NUM_HEADS, HEAD_DIM)
        k = k.reshape(N_BATCH, S_SEQ, NUM_HEADS, HEAD_DIM)
        v = v.reshape(N_BATCH, S_SEQ, NUM_HEADS, HEAD_DIM)
        scores = jnp.einsum("bqhd,bkhd->bhqk", q, k) * scale
        pa = jax.nn.softmax(scores, axis=-1)
        o = jnp.einsum("bhqk,bkhd->bqhd", pa, v).reshape(N_BATCH, S_SEQ, HIDDEN)
        h = h + (o @ p["projw"][d] + p["projb"][d, 0])
        n2 = ln(h)
        mh = jax.nn.gelu(n2 @ p["w1"][d] + p["b1"][d, 0], approximate=True)
        h = h + (mh @ p["w2"][d] + p["b2"][d, 0])
    out = ln(h) @ p["finw"] + p["finb"]
    return out[:, 1 + NUM_EXTRA:, :]


# --------------------------- deterministic params -----------------------------
def init_params(key):
    ks = iter(jax.random.split(key, 40))

    def normal(shape, std):
        return (std * jax.random.normal(next(ks), shape)).astype(jnp.float32)

    def xavier(shape):                       # (fan_in, fan_out) layout
        lim = math.sqrt(6.0 / (shape[-2] + shape[-1]))
        return jax.random.uniform(next(ks), shape, minval=-lim, maxval=lim,
                                  dtype=jnp.float32)

    p = {}
    # NOTE: the PyTorch module zero-inits every bias (and the final layer);
    # small random values are used here instead so the numerical check below
    # actually exercises the kernel's bias folding / final projection.
    p["wx"]  = normal((IN_CHANNELS, HIDDEN), 0.02)
    p["bx"]  = normal((HIDDEN,), 0.02)
    p["tw1"] = normal((FREQ_EMB, HIDDEN), 0.02)
    p["tb1"] = normal((HIDDEN,), 0.02)
    p["tw2"] = normal((HIDDEN, HIDDEN), 0.02)
    p["tb2"] = normal((HIDDEN,), 0.02)
    p["wz"]  = normal((TOKEN_SIZE, HIDDEN), 0.02)
    p["bz"]  = normal((HIDDEN,), 0.02)
    p["pos"] = normal((S_SEQ, HIDDEN), HIDDEN ** -0.5)
    # per-block weights stacked along depth, stored (in, out) for x @ W
    p["qkvw"]  = xavier((DEPTH, HIDDEN, 3 * HIDDEN))
    p["qkvb"]  = normal((DEPTH, 1, 3 * HIDDEN), 0.02)
    p["projw"] = xavier((DEPTH, HIDDEN, HIDDEN))
    p["projb"] = normal((DEPTH, 1, HIDDEN), 0.02)
    p["w1"]    = xavier((DEPTH, HIDDEN, MLP_HIDDEN))
    p["b1"]    = normal((DEPTH, 1, MLP_HIDDEN), 0.02)
    p["w2"]    = xavier((DEPTH, MLP_HIDDEN, HIDDEN))
    p["b2"]    = normal((DEPTH, 1, HIDDEN), 0.02)
    p["finw"]  = normal((HIDDEN, OUT_CH), 0.02)
    p["finb"]  = normal((1, OUT_CH), 0.02)
    return p


# ------------------------------------ main ------------------------------------
if __name__ == "__main__":
    key = jax.random.PRNGKey(0)
    k_p, k_x, k_t, k_z = jax.random.split(key, 4)

    params = init_params(k_p)
    x = jax.random.normal(k_x, (N_BATCH, T_SEQ, IN_CHANNELS), dtype=jnp.float32)
    t = jax.random.uniform(k_t, (N_BATCH,), minval=0.0, maxval=1000.0,
                           dtype=jnp.float32)
    z = jax.random.normal(k_z, (N_BATCH, 1, TOKEN_SIZE), dtype=jnp.float32)

    out = jax.block_until_ready(dit_forward(x, t, z, params))
    ref = jax.block_until_ready(ref_forward(x, t, z, params))

    assert out.shape == (N_BATCH, T_SEQ, OUT_CH), out.shape
    assert np.all(np.isfinite(np.asarray(out)))
    np.testing.assert_allclose(np.asarray(out), np.asarray(ref),
                               atol=1e-2, rtol=1e-2)
    print("KERNEL_OK")
</pallas_src>

<mosaic_0001>
module attributes {stable_mosaic.version = 11 : i64} {
  func.func @dit_fused_kernel(%arg0: i32, %arg1: memref<16x7xf32, #tpu.memory_space<vmem>>, %arg2: memref<2x256xf32, #tpu.memory_space<vmem>>, %arg3: memref<2x64xf32, #tpu.memory_space<vmem>>, %arg4: memref<7x32xf32, #tpu.memory_space<vmem>>, %arg5: memref<256x32xf32, #tpu.memory_space<vmem>>, %arg6: memref<1x32xf32, #tpu.memory_space<vmem>>, %arg7: memref<32x32xf32, #tpu.memory_space<vmem>>, %arg8: memref<64x32xf32, #tpu.memory_space<vmem>>, %arg9: memref<18x32xf32, #tpu.memory_space<vmem>>, %arg10: memref<18x18xf32, #tpu.memory_space<vmem>>, %arg11: memref<2x32x128xf32, #tpu.memory_space<vmem>>, %arg12: memref<2x1x128xf32, #tpu.memory_space<vmem>>, %arg13: memref<2x32x32xf32, #tpu.memory_space<vmem>>, %arg14: memref<2x1x32xf32, #tpu.memory_space<vmem>>, %arg15: memref<2x32x128xf32, #tpu.memory_space<vmem>>, %arg16: memref<2x1x128xf32, #tpu.memory_space<vmem>>, %arg17: memref<2x128x32xf32, #tpu.memory_space<vmem>>, %arg18: memref<2x1x32xf32, #tpu.memory_space<vmem>>, %arg19: memref<32x128xf32, #tpu.memory_space<vmem>>, %arg20: memref<1x128xf32, #tpu.memory_space<vmem>>, %arg21: memref<18x128xf32, #tpu.memory_space<vmem>>, %arg22: memref<18x32xf32, #tpu.memory_space<vmem>>) attributes {dimension_semantics = [#tpu.dimension_semantics<arbitrary>], iteration_bounds = array<i64: 1>, scalar_prefetch = 0 : i64, scratch_operands = 1 : i64, tpu.core_type = #tpu.core_type<tc>, window_params = [{pipeline_mode = #tpu.pipeline_mode<synchronous>, transform_indices = @transform_0, window_bounds = array<i64: 16, 7>}, {pipeline_mode = #tpu.pipeline_mode<synchronous>, transform_indices = @transform_1, window_bounds = array<i64: 2, 256>}, {pipeline_mode = #tpu.pipeline_mode<synchronous>, transform_indices = @transform_2, window_bounds = array<i64: 2, 64>}, {pipeline_mode = #tpu.pipeline_mode<synchronous>, transform_indices = @transform_3, window_bounds = array<i64: 7, 32>}, {pipeline_mode = #tpu.pipeline_mode<synchronous>, transform_indices = @transform_4, window_bounds = array<i64: 256, 32>}, {pipeline_mode = #tpu.pipeline_mode<synchronous>, transform_indices = @transform_5, window_bounds = array<i64: 1, 32>}, {pipeline_mode = #tpu.pipeline_mode<synchronous>, transform_indices = @transform_6, window_bounds = array<i64: 32, 32>}, {pipeline_mode = #tpu.pipeline_mode<synchronous>, transform_indices = @transform_7, window_bounds = array<i64: 64, 32>}, {pipeline_mode = #tpu.pipeline_mode<synchronous>, transform_indices = @transform_8, window_bounds = array<i64: 18, 32>}, {pipeline_mode = #tpu.pipeline_mode<synchronous>, transform_indices = @transform_9, window_bounds = array<i64: 18, 18>}, {pipeline_mode = #tpu.pipeline_mode<synchronous>, transform_indices = @transform_10, window_bounds = array<i64: 2, 32, 128>}, {pipeline_mode = #tpu.pipeline_mode<synchronous>, transform_indices = @transform_11, window_bounds = array<i64: 2, 1, 128>}, {pipeline_mode = #tpu.pipeline_mode<synchronous>, transform_indices = @transform_12, window_bounds = array<i64: 2, 32, 32>}, {pipeline_mode = #tpu.pipeline_mode<synchronous>, transform_indices = @transform_13, window_bounds = array<i64: 2, 1, 32>}, {pipeline_mode = #tpu.pipeline_mode<synchronous>, transform_indices = @transform_14, window_bounds = array<i64: 2, 32, 128>}, {pipeline_mode = #tpu.pipeline_mode<synchronous>, transform_indices = @transform_15, window_bounds = array<i64: 2, 1, 128>}, {pipeline_mode = #tpu.pipeline_mode<synchronous>, transform_indices = @transform_16, window_bounds = array<i64: 2, 128, 32>}, {pipeline_mode = #tpu.pipeline_mode<synchronous>, transform_indices = @transform_17, window_bounds = array<i64: 2, 1, 32>}, {pipeline_mode = #tpu.pipeline_mode<synchronous>, transform_indices = @transform_18, window_bounds = array<i64: 32, 128>}, {pipeline_mode = #tpu.pipeline_mode<synchronous>, transform_indices = @transform_19, window_bounds = array<i64: 1, 128>}, {pipeline_mode = #tpu.pipeline_mode<synchronous>, transform_indices = @transform_20, window_bounds = array<i64: 18, 128>}]} {
    %c0 = arith.constant 0 : index
    %c0_0 = arith.constant 0 : index
    %0 = vector.load %arg1[%c0, %c0_0] : memref<16x7xf32, #tpu.memory_space<vmem>>, vector<16x7xf32>
    %c0_1 = arith.constant 0 : index
    %c0_2 = arith.constant 0 : index
    %1 = vector.load %arg4[%c0_1, %c0_2] : memref<7x32xf32, #tpu.memory_space<vmem>>, vector<7x32xf32>
    %cst = arith.constant dense<0.000000e+00> : vector<16x32xf32>
    %2 = tpu.matmul %0, %1, %cst {dimension_numbers = #tpu.dot_dimension_numbers<[1], [0], [0], [1], [0, 0, 1, 1], [], []>} : vector<16x7xf32>, vector<7x32xf32>, vector<16x32xf32> -> vector<16x32xf32>
    %c0_3 = arith.constant 0 : index
    %c0_4 = arith.constant 0 : index
    %3 = vector.load %arg2[%c0_3, %c0_4] : memref<2x256xf32, #tpu.memory_space<vmem>>, vector<2x256xf32>
    %c0_5 = arith.constant 0 : index
    %c0_6 = arith.constant 0 : index
    %4 = vector.load %arg5[%c0_5, %c0_6] : memref<256x32xf32, #tpu.memory_space<vmem>>, vector<256x32xf32>
    %cst_7 = arith.constant dense<0.000000e+00> : vector<2x32xf32>
    %5 = tpu.matmul %3, %4, %cst_7 {dimension_numbers = #tpu.dot_dimension_numbers<[1], [0], [0], [1], [0, 0, 1, 1], [], []>} : vector<2x256xf32>, vector<256x32xf32>, vector<2x32xf32> -> vector<2x32xf32>
    %c0_8 = arith.constant 0 : index
    %c0_9 = arith.constant 0 : index
    %6 = vector.load %arg6[%c0_8, %c0_9] : memref<1x32xf32, #tpu.memory_space<vmem>>, vector<1x32xf32>
    %7 = vector.broadcast %6 : vector<1x32xf32> to vector<2x32xf32>
    %8 = arith.addf %5, %7 : vector<2x32xf32>
    %cst_10 = arith.constant 0.000000e+00 : f32
    %9 = vector.broadcast %cst_10 : f32 to vector<2x32xf32>
    %10 = arith.subf %9, %8 : vector<2x32xf32>
    %11 = math.exp %10 : vector<2x32xf32>
    %cst_11 = arith.constant 1.000000e+00 : f32
    %12 = vector.broadcast %cst_11 : f32 to vector<2x32xf32>
    %13 = arith.addf %12, %11 : vector<2x32xf32>
    %14 = arith.divf %8, %13 : vector<2x32xf32>
    %c0_12 = arith.constant 0 : index
    %c0_13 = arith.constant 0 : index
    %15 = vector.load %arg7[%c0_12, %c0_13] : memref<32x32xf32, #tpu.memory_space<vmem>>, vector<32x32xf32>
    %cst_14 = arith.constant dense<0.000000e+00> : vector<2x32xf32>
    %16 = tpu.matmul %14, %15, %cst_14 {dimension_numbers = #tpu.dot_dimension_numbers<[1], [0], [0], [1], [0, 0, 1, 1], [], []>} : vector<2x32xf32>, vector<32x32xf32>, vector<2x32xf32> -> vector<2x32xf32>
    %c0_15 = arith.constant 0 : index
    %c0_16 = arith.constant 0 : index
    %17 = vector.load %arg3[%c0_15, %c0_16] : memref<2x64xf32, #tpu.memory_space<vmem>>, vector<2x64xf32>
    %c0_17 = arith.constant 0 : index
    %c0_18 = arith.constant 0 : index
    %18 = vector.load %arg8[%c0_17, %c0_18] : memref<64x32xf32, #tpu.memory_space<vmem>>, vector<64x32xf32>
    %cst_19 = arith.constant dense<0.000000e+00> : vector<2x32xf32>
    %19 = tpu.matmul %17, %18, %cst_19 {dimension_numbers = #tpu.dot_dimension_numbers<[1], [0], [0], [1], [0, 0, 1, 1], [], []>} : vector<2x64xf32>, vector<64x32xf32>, vector<2x32xf32> -> vector<2x32xf32>
    %20 = arith.addf %16, %19 : vector<2x32xf32>
    %c0_20 = arith.constant 0 : index
    %c0_21 = arith.constant 0 : index
    %21 = vector.load %arg22[%c0_20, %c0_21] : memref<18x32xf32, #tpu.memory_space<vmem>>, vector<2x32xf32>
    tpu.vector_store %arg22[%c0_20, %c0_21], %20 {strides = array<i32>} : memref<18x32xf32, #tpu.memory_space<vmem>>, vector<2x32xf32>,
    %c2 = arith.constant 2 : index
    %c0_22 = arith.constant 0 : index
    %22 = vector.load %arg22[%c2, %c0_22] : memref<18x32xf32, #tpu.memory_space<vmem>>, vector<16x32xf32>
    tpu.vector_store %arg22[%c2, %c0_22], %2 {strides = array<i32>} : memref<18x32xf32, #tpu.memory_space<vmem>>, vector<16x32xf32>,
    %c0_23 = arith.constant 0 : index
    %c0_24 = arith.constant 0 : index
    %23 = vector.load %arg22[%c0_23, %c0_24] : memref<18x32xf32, #tpu.memory_space<vmem>>, vector<18x32xf32>
    %c0_25 = arith.constant 0 : index
    %c0_26 = arith.constant 0 : index
    %24 = vector.load %arg9[%c0_25, %c0_26] : memref<18x32xf32, #tpu.memory_space<vmem>>, vector<18x32xf32>
    %25 = arith.addf %23, %24 : vector<18x32xf32>
    %c0_27 = arith.constant 0 : index
    %c0_28 = arith.constant 0 : index
    %26 = vector.load %arg10[%c0_27, %c0_28] : memref<18x18xf32, #tpu.memory_space<vmem>>, vector<18x18xf32>
    %cst_29 = arith.constant dense<0.000000e+00> : vector<18xf32>
    %27 = vector.multi_reduction <add>, %25, %cst_29 [1] : vector<18x32xf32> to vector<18xf32>
    %28 = vector.shape_cast %27 : vector<18xf32> to vector<18x1xf32>
    %cst_30 = arith.constant 3.200000e+01 : f32
    %29 = vector.broadcast %cst_30 : f32 to vector<18x1xf32>
    %30 = arith.divf %28, %29 : vector<18x1xf32>
    %31 = vector.broadcast %30 : vector<18x1xf32> to vector<18x32xf32>
    %32 = arith.subf %25, %31 : vector<18x32xf32>
    %33 = arith.mulf %32, %32 : vector<18x32xf32>
    %cst_31 = arith.constant dense<0.000000e+00> : vector<18xf32>
    %34 = vector.multi_reduction <add>, %33, %cst_31 [1] : vector<18x32xf32> to vector<18xf32>
    %35 = vector.shape_cast %34 : vector<18xf32> to vector<18x1xf32>
    %cst_32 = arith.constant 3.200000e+01 : f32
    %36 = vector.broadcast %cst_32 : f32 to vector<18x1xf32>
    %37 = arith.divf %35, %36 : vector<18x1xf32>
    %38 = vector.broadcast %30 : vector<18x1xf32> to vector<18x32xf32>
    %39 = arith.subf %25, %38 : vector<18x32xf32>
    %cst_33 = arith.constant 9.99999997E-7 : f32
    %40 = vector.broadcast %cst_33 : f32 to vector<18x1xf32>
    %41 = arith.addf %37, %40 : vector<18x1xf32>
    %42 = math.rsqrt %41 : vector<18x1xf32>
    %43 = vector.broadcast %42 : vector<18x1xf32> to vector<18x32xf32>
    %44 = arith.mulf %39, %43 : vector<18x32xf32>
    %c0_34 = arith.constant 0 : index
    %c0_35 = arith.constant 0 : index
    %c0_36 = arith.constant 0 : index
    %45 = vector.load %arg11[%c0_34, %c0_35, %c0_36] : memref<2x32x128xf32, #tpu.memory_space<vmem>>, vector<1x32x128xf32>
    %46 = vector.shape_cast %45 : vector<1x32x128xf32> to vector<32x128xf32>
    %cst_37 = arith.constant dense<0.000000e+00> : vector<18x128xf32>
    %47 = tpu.matmul %44, %46, %cst_37 {dimension_numbers = #tpu.dot_dimension_numbers<[1], [0], [0], [1], [0, 0, 1, 1], [], []>} : vector<18x32xf32>, vector<32x128xf32>, vector<18x128xf32> -> vector<18x128xf32>
    %c0_38 = arith.constant 0 : index
    %c0_39 = arith.constant 0 : index
    %c0_40 = arith.constant 0 : index
    %48 = vector.load %arg12[%c0_38, %c0_39, %c0_40] : memref<2x1x128xf32, #tpu.memory_space<vmem>>, vector<1x1x128xf32>
    %49 = vector.shape_cast %48 : vector<1x1x128xf32> to vector<1x128xf32>
    %50 = vector.broadcast %49 : vector<1x128xf32> to vector<18x128xf32>
    %51 = arith.addf %47, %50 : vector<18x128xf32>
    %c0_41 = arith.constant 0 : index
    %c0_42 = arith.constant 0 : index
    %c0_43 = arith.constant 0 : index
    %52 = vector.load %arg13[%c0_41, %c0_42, %c0_43] : memref<2x32x32xf32, #tpu.memory_space<vmem>>, vector<1x32x32xf32>
    %53 = vector.shape_cast %52 : vector<1x32x32xf32> to vector<32x32xf32>
    %54 = vector.extract_strided_slice %51 {offsets = [0, 0], sizes = [18, 8], strides = [1, 1]} : vector<18x128xf32> to vector<18x8xf32>
    %55 = vector.extract_strided_slice %51 {offsets = [0, 32], sizes = [18, 8], strides = [1, 1]} : vector<18x128xf32> to vector<18x8xf32>
    %56 = vector.extract_strided_slice %51 {offsets = [0, 64], sizes = [18, 8], strides = [1, 1]} : vector<18x128xf32> to vector<18x8xf32>
    %cst_44 = arith.constant dense<0.000000e+00> : vector<18x18xf32>
    %57 = tpu.matmul %54, %55, %cst_44 {dimension_numbers = #tpu.dot_dimension_numbers<[1], [1], [0], [0], [0, 0, 1, 0], [], []>} : vector<18x8xf32>, vector<18x8xf32>, vector<18x18xf32> -> vector<18x18xf32>
    %cst_45 = arith.constant 0.353553385 : f32
    %58 = vector.broadcast %cst_45 : f32 to vector<18x18xf32>
    %59 = arith.mulf %57, %58 : vector<18x18xf32>
    %60 = arith.addf %59, %26 : vector<18x18xf32>
    %cst_46 = arith.constant dense<0xFF800000> : vector<18xf32>
    %61 = vector.multi_reduction <maximumf>, %60, %cst_46 [1] : vector<18x18xf32> to vector<18xf32>
    %62 = vector.shape_cast %61 : vector<18xf32> to vector<18x1xf32>
    %63 = vector.broadcast %62 : vector<18x1xf32> to vector<18x18xf32>
    %64 = arith.subf %60, %63 : vector<18x18xf32>
    %65 = math.exp %64 : vector<18x18xf32>
    %cst_47 = arith.constant dense<0.000000e+00> : vector<18xf32>
    %66 = vector.multi_reduction <add>, %65, %cst_47 [1] : vector<18x18xf32> to vector<18xf32>
    %67 = vector.shape_cast %66 : vector<18xf32> to vector<18x1xf32>
    %68 = tpu.reciprocal %67 {approx = true} : vector<18x1xf32> -> vector<18x1xf32>
    %69 = vector.broadcast %68 : vector<18x1xf32> to vector<18x18xf32>
    %70 = arith.mulf %65, %69 : vector<18x18xf32>
    %cst_48 = arith.constant dense<0.000000e+00> : vector<18x8xf32>
    %71 = tpu.matmul %70, %56, %cst_48 {dimension_numbers = #tpu.dot_dimension_numbers<[1], [0], [0], [1], [0, 0, 1, 1], [], []>} : vector<18x18xf32>, vector<18x8xf32>, vector<18x8xf32> -> vector<18x8xf32>
    %72 = vector.extract_strided_slice %53 {offsets = [0, 0], sizes = [8, 32], strides = [1, 1]} : vector<32x32xf32> to vector<8x32xf32>
    %cst_49 = arith.constant dense<0.000000e+00> : vector<18x32xf32>
    %73 = tpu.matmul %71, %72, %cst_49 {dimension_numbers = #tpu.dot_dimension_numbers<[1], [0], [0], [1], [0, 0, 1, 1], [], []>} : vector<18x8xf32>, vector<8x32xf32>, vector<18x32xf32> -> vector<18x32xf32>
    %74 = vector.extract_strided_slice %51 {offsets = [0, 8], sizes = [18, 8], strides = [1, 1]} : vector<18x128xf32> to vector<18x8xf32>
    %75 = vector.extract_strided_slice %51 {offsets = [0, 40], sizes = [18, 8], strides = [1, 1]} : vector<18x128xf32> to vector<18x8xf32>
    %76 = vector.extract_strided_slice %51 {offsets = [0, 72], sizes = [18, 8], strides = [1, 1]} : vector<18x128xf32> to vector<18x8xf32>
    %cst_50 = arith.constant dense<0.000000e+00> : vector<18x18xf32>
    %77 = tpu.matmul %74, %75, %cst_50 {dimension_numbers = #tpu.dot_dimension_numbers<[1], [1], [0], [0], [0, 0, 1, 0], [], []>} : vector<18x8xf32>, vector<18x8xf32>, vector<18x18xf32> -> vector<18x18xf32>
    %cst_51 = arith.constant 0.353553385 : f32
    %78 = vector.broadcast %cst_51 : f32 to vector<18x18xf32>
    %79 = arith.mulf %77, %78 : vector<18x18xf32>
    %80 = arith.addf %79, %26 : vector<18x18xf32>
    %cst_52 = arith.constant dense<0xFF800000> : vector<18xf32>
    %81 = vector.multi_reduction <maximumf>, %80, %cst_52 [1] : vector<18x18xf32> to vector<18xf32>
    %82 = vector.shape_cast %81 : vector<18xf32> to vector<18x1xf32>
    %83 = vector.broadcast %82 : vector<18x1xf32> to vector<18x18xf32>
    %84 = arith.subf %80, %83 : vector<18x18xf32>
    %85 = math.exp %84 : vector<18x18xf32>
    %cst_53 = arith.constant dense<0.000000e+00> : vector<18xf32>
    %86 = vector.multi_reduction <add>, %85, %cst_53 [1] : vector<18x18xf32> to vector<18xf32>
    %87 = vector.shape_cast %86 : vector<18xf32> to vector<18x1xf32>
    %88 = tpu.reciprocal %87 {approx = true} : vector<18x1xf32> -> vector<18x1xf32>
    %89 = vector.broadcast %88 : vector<18x1xf32> to vector<18x18xf32>
    %90 = arith.mulf %85, %89 : vector<18x18xf32>
    %cst_54 = arith.constant dense<0.000000e+00> : vector<18x8xf32>
    %91 = tpu.matmul %90, %76, %cst_54 {dimension_numbers = #tpu.dot_dimension_numbers<[1], [0], [0], [1], [0, 0, 1, 1], [], []>} : vector<18x18xf32>, vector<18x8xf32>, vector<18x8xf32> -> vector<18x8xf32>
    %92 = vector.extract_strided_slice %53 {offsets = [8, 0], sizes = [8, 32], strides = [1, 1]} : vector<32x32xf32> to vector<8x32xf32>
    %cst_55 = arith.constant dense<0.000000e+00> : vector<18x32xf32>
    %93 = tpu.matmul %91, %92, %cst_55 {dimension_numbers = #tpu.dot_dimension_numbers<[1], [0], [0], [1], [0, 0, 1, 1], [], []>} : vector<18x8xf32>, vector<8x32xf32>, vector<18x32xf32> -> vector<18x32xf32>
    %94 = arith.addf %73, %93 : vector<18x32xf32>
    %95 = vector.extract_strided_slice %51 {offsets = [0, 16], sizes = [18, 8], strides = [1, 1]} : vector<18x128xf32> to vector<18x8xf32>
    %96 = vector.extract_strided_slice %51 {offsets = [0, 48], sizes = [18, 8], strides = [1, 1]} : vector<18x128xf32> to vector<18x8xf32>
    %97 = vector.extract_strided_slice %51 {offsets = [0, 80], sizes = [18, 8], strides = [1, 1]} : vector<18x128xf32> to vector<18x8xf32>
    %cst_56 = arith.constant dense<0.000000e+00> : vector<18x18xf32>
    %98 = tpu.matmul %95, %96, %cst_56 {dimension_numbers = #tpu.dot_dimension_numbers<[1], [1], [0], [0], [0, 0, 1, 0], [], []>} : vector<18x8xf32>, vector<18x8xf32>, vector<18x18xf32> -> vector<18x18xf32>
    %cst_57 = arith.constant 0.353553385 : f32
    %99 = vector.broadcast %cst_57 : f32 to vector<18x18xf32>
    %100 = arith.mulf %98, %99 : vector<18x18xf32>
    %101 = arith.addf %100, %26 : vector<18x18xf32>
    %cst_58 = arith.constant dense<0xFF800000> : vector<18xf32>
    %102 = vector.multi_reduction <maximumf>, %101, %cst_58 [1] : vector<18x18xf32> to vector<18xf32>
    %103 = vector.shape_cast %102 : vector<18xf32> to vector<18x1xf32>
    %104 = vector.broadcast %103 : vector<18x1xf32> to vector<18x18xf32>
    %105 = arith.subf %101, %104 : vector<18x18xf32>
    %106 = math.exp %105 : vector<18x18xf32>
    %cst_59 = arith.constant dense<0.000000e+00> : vector<18xf32>
    %107 = vector.multi_reduction <add>, %106, %cst_59 [1] : vector<18x18xf32> to vector<18xf32>
    %108 = vector.shape_cast %107 : vector<18xf32> to vector<18x1xf32>
    %109 = tpu.reciprocal %108 {approx = true} : vector<18x1xf32> -> vector<18x1xf32>
    %110 = vector.broadcast %109 : vector<18x1xf32> to vector<18x18xf32>
    %111 = arith.mulf %106, %110 : vector<18x18xf32>
    %cst_60 = arith.constant dense<0.000000e+00> : vector<18x8xf32>
    %112 = tpu.matmul %111, %97, %cst_60 {dimension_numbers = #tpu.dot_dimension_numbers<[1], [0], [0], [1], [0, 0, 1, 1], [], []>} : vector<18x18xf32>, vector<18x8xf32>, vector<18x8xf32> -> vector<18x8xf32>
    %113 = vector.extract_strided_slice %53 {offsets = [16, 0], sizes = [8, 32], strides = [1, 1]} : vector<32x32xf32> to vector<8x32xf32>
    %cst_61 = arith.constant dense<0.000000e+00> : vector<18x32xf32>
    %114 = tpu.matmul %112, %113, %cst_61 {dimension_numbers = #tpu.dot_dimension_numbers<[1], [0], [0], [1], [0, 0, 1, 1], [], []>} : vector<18x8xf32>, vector<8x32xf32>, vector<18x32xf32> -> vector<18x32xf32>
    %115 = arith.addf %94, %114 : vector<18x32xf32>
    %116 = vector.extract_strided_slice %51 {offsets = [0, 24], sizes = [18, 8], strides = [1, 1]} : vector<18x128xf32> to vector<18x8xf32>
    %117 = vector.extract_strided_slice %51 {offsets = [0, 56], sizes = [18, 8], strides = [1, 1]} : vector<18x128xf32> to vector<18x8xf32>
    %118 = vector.extract_strided_slice %51 {offsets = [0, 88], sizes = [18, 8], strides = [1, 1]} : vector<18x128xf32> to vector<18x8xf32>
    %cst_62 = arith.constant dense<0.000000e+00> : vector<18x18xf32>
    %119 = tpu.matmul %116, %117, %cst_62 {dimension_numbers = #tpu.dot_dimension_numbers<[1], [1], [0], [0], [0, 0, 1, 0], [], []>} : vector<18x8xf32>, vector<18x8xf32>, vector<18x18xf32> -> vector<18x18xf32>
    %cst_63 = arith.constant 0.353553385 : f32
    %120 = vector.broadcast %cst_63 : f32 to vector<18x18xf32>
    %121 = arith.mulf %119, %120 : vector<18x18xf32>
    %122 = arith.addf %121, %26 : vector<18x18xf32>
    %cst_64 = arith.constant dense<0xFF800000> : vector<18xf32>
    %123 = vector.multi_reduction <maximumf>, %122, %cst_64 [1] : vector<18x18xf32> to vector<18xf32>
    %124 = vector.shape_cast %123 : vector<18xf32> to vector<18x1xf32>
    %125 = vector.broadcast %124 : vector<18x1xf32> to vector<18x18xf32>
    %126 = arith.subf %122, %125 : vector<18x18xf32>
    %127 = math.exp %126 : vector<18x18xf32>
    %cst_65 = arith.constant dense<0.000000e+00> : vector<18xf32>
    %128 = vector.multi_reduction <add>, %127, %cst_65 [1] : vector<18x18xf32> to vector<18xf32>
    %129 = vector.shape_cast %128 : vector<18xf32> to vector<18x1xf32>
    %130 = tpu.reciprocal %129 {approx = true} : vector<18x1xf32> -> vector<18x1xf32>
    %131 = vector.broadcast %130 : vector<18x1xf32> to vector<18x18xf32>
    %132 = arith.mulf %127, %131 : vector<18x18xf32>
    %cst_66 = arith.constant dense<0.000000e+00> : vector<18x8xf32>
    %133 = tpu.matmul %132, %118, %cst_66 {dimension_numbers = #tpu.dot_dimension_numbers<[1], [0], [0], [1], [0, 0, 1, 1], [], []>} : vector<18x18xf32>, vector<18x8xf32>, vector<18x8xf32> -> vector<18x8xf32>
    %134 = vector.extract_strided_slice %53 {offsets = [24, 0], sizes = [8, 32], strides = [1, 1]} : vector<32x32xf32> to vector<8x32xf32>
    %cst_67 = arith.constant dense<0.000000e+00> : vector<18x32xf32>
    %135 = tpu.matmul %133, %134, %cst_67 {dimension_numbers = #tpu.dot_dimension_numbers<[1], [0], [0], [1], [0, 0, 1, 1], [], []>} : vector<18x8xf32>, vector<8x32xf32>, vector<18x32xf32> -> vector<18x32xf32>
    %136 = arith.addf %115, %135 : vector<18x32xf32>
    %137 = arith.addf %25, %136 : vector<18x32xf32>
    %c0_68 = arith.constant 0 : index
    %c0_69 = arith.constant 0 : index
    %c0_70 = arith.constant 0 : index
    %138 = vector.load %arg14[%c0_68, %c0_69, %c0_70] : memref<2x1x32xf32, #tpu.memory_space<vmem>>, vector<1x1x32xf32>
    %139 = vector.shape_cast %138 : vector<1x1x32xf32> to vector<1x32xf32>
    %140 = vector.broadcast %139 : vector<1x32xf32> to vector<18x32xf32>
    %141 = arith.addf %137, %140 : vector<18x32xf32>
    %cst_71 = arith.constant dense<0.000000e+00> : vector<18xf32>
    %142 = vector.multi_reduction <add>, %141, %cst_71 [1] : vector<18x32xf32> to vector<18xf32>
    %143 = vector.shape_cast %142 : vector<18xf32> to vector<18x1xf32>
    %cst_72 = arith.constant 3.200000e+01 : f32
    %144 = vector.broadcast %cst_72 : f32 to vector<18x1xf32>
    %145 = arith.divf %143, %144 : vector<18x1xf32>
    %146 = vector.broadcast %145 : vector<18x1xf32> to vector<18x32xf32>
    %147 = arith.subf %141, %146 : vector<18x32xf32>
    %148 = arith.mulf %147, %147 : vector<18x32xf32>
    %cst_73 = arith.constant dense<0.000000e+00> : vector<18xf32>
    %149 = vector.multi_reduction <add>, %148, %cst_73 [1] : vector<18x32xf32> to vector<18xf32>
    %150 = vector.shape_cast %149 : vector<18xf32> to vector<18x1xf32>
    %cst_74 = arith.constant 3.200000e+01 : f32
    %151 = vector.broadcast %cst_74 : f32 to vector<18x1xf32>
    %152 = arith.divf %150, %151 : vector<18x1xf32>
    %153 = vector.broadcast %145 : vector<18x1xf32> to vector<18x32xf32>
    %154 = arith.subf %141, %153 : vector<18x32xf32>
    %cst_75 = arith.constant 9.99999997E-7 : f32
    %155 = vector.broadcast %cst_75 : f32 to vector<18x1xf32>
    %156 = arith.addf %152, %155 : vector<18x1xf32>
    %157 = math.rsqrt %156 : vector<18x1xf32>
    %158 = vector.broadcast %157 : vector<18x1xf32> to vector<18x32xf32>
    %159 = arith.mulf %154, %158 : vector<18x32xf32>
    %c0_76 = arith.constant 0 : index
    %c0_77 = arith.constant 0 : index
    %c0_78 = arith.constant 0 : index
    %160 = vector.load %arg15[%c0_76, %c0_77, %c0_78] : memref<2x32x128xf32, #tpu.memory_space<vmem>>, vector<1x32x128xf32>
    %161 = vector.shape_cast %160 : vector<1x32x128xf32> to vector<32x128xf32>
    %cst_79 = arith.constant dense<0.000000e+00> : vector<18x128xf32>
    %162 = tpu.matmul %159, %161, %cst_79 {dimension_numbers = #tpu.dot_dimension_numbers<[1], [0], [0], [1], [0, 0, 1, 1], [], []>} : vector<18x32xf32>, vector<32x128xf32>, vector<18x128xf32> -> vector<18x128xf32>
    %c0_80 = arith.constant 0 : index
    %c0_81 = arith.constant 0 : index
    %c0_82 = arith.constant 0 : index
    %163 = vector.load %arg16[%c0_80, %c0_81, %c0_82] : memref<2x1x128xf32, #tpu.memory_space<vmem>>, vector<1x1x128xf32>
    %164 = vector.shape_cast %163 : vector<1x1x128xf32> to vector<1x128xf32>
    %165 = vector.broadcast %164 : vector<1x128xf32> to vector<18x128xf32>
    %166 = arith.addf %162, %165 : vector<18x128xf32>
    %167 = arith.mulf %166, %166 : vector<18x128xf32>
    %168 = arith.mulf %166, %167 : vector<18x128xf32>
    %cst_83 = arith.constant 4.471500e-02 : f32
    %169 = vector.broadcast %cst_83 : f32 to vector<18x128xf32>
    %170 = arith.mulf %169, %168 : vector<18x128xf32>
    %171 = arith.addf %166, %170 : vector<18x128xf32>
    %cst_84 = arith.constant 0.797884583 : f32
    %172 = vector.broadcast %cst_84 : f32 to vector<18x128xf32>
    %173 = arith.mulf %172, %171 : vector<18x128xf32>
    %174 = math.tanh %173 : vector<18x128xf32>
    %cst_85 = arith.constant 1.000000e+00 : f32
    %175 = vector.broadcast %cst_85 : f32 to vector<18x128xf32>
    %176 = arith.addf %175, %174 : vector<18x128xf32>
    %cst_86 = arith.constant 5.000000e-01 : f32
    %177 = vector.broadcast %cst_86 : f32 to vector<18x128xf32>
    %178 = arith.mulf %177, %176 : vector<18x128xf32>
    %179 = arith.mulf %166, %178 : vector<18x128xf32>
    %c0_87 = arith.constant 0 : index
    %c0_88 = arith.constant 0 : index
    %c0_89 = arith.constant 0 : index
    %180 = vector.load %arg17[%c0_87, %c0_88, %c0_89] : memref<2x128x32xf32, #tpu.memory_space<vmem>>, vector<1x128x32xf32>
    %181 = vector.shape_cast %180 : vector<1x128x32xf32> to vector<128x32xf32>
    %cst_90 = arith.constant dense<0.000000e+00> : vector<18x32xf32>
    %182 = tpu.matmul %179, %181, %cst_90 {dimension_numbers = #tpu.dot_dimension_numbers<[1], [0], [0], [1], [0, 0, 1, 1], [], []>} : vector<18x128xf32>, vector<128x32xf32>, vector<18x32xf32> -> vector<18x32xf32>
    %183 = arith.addf %141, %182 : vector<18x32xf32>
    %c0_91 = arith.constant 0 : index
    %c0_92 = arith.constant 0 : index
    %c0_93 = arith.constant 0 : index
    %184 = vector.load %arg18[%c0_91, %c0_92, %c0_93] : memref<2x1x32xf32, #tpu.memory_space<vmem>>, vector<1x1x32xf32>
    %185 = vector.shape_cast %184 : vector<1x1x32xf32> to vector<1x32xf32>
    %186 = vector.broadcast %185 : vector<1x32xf32> to vector<18x32xf32>
    %187 = arith.addf %183, %186 : vector<18x32xf32>
    %cst_94 = arith.constant dense<0.000000e+00> : vector<18xf32>
    %188 = vector.multi_reduction <add>, %187, %cst_94 [1] : vector<18x32xf32> to vector<18xf32>
    %189 = vector.shape_cast %188 : vector<18xf32> to vector<18x1xf32>
    %cst_95 = arith.constant 3.200000e+01 : f32
    %190 = vector.broadcast %cst_95 : f32 to vector<18x1xf32>
    %191 = arith.divf %189, %190 : vector<18x1xf32>
    %192 = vector.broadcast %191 : vector<18x1xf32> to vector<18x32xf32>
    %193 = arith.subf %187, %192 : vector<18x32xf32>
    %194 = arith.mulf %193, %193 : vector<18x32xf32>
    %cst_96 = arith.constant dense<0.000000e+00> : vector<18xf32>
    %195 = vector.multi_reduction <add>, %194, %cst_96 [1] : vector<18x32xf32> to vector<18xf32>
    %196 = vector.shape_cast %195 : vector<18xf32> to vector<18x1xf32>
    %cst_97 = arith.constant 3.200000e+01 : f32
    %197 = vector.broadcast %cst_97 : f32 to vector<18x1xf32>
    %198 = arith.divf %196, %197 : vector<18x1xf32>
    %199 = vector.broadcast %191 : vector<18x1xf32> to vector<18x32xf32>
    %200 = arith.subf %187, %199 : vector<18x32xf32>
    %cst_98 = arith.constant 9.99999997E-7 : f32
    %201 = vector.broadcast %cst_98 : f32 to vector<18x1xf32>
    %202 = arith.addf %198, %201 : vector<18x1xf32>
    %203 = math.rsqrt %202 : vector<18x1xf32>
    %204 = vector.broadcast %203 : vector<18x1xf32> to vector<18x32xf32>
    %205 = arith.mulf %200, %204 : vector<18x32xf32>
    %c1 = arith.constant 1 : index
    %c0_99 = arith.constant 0 : index
    %c0_100 = arith.constant 0 : index
    %206 = vector.load %arg11[%c1, %c0_99, %c0_100] : memref<2x32x128xf32, #tpu.memory_space<vmem>>, vector<1x32x128xf32>
    %207 = vector.shape_cast %206 : vector<1x32x128xf32> to vector<32x128xf32>
    %cst_101 = arith.constant dense<0.000000e+00> : vector<18x128xf32>
    %208 = tpu.matmul %205, %207, %cst_101 {dimension_numbers = #tpu.dot_dimension_numbers<[1], [0], [0], [1], [0, 0, 1, 1], [], []>} : vector<18x32xf32>, vector<32x128xf32>, vector<18x128xf32> -> vector<18x128xf32>
    %c1_102 = arith.constant 1 : index
    %c0_103 = arith.constant 0 : index
    %c0_104 = arith.constant 0 : index
    %209 = vector.load %arg12[%c1_102, %c0_103, %c0_104] : memref<2x1x128xf32, #tpu.memory_space<vmem>>, vector<1x1x128xf32>
    %210 = vector.shape_cast %209 : vector<1x1x128xf32> to vector<1x128xf32>
    %211 = vector.broadcast %210 : vector<1x128xf32> to vector<18x128xf32>
    %212 = arith.addf %208, %211 : vector<18x128xf32>
    %c1_105 = arith.constant 1 : index
    %c0_106 = arith.constant 0 : index
    %c0_107 = arith.constant 0 : index
    %213 = vector.load %arg13[%c1_105, %c0_106, %c0_107] : memref<2x32x32xf32, #tpu.memory_space<vmem>>, vector<1x32x32xf32>
    %214 = vector.shape_cast %213 : vector<1x32x32xf32> to vector<32x32xf32>
    %215 = vector.extract_strided_slice %212 {offsets = [0, 0], sizes = [18, 8], strides = [1, 1]} : vector<18x128xf32> to vector<18x8xf32>
    %216 = vector.extract_strided_slice %212 {offsets = [0, 32], sizes = [18, 8], strides = [1, 1]} : vector<18x128xf32> to vector<18x8xf32>
    %217 = vector.extract_strided_slice %212 {offsets = [0, 64], sizes = [18, 8], strides = [1, 1]} : vector<18x128xf32> to vector<18x8xf32>
    %cst_108 = arith.constant dense<0.000000e+00> : vector<18x18xf32>
    %218 = tpu.matmul %215, %216, %cst_108 {dimension_numbers = #tpu.dot_dimension_numbers<[1], [1], [0], [0], [0, 0, 1, 0], [], []>} : vector<18x8xf32>, vector<18x8xf32>, vector<18x18xf32> -> vector<18x18xf32>
    %cst_109 = arith.constant 0.353553385 : f32
    %219 = vector.broadcast %cst_109 : f32 to vector<18x18xf32>
    %220 = arith.mulf %218, %219 : vector<18x18xf32>
    %221 = arith.addf %220, %26 : vector<18x18xf32>
    %cst_110 = arith.constant dense<0xFF800000> : vector<18xf32>
    %222 = vector.multi_reduction <maximumf>, %221, %cst_110 [1] : vector<18x18xf32> to vector<18xf32>
    %223 = vector.shape_cast %222 : vector<18xf32> to vector<18x1xf32>
    %224 = vector.broadcast %223 : vector<18x1xf32> to vector<18x18xf32>
    %225 = arith.subf %221, %224 : vector<18x18xf32>
    %226 = math.exp %225 : vector<18x18xf32>
    %cst_111 = arith.constant dense<0.000000e+00> : vector<18xf32>
    %227 = vector.multi_reduction <add>, %226, %cst_111 [1] : vector<18x18xf32> to vector<18xf32>
    %228 = vector.shape_cast %227 : vector<18xf32> to vector<18x1xf32>
    %229 = tpu.reciprocal %228 {approx = true} : vector<18x1xf32> -> vector<18x1xf32>
    %230 = vector.broadcast %229 : vector<18x1xf32> to vector<18x18xf32>
    %231 = arith.mulf %226, %230 : vector<18x18xf32>
    %cst_112 = arith.constant dense<0.000000e+00> : vector<18x8xf32>
    %232 = tpu.matmul %231, %217, %cst_112 {dimension_numbers = #tpu.dot_dimension_numbers<[1], [0], [0], [1], [0, 0, 1, 1], [], []>} : vector<18x18xf32>, vector<18x8xf32>, vector<18x8xf32> -> vector<18x8xf32>
    %233 = vector.extract_strided_slice %214 {offsets = [0, 0], sizes = [8, 32], strides = [1, 1]} : vector<32x32xf32> to vector<8x32xf32>
    %cst_113 = arith.constant dense<0.000000e+00> : vector<18x32xf32>
    %234 = tpu.matmul %232, %233, %cst_113 {dimension_numbers = #tpu.dot_dimension_numbers<[1], [0], [0], [1], [0, 0, 1, 1], [], []>} : vector<18x8xf32>, vector<8x32xf32>, vector<18x32xf32> -> vector<18x32xf32>
    %235 = vector.extract_strided_slice %212 {offsets = [0, 8], sizes = [18, 8], strides = [1, 1]} : vector<18x128xf32> to vector<18x8xf32>
    %236 = vector.extract_strided_slice %212 {offsets = [0, 40], sizes = [18, 8], strides = [1, 1]} : vector<18x128xf32> to vector<18x8xf32>
    %237 = vector.extract_strided_slice %212 {offsets = [0, 72], sizes = [18, 8], strides = [1, 1]} : vector<18x128xf32> to vector<18x8xf32>
    %cst_114 = arith.constant dense<0.000000e+00> : vector<18x18xf32>
    %238 = tpu.matmul %235, %236, %cst_114 {dimension_numbers = #tpu.dot_dimension_numbers<[1], [1], [0], [0], [0, 0, 1, 0], [], []>} : vector<18x8xf32>, vector<18x8xf32>, vector<18x18xf32> -> vector<18x18xf32>
    %cst_115 = arith.constant 0.353553385 : f32
    %239 = vector.broadcast %cst_115 : f32 to vector<18x18xf32>
    %240 = arith.mulf %238, %239 : vector<18x18xf32>
    %241 = arith.addf %240, %26 : vector<18x18xf32>
    %cst_116 = arith.constant dense<0xFF800000> : vector<18xf32>
    %242 = vector.multi_reduction <maximumf>, %241, %cst_116 [1] : vector<18x18xf32> to vector<18xf32>
    %243 = vector.shape_cast %242 : vector<18xf32> to vector<18x1xf32>
    %244 = vector.broadcast %243 : vector<18x1xf32> to vector<18x18xf32>
    %245 = arith.subf %241, %244 : vector<18x18xf32>
    %246 = math.exp %245 : vector<18x18xf32>
    %cst_117 = arith.constant dense<0.000000e+00> : vector<18xf32>
    %247 = vector.multi_reduction <add>, %246, %cst_117 [1] : vector<18x18xf32> to vector<18xf32>
    %248 = vector.shape_cast %247 : vector<18xf32> to vector<18x1xf32>
    %249 = tpu.reciprocal %248 {approx = true} : vector<18x1xf32> -> vector<18x1xf32>
    %250 = vector.broadcast %249 : vector<18x1xf32> to vector<18x18xf32>
    %251 = arith.mulf %246, %250 : vector<18x18xf32>
    %cst_118 = arith.constant dense<0.000000e+00> : vector<18x8xf32>
    %252 = tpu.matmul %251, %237, %cst_118 {dimension_numbers = #tpu.dot_dimension_numbers<[1], [0], [0], [1], [0, 0, 1, 1], [], []>} : vector<18x18xf32>, vector<18x8xf32>, vector<18x8xf32> -> vector<18x8xf32>
    %253 = vector.extract_strided_slice %214 {offsets = [8, 0], sizes = [8, 32], strides = [1, 1]} : vector<32x32xf32> to vector<8x32xf32>
    %cst_119 = arith.constant dense<0.000000e+00> : vector<18x32xf32>
    %254 = tpu.matmul %252, %253, %cst_119 {dimension_numbers = #tpu.dot_dimension_numbers<[1], [0], [0], [1], [0, 0, 1, 1], [], []>} : vector<18x8xf32>, vector<8x32xf32>, vector<18x32xf32> -> vector<18x32xf32>
    %255 = arith.addf %234, %254 : vector<18x32xf32>
    %256 = vector.extract_strided_slice %212 {offsets = [0, 16], sizes = [18, 8], strides = [1, 1]} : vector<18x128xf32> to vector<18x8xf32>
    %257 = vector.extract_strided_slice %212 {offsets = [0, 48], sizes = [18, 8], strides = [1, 1]} : vector<18x128xf32> to vector<18x8xf32>
    %258 = vector.extract_strided_slice %212 {offsets = [0, 80], sizes = [18, 8], strides = [1, 1]} : vector<18x128xf32> to vector<18x8xf32>
    %cst_120 = arith.constant dense<0.000000e+00> : vector<18x18xf32>
    %259 = tpu.matmul %256, %257, %cst_120 {dimension_numbers = #tpu.dot_dimension_numbers<[1], [1], [0], [0], [0, 0, 1, 0], [], []>} : vector<18x8xf32>, vector<18x8xf32>, vector<18x18xf32> -> vector<18x18xf32>
    %cst_121 = arith.constant 0.353553385 : f32
    %260 = vector.broadcast %cst_121 : f32 to vector<18x18xf32>
    %261 = arith.mulf %259, %260 : vector<18x18xf32>
    %262 = arith.addf %261, %26 : vector<18x18xf32>
    %cst_122 = arith.constant dense<0xFF800000> : vector<18xf32>
    %263 = vector.multi_reduction <maximumf>, %262, %cst_122 [1] : vector<18x18xf32> to vector<18xf32>
    %264 = vector.shape_cast %263 : vector<18xf32> to vector<18x1xf32>
    %265 = vector.broadcast %264 : vector<18x1xf32> to vector<18x18xf32>
    %266 = arith.subf %262, %265 : vector<18x18xf32>
    %267 = math.exp %266 : vector<18x18xf32>
    %cst_123 = arith.constant dense<0.000000e+00> : vector<18xf32>
    %268 = vector.multi_reduction <add>, %267, %cst_123 [1] : vector<18x18xf32> to vector<18xf32>
    %269 = vector.shape_cast %268 : vector<18xf32> to vector<18x1xf32>
    %270 = tpu.reciprocal %269 {approx = true} : vector<18x1xf32> -> vector<18x1xf32>
    %271 = vector.broadcast %270 : vector<18x1xf32> to vector<18x18xf32>
    %272 = arith.mulf %267, %271 : vector<18x18xf32>
    %cst_124 = arith.constant dense<0.000000e+00> : vector<18x8xf32>
    %273 = tpu.matmul %272, %258, %cst_124 {dimension_numbers = #tpu.dot_dimension_numbers<[1], [0], [0], [1], [0, 0, 1, 1], [], []>} : vector<18x18xf32>, vector<18x8xf32>, vector<18x8xf32> -> vector<18x8xf32>
    %274 = vector.extract_strided_slice %214 {offsets = [16, 0], sizes = [8, 32], strides = [1, 1]} : vector<32x32xf32> to vector<8x32xf32>
    %cst_125 = arith.constant dense<0.000000e+00> : vector<18x32xf32>
    %275 = tpu.matmul %273, %274, %cst_125 {dimension_numbers = #tpu.dot_dimension_numbers<[1], [0], [0], [1], [0, 0, 1, 1], [], []>} : vector<18x8xf32>, vector<8x32xf32>, vector<18x32xf32> -> vector<18x32xf32>
    %276 = arith.addf %255, %275 : vector<18x32xf32>
    %277 = vector.extract_strided_slice %212 {offsets = [0, 24], sizes = [18, 8], strides = [1, 1]} : vector<18x128xf32> to vector<18x8xf32>
    %278 = vector.extract_strided_slice %212 {offsets = [0, 56], sizes = [18, 8], strides = [1, 1]} : vector<18x128xf32> to vector<18x8xf32>
    %279 = vector.extract_strided_slice %212 {offsets = [0, 88], sizes = [18, 8], strides = [1, 1]} : vector<18x128xf32> to vector<18x8xf32>
    %cst_126 = arith.constant dense<0.000000e+00> : vector<18x18xf32>
    %280 = tpu.matmul %277, %278, %cst_126 {dimension_numbers = #tpu.dot_dimension_numbers<[1], [1], [0], [0], [0, 0, 1, 0], [], []>} : vector<18x8xf32>, vector<18x8xf32>, vector<18x18xf32> -> vector<18x18xf32>
    %cst_127 = arith.constant 0.353553385 : f32
    %281 = vector.broadcast %cst_127 : f32 to vector<18x18xf32>
    %282 = arith.mulf %280, %281 : vector<18x18xf32>
    %283 = arith.addf %282, %26 : vector<18x18xf32>
    %cst_128 = arith.constant dense<0xFF800000> : vector<18xf32>
    %284 = vector.multi_reduction <maximumf>, %283, %cst_128 [1] : vector<18x18xf32> to vector<18xf32>
    %285 = vector.shape_cast %284 : vector<18xf32> to vector<18x1xf32>
    %286 = vector.broadcast %285 : vector<18x1xf32> to vector<18x18xf32>
    %287 = arith.subf %283, %286 : vector<18x18xf32>
    %288 = math.exp %287 : vector<18x18xf32>
    %cst_129 = arith.constant dense<0.000000e+00> : vector<18xf32>
    %289 = vector.multi_reduction <add>, %288, %cst_129 [1] : vector<18x18xf32> to vector<18xf32>
    %290 = vector.shape_cast %289 : vector<18xf32> to vector<18x1xf32>
    %291 = tpu.reciprocal %290 {approx = true} : vector<18x1xf32> -> vector<18x1xf32>
    %292 = vector.broadcast %291 : vector<18x1xf32> to vector<18x18xf32>
    %293 = arith.mulf %288, %292 : vector<18x18xf32>
    %cst_130 = arith.constant dense<0.000000e+00> : vector<18x8xf32>
    %294 = tpu.matmul %293, %279, %cst_130 {dimension_numbers = #tpu.dot_dimension_numbers<[1], [0], [0], [1], [0, 0, 1, 1], [], []>} : vector<18x18xf32>, vector<18x8xf32>, vector<18x8xf32> -> vector<18x8xf32>
    %295 = vector.extract_strided_slice %214 {offsets = [24, 0], sizes = [8, 32], strides = [1, 1]} : vector<32x32xf32> to vector<8x32xf32>
    %cst_131 = arith.constant dense<0.000000e+00> : vector<18x32xf32>
    %296 = tpu.matmul %294, %295, %cst_131 {dimension_numbers = #tpu.dot_dimension_numbers<[1], [0], [0], [1], [0, 0, 1, 1], [], []>} : vector<18x8xf32>, vector<8x32xf32>, vector<18x32xf32> -> vector<18x32xf32>
    %297 = arith.addf %276, %296 : vector<18x32xf32>
    %298 = arith.addf %187, %297 : vector<18x32xf32>
    %c1_132 = arith.constant 1 : index
    %c0_133 = arith.constant 0 : index
    %c0_134 = arith.constant 0 : index
    %299 = vector.load %arg14[%c1_132, %c0_133, %c0_134] : memref<2x1x32xf32, #tpu.memory_space<vmem>>, vector<1x1x32xf32>
    %300 = vector.shape_cast %299 : vector<1x1x32xf32> to vector<1x32xf32>
    %301 = vector.broadcast %300 : vector<1x32xf32> to vector<18x32xf32>
    %302 = arith.addf %298, %301 : vector<18x32xf32>
    %cst_135 = arith.constant dense<0.000000e+00> : vector<18xf32>
    %303 = vector.multi_reduction <add>, %302, %cst_135 [1] : vector<18x32xf32> to vector<18xf32>
    %304 = vector.shape_cast %303 : vector<18xf32> to vector<18x1xf32>
    %cst_136 = arith.constant 3.200000e+01 : f32
    %305 = vector.broadcast %cst_136 : f32 to vector<18x1xf32>
    %306 = arith.divf %304, %305 : vector<18x1xf32>
    %307 = vector.broadcast %306 : vector<18x1xf32> to vector<18x32xf32>
    %308 = arith.subf %302, %307 : vector<18x32xf32>
    %309 = arith.mulf %308, %308 : vector<18x32xf32>
    %cst_137 = arith.constant dense<0.000000e+00> : vector<18xf32>
    %310 = vector.multi_reduction <add>, %309, %cst_137 [1] : vector<18x32xf32> to vector<18xf32>
    %311 = vector.shape_cast %310 : vector<18xf32> to vector<18x1xf32>
    %cst_138 = arith.constant 3.200000e+01 : f32
    %312 = vector.broadcast %cst_138 : f32 to vector<18x1xf32>
    %313 = arith.divf %311, %312 : vector<18x1xf32>
    %314 = vector.broadcast %306 : vector<18x1xf32> to vector<18x32xf32>
    %315 = arith.subf %302, %314 : vector<18x32xf32>
    %cst_139 = arith.constant 9.99999997E-7 : f32
    %316 = vector.broadcast %cst_139 : f32 to vector<18x1xf32>
    %317 = arith.addf %313, %316 : vector<18x1xf32>
    %318 = math.rsqrt %317 : vector<18x1xf32>
    %319 = vector.broadcast %318 : vector<18x1xf32> to vector<18x32xf32>
    %320 = arith.mulf %315, %319 : vector<18x32xf32>
    %c1_140 = arith.constant 1 : index
    %c0_141 = arith.constant 0 : index
    %c0_142 = arith.constant 0 : index
    %321 = vector.load %arg15[%c1_140, %c0_141, %c0_142] : memref<2x32x128xf32, #tpu.memory_space<vmem>>, vector<1x32x128xf32>
    %322 = vector.shape_cast %321 : vector<1x32x128xf32> to vector<32x128xf32>
    %cst_143 = arith.constant dense<0.000000e+00> : vector<18x128xf32>
    %323 = tpu.matmul %320, %322, %cst_143 {dimension_numbers = #tpu.dot_dimension_numbers<[1], [0], [0], [1], [0, 0, 1, 1], [], []>} : vector<18x32xf32>, vector<32x128xf32>, vector<18x128xf32> -> vector<18x128xf32>
    %c1_144 = arith.constant 1 : index
    %c0_145 = arith.constant 0 : index
    %c0_146 = arith.constant 0 : index
    %324 = vector.load %arg16[%c1_144, %c0_145, %c0_146] : memref<2x1x128xf32, #tpu.memory_space<vmem>>, vector<1x1x128xf32>
    %325 = vector.shape_cast %324 : vector<1x1x128xf32> to vector<1x128xf32>
    %326 = vector.broadcast %325 : vector<1x128xf32> to vector<18x128xf32>
    %327 = arith.addf %323, %326 : vector<18x128xf32>
    %328 = arith.mulf %327, %327 : vector<18x128xf32>
    %329 = arith.mulf %327, %328 : vector<18x128xf32>
    %cst_147 = arith.constant 4.471500e-02 : f32
    %330 = vector.broadcast %cst_147 : f32 to vector<18x128xf32>
    %331 = arith.mulf %330, %329 : vector<18x128xf32>
    %332 = arith.addf %327, %331 : vector<18x128xf32>
    %cst_148 = arith.constant 0.797884583 : f32
    %333 = vector.broadcast %cst_148 : f32 to vector<18x128xf32>
    %334 = arith.mulf %333, %332 : vector<18x128xf32>
    %335 = math.tanh %334 : vector<18x128xf32>
    %cst_149 = arith.constant 1.000000e+00 : f32
    %336 = vector.broadcast %cst_149 : f32 to vector<18x128xf32>
    %337 = arith.addf %336, %335 : vector<18x128xf32>
    %cst_150 = arith.constant 5.000000e-01 : f32
    %338 = vector.broadcast %cst_150 : f32 to vector<18x128xf32>
    %339 = arith.mulf %338, %337 : vector<18x128xf32>
    %340 = arith.mulf %327, %339 : vector<18x128xf32>
    %c1_151 = arith.constant 1 : index
    %c0_152 = arith.constant 0 : index
    %c0_153 = arith.constant 0 : index
    %341 = vector.load %arg17[%c1_151, %c0_152, %c0_153] : memref<2x128x32xf32, #tpu.memory_space<vmem>>, vector<1x128x32xf32>
    %342 = vector.shape_cast %341 : vector<1x128x32xf32> to vector<128x32xf32>
    %cst_154 = arith.constant dense<0.000000e+00> : vector<18x32xf32>
    %343 = tpu.matmul %340, %342, %cst_154 {dimension_numbers = #tpu.dot_dimension_numbers<[1], [0], [0], [1], [0, 0, 1, 1], [], []>} : vector<18x128xf32>, vector<128x32xf32>, vector<18x32xf32> -> vector<18x32xf32>
    %344 = arith.addf %302, %343 : vector<18x32xf32>
    %c1_155 = arith.constant 1 : index
    %c0_156 = arith.constant 0 : index
    %c0_157 = arith.constant 0 : index
    %345 = vector.load %arg18[%c1_155, %c0_156, %c0_157] : memref<2x1x32xf32, #tpu.memory_space<vmem>>, vector<1x1x32xf32>
    %346 = vector.shape_cast %345 : vector<1x1x32xf32> to vector<1x32xf32>
    %347 = vector.broadcast %346 : vector<1x32xf32> to vector<18x32xf32>
    %348 = arith.addf %344, %347 : vector<18x32xf32>
    %cst_158 = arith.constant dense<0.000000e+00> : vector<18xf32>
    %349 = vector.multi_reduction <add>, %348, %cst_158 [1] : vector<18x32xf32> to vector<18xf32>
    %350 = vector.shape_cast %349 : vector<18xf32> to vector<18x1xf32>
    %cst_159 = arith.constant 3.200000e+01 : f32
    %351 = vector.broadcast %cst_159 : f32 to vector<18x1xf32>
    %352 = arith.divf %350, %351 : vector<18x1xf32>
    %353 = vector.broadcast %352 : vector<18x1xf32> to vector<18x32xf32>
    %354 = arith.subf %348, %353 : vector<18x32xf32>
    %355 = arith.mulf %354, %354 : vector<18x32xf32>
    %cst_160 = arith.constant dense<0.000000e+00> : vector<18xf32>
    %356 = vector.multi_reduction <add>, %355, %cst_160 [1] : vector<18x32xf32> to vector<18xf32>
    %357 = vector.shape_cast %356 : vector<18xf32> to vector<18x1xf32>
    %cst_161 = arith.constant 3.200000e+01 : f32
    %358 = vector.broadcast %cst_161 : f32 to vector<18x1xf32>
    %359 = arith.divf %357, %358 : vector<18x1xf32>
    %360 = vector.broadcast %352 : vector<18x1xf32> to vector<18x32xf32>
    %361 = arith.subf %348, %360 : vector<18x32xf32>
    %cst_162 = arith.constant 9.99999997E-7 : f32
    %362 = vector.broadcast %cst_162 : f32 to vector<18x1xf32>
    %363 = arith.addf %359, %362 : vector<18x1xf32>
    %364 = math.rsqrt %363 : vector<18x1xf32>
    %365 = vector.broadcast %364 : vector<18x1xf32> to vector<18x32xf32>
    %366 = arith.mulf %361, %365 : vector<18x32xf32>
    %c0_163 = arith.constant 0 : index
    %c0_164 = arith.constant 0 : index
    %367 = vector.load %arg19[%c0_163, %c0_164] : memref<32x128xf32, #tpu.memory_space<vmem>>, vector<32x128xf32>
    %cst_165 = arith.constant dense<0.000000e+00> : vector<18x128xf32>
    %368 = tpu.matmul %366, %367, %cst_165 {dimension_numbers = #tpu.dot_dimension_numbers<[1], [0], [0], [1], [0, 0, 1, 1], [], []>} : vector<18x32xf32>, vector<32x128xf32>, vector<18x128xf32> -> vector<18x128xf32>
    %c0_166 = arith.constant 0 : index
    %c0_167 = arith.constant 0 : index
    %369 = vector.load %arg20[%c0_166, %c0_167] : memref<1x128xf32, #tpu.memory_space<vmem>>, vector<1x128xf32>
    %370 = vector.broadcast %369 : vector<1x128xf32> to vector<18x128xf32>
    %371 = arith.addf %368, %370 : vector<18x128xf32>
    %c0_168 = arith.constant 0 : index
    %c0_169 = arith.constant 0 : index
    %372 = vector.load %arg21[%c0_168, %c0_169] : memref<18x128xf32, #tpu.memory_space<vmem>>, vector<18x128xf32>
    tpu.vector_store %arg21[%c0_168, %c0_169], %371 {strides = array<i32>} : memref<18x128xf32, #tpu.memory_space<vmem>>, vector<18x128xf32>,
    return
  }
  func.func @transform_0(%arg0: i32) -> (i32, i32) {
    %c0_i32 = arith.constant 0 : i32
    %c0_i32_0 = arith.constant 0 : i32
    %c0_i32_1 = arith.constant 0 : i32
    return %c0_i32, %c0_i32_0 : i32, i32
  }
  func.func @transform_1(%arg0: i32) -> (i32, i32) {
    %c0_i32 = arith.constant 0 : i32
    %c0_i32_0 = arith.constant 0 : i32
    %c0_i32_1 = arith.constant 0 : i32
    return %c0_i32, %c0_i32_0 : i32, i32
  }
  func.func @transform_2(%arg0: i32) -> (i32, i32) {
    %c0_i32 = arith.constant 0 : i32
    %c0_i32_0 = arith.constant 0 : i32
    %c0_i32_1 = arith.constant 0 : i32
    return %c0_i32, %c0_i32_0 : i32, i32
  }
  func.func @transform_3(%arg0: i32) -> (i32, i32) {
    %c0_i32 = arith.constant 0 : i32
    %c0_i32_0 = arith.constant 0 : i32
    %c0_i32_1 = arith.constant 0 : i32
    return %c0_i32, %c0_i32_0 : i32, i32
  }
  func.func @transform_4(%arg0: i32) -> (i32, i32) {
    %c0_i32 = arith.constant 0 : i32
    %c0_i32_0 = arith.constant 0 : i32
    %c0_i32_1 = arith.constant 0 : i32
    return %c0_i32, %c0_i32_0 : i32, i32
  }
  func.func @transform_5(%arg0: i32) -> (i32, i32) {
    %c0_i32 = arith.constant 0 : i32
    %c0_i32_0 = arith.constant 0 : i32
    %c0_i32_1 = arith.constant 0 : i32
    return %c0_i32, %c0_i32_0 : i32, i32
  }
  func.func @transform_6(%arg0: i32) -> (i32, i32) {
    %c0_i32 = arith.constant 0 : i32
    %c0_i32_0 = arith.constant 0 : i32
    %c0_i32_1 = arith.constant 0 : i32
    return %c0_i32, %c0_i32_0 : i32, i32
  }
  func.func @transform_7(%arg0: i32) -> (i32, i32) {
    %c0_i32 = arith.constant 0 : i32
    %c0_i32_0 = arith.constant 0 : i32
    %c0_i32_1 = arith.constant 0 : i32
    return %c0_i32, %c0_i32_0 : i32, i32
  }
  func.func @transform_8(%arg0: i32) -> (i32, i32) {
    %c0_i32 = arith.constant 0 : i32
    %c0_i32_0 = arith.constant 0 : i32
    %c0_i32_1 = arith.constant 0 : i32
    return %c0_i32, %c0_i32_0 : i32, i32
  }
  func.func @transform_9(%arg0: i32) -> (i32, i32) {
    %c0_i32 = arith.constant 0 : i32
    %c0_i32_0 = arith.constant 0 : i32
    %c0_i32_1 = arith.constant 0 : i32
    return %c0_i32, %c0_i32_0 : i32, i32
  }
  func.func @transform_10(%arg0: i32) -> (i32, i32, i32) {
    %c0_i32 = arith.constant 0 : i32
    %c0_i32_0 = arith.constant 0 : i32
    %c0_i32_1 = arith.constant 0 : i32
    %c0_i32_2 = arith.constant 0 : i32
    return %c0_i32, %c0_i32_0, %c0_i32_1 : i32, i32, i32
  }
  func.func @transform_11(%arg0: i32) -> (i32, i32, i32) {
    %c0_i32 = arith.constant 0 : i32
    %c0_i32_0 = arith.constant 0 : i32
    %c0_i32_1 = arith.constant 0 : i32
    %c0_i32_2 = arith.constant 0 : i32
    return %c0_i32, %c0_i32_0, %c0_i32_1 : i32, i32, i32
  }
  func.func @transform_12(%arg0: i32) -> (i32, i32, i32) {
    %c0_i32 = arith.constant 0 : i32
    %c0_i32_0 = arith.constant 0 : i32
    %c0_i32_1 = arith.constant 0 : i32
    %c0_i32_2 = arith.constant 0 : i32
    return %c0_i32, %c0_i32_0, %c0_i32_1 : i32, i32, i32
  }
  func.func @transform_13(%arg0: i32) -> (i32, i32, i32) {
    %c0_i32 = arith.constant 0 : i32
    %c0_i32_0 = arith.constant 0 : i32
    %c0_i32_1 = arith.constant 0 : i32
    %c0_i32_2 = arith.constant 0 : i32
    return %c0_i32, %c0_i32_0, %c0_i32_1 : i32, i32, i32
  }
  func.func @transform_14(%arg0: i32) -> (i32, i32, i32) {
    %c0_i32 = arith.constant 0 : i32
    %c0_i32_0 = arith.constant 0 : i32
    %c0_i32_1 = arith.constant 0 : i32
    %c0_i32_2 = arith.constant 0 : i32
    return %c0_i32, %c0_i32_0, %c0_i32_1 : i32, i32, i32
  }
  func.func @transform_15(%arg0: i32) -> (i32, i32, i32) {
    %c0_i32 = arith.constant 0 : i32
    %c0_i32_0 = arith.constant 0 : i32
    %c0_i32_1 = arith.constant 0 : i32
    %c0_i32_2 = arith.constant 0 : i32
    return %c0_i32, %c0_i32_0, %c0_i32_1 : i32, i32, i32
  }
  func.func @transform_16(%arg0: i32) -> (i32, i32, i32) {
    %c0_i32 = arith.constant 0 : i32
    %c0_i32_0 = arith.constant 0 : i32
    %c0_i32_1 = arith.constant 0 : i32
    %c0_i32_2 = arith.constant 0 : i32
    return %c0_i32, %c0_i32_0, %c0_i32_1 : i32, i32, i32
  }
  func.func @transform_17(%arg0: i32) -> (i32, i32, i32) {
    %c0_i32 = arith.constant 0 : i32
    %c0_i32_0 = arith.constant 0 : i32
    %c0_i32_1 = arith.constant 0 : i32
    %c0_i32_2 = arith.constant 0 : i32
    return %c0_i32, %c0_i32_0, %c0_i32_1 : i32, i32, i32
  }
  func.func @transform_18(%arg0: i32) -> (i32, i32) {
    %c0_i32 = arith.constant 0 : i32
    %c0_i32_0 = arith.constant 0 : i32
    %c0_i32_1 = arith.constant 0 : i32
    return %c0_i32, %c0_i32_0 : i32, i32
  }
  func.func @transform_19(%arg0: i32) -> (i32, i32) {
    %c0_i32 = arith.constant 0 : i32
    %c0_i32_0 = arith.constant 0 : i32
    %c0_i32_1 = arith.constant 0 : i32
    return %c0_i32, %c0_i32_0 : i32, i32
  }
  func.func @transform_20(%arg0: i32) -> (i32, i32) {
    %c0_i32 = arith.constant 0 : i32
    %c0_i32_0 = arith.constant 0 : i32
    %c0_i32_1 = arith.constant 0 : i32
    return %c0_i32, %c0_i32_0 : i32, i32
  }
}

</mosaic_0001>

<llo_original>
// kernel: dit_forward.1
$region0: #{dit_forward.1}
  #allocation0 [shape = 'u32[]', space=smem, size = 0x4, offset = 0x4, fixed_abs, tag = 'smem constant byte address 0x4 - core index']
  #allocation1 [shape = 'u32[144,128]{1,0:T(1,128)}', space=vmem, size = 0x12000, scoped, tag = 'internal scratch']
  #allocation2 [shape = 'f32[18,32]{1,0:T(8,128)}', space=vmem, size = 0x3000, scoped, tag = 'scratch operand']
  %s0 = inlined_call_operand.vmem [shape: f32[16,7], index: 0, kind: input, shape index: {}]
  %s1 = inlined_call_operand.vmem [shape: f32[2,256], index: 1, kind: input, shape index: {}]
  %s2 = inlined_call_operand.vmem [shape: f32[2,64], index: 2, kind: input, shape index: {}]
  %s3 = inlined_call_operand.vmem [shape: f32[7,32], index: 3, kind: input, shape index: {}]
  %s4 = inlined_call_operand.vmem [shape: f32[256,32], index: 4, kind: input, shape index: {}]
  %s5 = inlined_call_operand.vmem [shape: f32[1,32], index: 5, kind: input, shape index: {}]
  %s6 = inlined_call_operand.vmem [shape: f32[32,32], index: 6, kind: input, shape index: {}]
  %s7 = inlined_call_operand.vmem [shape: f32[64,32], index: 7, kind: input, shape index: {}]
  %s8 = inlined_call_operand.vmem [shape: f32[18,32], index: 8, kind: input, shape index: {}]
  %s9 = inlined_call_operand.vmem [shape: f32[18,18], index: 9, kind: input, shape index: {}]
  %s10 = inlined_call_operand.vmem [shape: f32[2,32,128], index: 10, kind: input, shape index: {}]
  %s11 = inlined_call_operand.vmem [shape: f32[2,1,128], index: 11, kind: input, shape index: {}]
  %s12 = inlined_call_operand.vmem [shape: f32[2,32,32], index: 12, kind: input, shape index: {}]
  %s13 = inlined_call_operand.vmem [shape: f32[2,1,32], index: 13, kind: input, shape index: {}]
  %s14 = inlined_call_operand.vmem [shape: f32[2,32,128], index: 14, kind: input, shape index: {}]
  %s15 = inlined_call_operand.vmem [shape: f32[2,1,128], index: 15, kind: input, shape index: {}]
  %s16 = inlined_call_operand.vmem [shape: f32[2,128,32], index: 16, kind: input, shape index: {}]
  %s17 = inlined_call_operand.vmem [shape: f32[2,1,32], index: 17, kind: input, shape index: {}]
  %s18 = inlined_call_operand.vmem [shape: f32[32,128], index: 18, kind: input, shape index: {}]
  %s19 = inlined_call_operand.vmem [shape: f32[1,128], index: 19, kind: input, shape index: {}]
  %s20 = inlined_call_operand.vmem [shape: f32[18,128], index: 20, kind: output, shape index: {}]
  %s21 = sld [smem:[#allocation0]]
  $region90: #{dit_forward.1} parent=0
    _
  %s23 = ssub.s32 1, %s21
  %s24 = scalar_select 0, %s23, %s21
  // Predicated region
  $region2: #{dit_forward.1} parent=0 // pred_check
    _
  $region3: #{dit_forward.1} parent=0 // pred_check_branch
    %26 = sbr.rel (0) target = $region5
  $region4: #{dit_forward.1} parent=0 // pred_region
    _
  $region5: #{dit_forward.1} parent=0 // pred_fallthru
    _
  // Predicated region
  $region6: #{dit_forward.1} parent=0 // pred_check
    _
  $region7: #{dit_forward.1} parent=0 // pred_check_branch
    %28 = sbr.rel (0) target = $region9
  $region8: #{dit_forward.1} parent=0 // pred_region
    _
  $region9: #{dit_forward.1} parent=0 // pred_fallthru
    _
  // Predicated region
  $region10: #{dit_forward.1} parent=0 // pred_check
    _
  $region11: #{dit_forward.1} parent=0 // pred_check_branch
    %30 = sbr.rel (0) target = $region13
  $region12: #{dit_forward.1} parent=0 // pred_region
    _
  $region13: #{dit_forward.1} parent=0 // pred_fallthru
    _
  // Predicated region
  $region14: #{dit_forward.1} parent=0 // pred_check
    _
  $region15: #{dit_forward.1} parent=0 // pred_check_branch
    %32 = sbr.rel (0) target = $region17
  $region16: #{dit_forward.1} parent=0 // pred_region
    _
  $region17: #{dit_forward.1} parent=0 // pred_fallthru
    _
  // Predicated region
  $region18: #{dit_forward.1} parent=0 // pred_check
    _
  $region19: #{dit_forward.1} parent=0 // pred_check_branch
    %34 = sbr.rel (0) target = $region21
  $region20: #{dit_forward.1} parent=0 // pred_region
    _
  $region21: #{dit_forward.1} parent=0 // pred_fallthru
    _
  // Predicated region
  $region22: #{dit_forward.1} parent=0 // pred_check
    _
  $region23: #{dit_forward.1} parent=0 // pred_check_branch
    %36 = sbr.rel (0) target = $region25
  $region24: #{dit_forward.1} parent=0 // pred_region
    _
  $region25: #{dit_forward.1} parent=0 // pred_fallthru
    _
  // Predicated region
  $region26: #{dit_forward.1} parent=0 // pred_check
    _
  $region27: #{dit_forward.1} parent=0 // pred_check_branch
    %38 = sbr.rel (0) target = $region29
  $region28: #{dit_forward.1} parent=0 // pred_region
    _
  $region29: #{dit_forward.1} parent=0 // pred_fallthru
    _
  // Predicated region
  $region30: #{dit_forward.1} parent=0 // pred_check
    _
  $region31: #{dit_forward.1} parent=0 // pred_check_branch
    %40 = sbr.rel (0) target = $region33
  $region32: #{dit_forward.1} parent=0 // pred_region
    _
  $region33: #{dit_forward.1} parent=0 // pred_fallthru
    _
  // Predicated region
  $region34: #{dit_forward.1} parent=0 // pred_check
    _
  $region35: #{dit_forward.1} parent=0 // pred_check_branch
    %42 = sbr.rel (0) target = $region37
  $region36: #{dit_forward.1} parent=0 // pred_region
    _
  $region37: #{dit_forward.1} parent=0 // pred_fallthru
    _
  // Predicated region
  $region38: #{dit_forward.1} parent=0 // pred_check
    _
  $region39: #{dit_forward.1} parent=0 // pred_check_branch
    %44 = sbr.rel (0) target = $region41
  $region40: #{dit_forward.1} parent=0 // pred_region
    _
  $region41: #{dit_forward.1} parent=0 // pred_fallthru
    _
  // Predicated region
  $region42: #{dit_forward.1} parent=0 // pred_check
    _
  $region43: #{dit_forward.1} parent=0 // pred_check_branch
    %46 = sbr.rel (0) target = $region45
  $region44: #{dit_forward.1} parent=0 // pred_region
    _
  $region45: #{dit_forward.1} parent=0 // pred_fallthru
    _
  // Predicated region
  $region46: #{dit_forward.1} parent=0 // pred_check
    _
  $region47: #{dit_forward.1} parent=0 // pred_check_branch
    %48 = sbr.rel (0) target = $region49
  $region48: #{dit_forward.1} parent=0 // pred_region
    _
  $region49: #{dit_forward.1} parent=0 // pred_fallthru
    _
  // Predicated region
  $region50: #{dit_forward.1} parent=0 // pred_check
    _
  $region51: #{dit_forward.1} parent=0 // pred_check_branch
    %50 = sbr.rel (0) target = $region53
  $region52: #{dit_forward.1} parent=0 // pred_region
    _
  $region53: #{dit_forward.1} parent=0 // pred_fallthru
    _
  // Predicated region
  $region54: #{dit_forward.1} parent=0 // pred_check
    _
  $region55: #{dit_forward.1} parent=0 // pred_check_branch
    %52 = sbr.rel (0) target = $region57
  $region56: #{dit_forward.1} parent=0 // pred_region
    _
  $region57: #{dit_forward.1} parent=0 // pred_fallthru
    _
  // Predicated region
  $region58: #{dit_forward.1} parent=0 // pred_check
    _
  $region59: #{dit_forward.1} parent=0 // pred_check_branch
    %54 = sbr.rel (0) target = $region61
  $region60: #{dit_forward.1} parent=0 // pred_region
    _
  $region61: #{dit_forward.1} parent=0 // pred_fallthru
    _
  // Predicated region
  $region62: #{dit_forward.1} parent=0 // pred_check
    _
  $region63: #{dit_forward.1} parent=0 // pred_check_branch
    %56 = sbr.rel (0) target = $region65
  $region64: #{dit_forward.1} parent=0 // pred_region
    _
  $region65: #{dit_forward.1} parent=0 // pred_fallthru
    _
  // Predicated region
  $region66: #{dit_forward.1} parent=0 // pred_check
    _
  $region67: #{dit_forward.1} parent=0 // pred_check_branch
    %58 = sbr.rel (0) target = $region69
  $region68: #{dit_forward.1} parent=0 // pred_region
    _
  $region69: #{dit_forward.1} parent=0 // pred_fallthru
    _
  // Predicated region
  $region70: #{dit_forward.1} parent=0 // pred_check
    _
  $region71: #{dit_forward.1} parent=0 // pred_check_branch
    %60 = sbr.rel (0) target = $region73
  $region72: #{dit_forward.1} parent=0 // pred_region
    _
  $region73: #{dit_forward.1} parent=0 // pred_fallthru
    _
  // Predicated region
  $region74: #{dit_forward.1} parent=0 // pred_check
    _
  $region75: #{dit_forward.1} parent=0 // pred_check_branch
    %62 = sbr.rel (0) target = $region77
  $region76: #{dit_forward.1} parent=0 // pred_region
    _
  $region77: #{dit_forward.1} parent=0 // pred_fallthru
    _
  // Predicated region
  $region78: #{dit_forward.1} parent=0 // pred_check
    _
  $region79: #{dit_forward.1} parent=0 // pred_check_branch
    %64 = sbr.rel (0) target = $region81
  $region80: #{dit_forward.1} parent=0 // pred_region
    _
  $region81: #{dit_forward.1} parent=0 // pred_fallthru
    _
  %v65 = vld [vmem:[%s0] sm:$0xff]
  %v66 = vld [vmem:[%s0 + $0x8] sm:$0xff]
  %v67 = vld [vmem:[%s3] sm:$0x7f]
  %vm68 = vcmask 56320
  %v70 = vsel %vm68, %v65, 0
  %v73 = vsel %vm68, %v66, 0
  %vm75 = vcmask 1046528
  %v77 = vsel %vm75, %v67, 0
  %79 = vmatprep.subr.mxu0 0.0
  %80 = vmatpush1.msra.mxu0 %v77
  %81 = vmatprep.subr.mxu0 0.0
  %82 = vmatpush1.msra.mxu0 0.0
  %83 = vmatprep.subr.mxu0 0.0
  %84 = vmatpush1.msra.mxu0 0.0
  %85 = vmatprep.subr.mxu0 0.0
  %86 = vmatpush1.msra.mxu0 0.0
  %87 = vmatprep.subr.mxu0 0.0
  %88 = vmatpush1.msra.mxu0 0.0
  %89 = vmatprep.subr.mxu0 0.0
  %90 = vmatpush1.msra.mxu0 0.0
  %91 = vmatprep.subr.mxu0 0.0
  %92 = vmatpush1.msra.mxu0 0.0
  %93 = vmatprep.subr.mxu0 0.0
  %94 = vmatpush1.msra.mxu0 0.0
  %95 = vmatprep.subr.mxu0 0.0
  %96 = vmatpush1.msra.mxu0 0.0
  %97 = vmatprep.subr.mxu0 0.0
  %98 = vmatpush1.msra.mxu0 0.0
  %99 = vmatprep.subr.mxu0 0.0
  %100 = vmatpush1.msra.mxu0 0.0
  %101 = vmatprep.subr.mxu0 0.0
  %102 = vmatpush1.msra.mxu0 0.0
  %103 = vmatprep.subr.mxu0 0.0
  %104 = vmatpush1.msra.mxu0 0.0
  %105 = vmatprep.subr.mxu0 0.0
  %106 = vmatpush1.msra.mxu0 0.0
  %107 = vmatprep.subr.mxu0 0.0
  %108 = vmatpush1.msra.mxu0 0.0
  %109 = vmatprep.subr.mxu0 0.0
  %110 = vmatpush1.msra.mxu0 0.0
  %111 = vmatprep.subr.mxu0 0.0
  %112 = vmatpush1.msra.mxu0 0.0
  %113 = vmatprep.subr.mxu0 0.0
  %114 = vmatpush1.msra.mxu0 0.0
  %115 = vmatprep.subr.mxu0 0.0
  %116 = vmatpush1.msra.mxu0 0.0
  %117 = vmatprep.subr.mxu0 0.0
  %118 = vmatpush1.msra.mxu0 0.0
  %119 = vmatprep.subr.mxu0 0.0
  %120 = vmatpush1.msra.mxu0 0.0
  %121 = vmatprep.subr.mxu0 0.0
  %122 = vmatpush1.msra.mxu0 0.0
  %123 = vmatprep.subr.mxu0 0.0
  %124 = vmatpush1.msra.mxu0 0.0
  %125 = vmatprep.subr.mxu0 0.0
  %126 = vmatpush1.msra.mxu0 0.0
  %127 = vmatprep.subr.mxu0 0.0
  %128 = vmatpush1.msra.mxu0 0.0
  %129 = vmatprep.subr.mxu0 0.0
  %130 = vmatpush1.msra.mxu0 0.0
  %131 = vmatprep.subr.mxu0 0.0
  %132 = vmatpush1.msra.mxu0 0.0
  %133 = vmatprep.subr.mxu0 0.0
  %134 = vmatpush1.msra.mxu0 0.0
  %135 = vmatprep.subr.mxu0 0.0
  %136 = vmatpush1.msra.mxu0 0.0
  %137 = vmatprep.subr.mxu0 0.0
  %138 = vmatpush1.msra.mxu0 0.0
  %139 = vmatprep.subr.mxu0 0.0
  %140 = vmatpush1.msra.mxu0 0.0
  %141 = vmatprep.subr.mxu0 0.0
  %142 = vmatpush1.msra.mxu0 0.0
  %143 = vmatprep.mubr.f32.mxu0 0.0
  %144 = vmatmul.mubr.f32.gmra.mrb[0].mxu0 %v70
  %v145 = vpop.f32.mrb[0].mxu0
  %v146 = vadd.f32 0.0, %v145
  %v147 = vpop.f32.mrb[0].mxu0
  %148 = vmatprep.mubr.f32.mxu0 0.0
  %149 = vmatmul.mubr.f32.gmra.mrb[0].mxu0 %v73
  %v150 = vpop.f32.mrb[0].mxu0
  %v151 = vadd.f32 0.0, %v150
  %v152 = vpop.f32.mrb[0].mxu0
  %153 = vdwg.mxu0
  %v154 = vld [vmem:[%s1] sm:$0xf]
  %v155 = vld [vmem:[%s4] sm:$0xff]
  %v156 = vld [vmem:[%s4 + $0x8] sm:$0xff]
  %v157 = vld [vmem:[%s4 + $0x10] sm:$0xff]
  %v158 = vld [vmem:[%s4 + $0x18] sm:$0xff]
  %v159 = vld [vmem:[%s4 + $0x20] sm:$0xff]
  %v160 = vld [vmem:[%s4 + $0x28] sm:$0xff]
  %v161 = vld [vmem:[%s4 + $0x30] sm:$0xff]
  %v162 = vld [vmem:[%s4 + $0x38] sm:$0xff]
  %v163 = vld [vmem:[%s4 + $0x40] sm:$0xff]
  %v164 = vld [vmem:[%s4 + $0x48] sm:$0xff]
  %v165 = vld [vmem:[%s4 + $0x50] sm:$0xff]
  %v166 = vld [vmem:[%s4 + $0x58] sm:$0xff]
  %v167 = vld [vmem:[%s4 + $0x60] sm:$0xff]
  %v168 = vld [vmem:[%s4 + $0x68] sm:$0xff]
  %v169 = vld [vmem:[%s4 + $0x70] sm:$0xff]
  %v170 = vld [vmem:[%s4 + $0x78] sm:$0xff]
  %v171 = vld [vmem:[%s4 + $0x80] sm:$0xff]
  %v172 = vld [vmem:[%s4 + $0x88] sm:$0xff]
  %v173 = vld [vmem:[%s4 + $0x90] sm:$0xff]
  %v174 = vld [vmem:[%s4 + $0x98] sm:$0xff]
  %v175 = vld [vmem:[%s4 + $0xa0] sm:$0xff]
  %v176 = vld [vmem:[%s4 + $0xa8] sm:$0xff]
  %v177 = vld [vmem:[%s4 + $0xb0] sm:$0xff]
  %v178 = vld [vmem:[%s4 + $0xb8] sm:$0xff]
  %v179 = vld [vmem:[%s4 + $0xc0] sm:$0xff]
  %v180 = vld [vmem:[%s4 + $0xc8] sm:$0xff]
  %v181 = vld [vmem:[%s4 + $0xd0] sm:$0xff]
  %v182 = vld [vmem:[%s4 + $0xd8] sm:$0xff]
  %v183 = vld [vmem:[%s4 + $0xe0] sm:$0xff]
  %v184 = vld [vmem:[%s4 + $0xe8] sm:$0xff]
  %v185 = vld [vmem:[%s4 + $0xf0] sm:$0xff]
  %v186 = vld [vmem:[%s4 + $0xf8] sm:$0xff]
  %v187 = vld [vmem:[%s5] sm:$0x1]
  %v189 = vlaneseq
  %v190 = vshrl.u32 %v189, 7
  %v191 = vsub.s32 0, %v190
  %v192 = vrot.slane %v187, %v191
  %v196 = vunpack.c.l.s4 1983009808
  %v197 = vunpack.c.0.s8 %v196
  %v198 = vlaneseq
  %v199 = vshrl.u32 %v198, 7
  %v200 = vsub.s32 %v197, %v199
  %v201 = vrot.slane %v154, %v200
  %v202 = vcombine.high %v201, %v201
  %205 = vmatprep.subr.mxu0 0.0
  %206 = vmatpush1.msra.mxu0 %v155
  %207 = vmatprep.subr.mxu0 0.0
  %208 = vmatpush1.msra.mxu0 %v156
  %209 = vmatprep.subr.mxu0 0.0
  %210 = vmatpush1.msra.mxu0 %v157
  %211 = vmatprep.subr.mxu0 0.0
  %212 = vmatpush1.msra.mxu0 %v158
  %213 = vmatprep.subr.mxu0 0.0
  %214 = vmatpush1.msra.mxu0 %v159
  %215 = vmatprep.subr.mxu0 0.0
  %216 = vmatpush1.msra.mxu0 %v160
  %217 = vmatprep.subr.mxu0 0.0
  %218 = vmatpush1.msra.mxu0 %v161
  %219 = vmatprep.subr.mxu0 0.0
  %220 = vmatpush1.msra.mxu0 %v162
  %221 = vmatprep.subr.mxu0 0.0
  %222 = vmatpush1.msra.mxu0 %v163
  %223 = vmatprep.subr.mxu0 0.0
  %224 = vmatpush1.msra.mxu0 %v164
  %225 = vmatprep.subr.mxu0 0.0
  %226 = vmatpush1.msra.mxu0 %v165
  %227 = vmatprep.subr.mxu0 0.0
  %228 = vmatpush1.msra.mxu0 %v166
  %229 = vmatprep.subr.mxu0 0.0
  %230 = vmatpush1.msra.mxu0 %v167
  %231 = vmatprep.subr.mxu0 0.0
  %232 = vmatpush1.msra.mxu0 %v168
  %233 = vmatprep.subr.mxu0 0.0
  %234 = vmatpush1.msra.mxu0 %v169
  %235 = vmatprep.subr.mxu0 0.0
  %236 = vmatpush1.msra.mxu0 %v170
  %237 = vmatprep.subr.mxu0 0.0
  %238 = vmatpush1.msra.mxu0 %v171
  %239 = vmatprep.subr.mxu0 0.0
  %240 = vmatpush1.msra.mxu0 %v172
  %241 = vmatprep.subr.mxu0 0.0
  %242 = vmatpush1.msra.mxu0 %v173
  %243 = vmatprep.subr.mxu0 0.0
  %244 = vmatpush1.msra.mxu0 %v174
  %245 = vmatprep.subr.mxu0 0.0
  %246 = vmatpush1.msra.mxu0 %v175
  %247 = vmatprep.subr.mxu0 0.0
  %248 = vmatpush1.msra.mxu0 %v176
  %249 = vmatprep.subr.mxu0 0.0
  %250 = vmatpush1.msra.mxu0 %v177
  %251 = vmatprep.subr.mxu0 0.0
  %252 = vmatpush1.msra.mxu0 %v178
  %253 = vmatprep.subr.mxu0 0.0
  %254 = vmatpush1.msra.mxu0 %v179
  %255 = vmatprep.subr.mxu0 0.0
  %256 = vmatpush1.msra.mxu0 %v180
  %257 = vmatprep.subr.mxu0 0.0
  %258 = vmatpush1.msra.mxu0 %v181
  %259 = vmatprep.subr.mxu0 0.0
  %260 = vmatpush1.msra.mxu0 %v182
  %261 = vmatprep.subr.mxu0 0.0
  %262 = vmatpush1.msra.mxu0 %v183
  %263 = vmatprep.subr.mxu0 0.0
  %264 = vmatpush1.msra.mxu0 %v184
  %265 = vmatprep.subr.mxu0 0.0
  %266 = vmatpush1.msra.mxu0 %v185
  %267 = vmatprep.subr.mxu0 0.0
  %268 = vmatpush1.msra.mxu0 %v186
  %269 = vmatprep.mubr.f32.mxu0 %v202
  %270 = vmatmul.mubr.f32.gmra.mrb[0].mxu0 %v201
  %v271 = vpop.f32.mrb[0].mxu0
  %v272 = vadd.f32 %v192, %v271
  %v273 = vpop.f32.mrb[0].mxu0
  %274 = vdwg.mxu0
  %v275 = vsub.f32 0.0, %v272
  %v276 = vmul.f32 %v275, 1.442695
  %v277 = vpow.pop %v276
  %v278 = vadd.f32 %v277, 1.0
  %v279 = vrcp.pop %v278
  %v280 = vmul.f32 %v272, %v279
  %v281 = vld [vmem:[%s6] sm:$0xff]
  %v282 = vld [vmem:[%s6 + $0x8] sm:$0xff]
  %v283 = vld [vmem:[%s6 + $0x10] sm:$0xff]
  %v284 = vld [vmem:[%s6 + $0x18] sm:$0xff]
  %v285 = vld [vmem:[%s2] sm:$0x3]
  %v286 = vld [vmem:[%s7] sm:$0xff]
  %v287 = vld [vmem:[%s7 + $0x8] sm:$0xff]
  %v288 = vld [vmem:[%s7 + $0x10] sm:$0xff]
  %v289 = vld [vmem:[%s7 + $0x18] sm:$0xff]
  %v290 = vld [vmem:[%s7 + $0x20] sm:$0xff]
  %v291 = vld [vmem:[%s7 + $0x28] sm:$0xff]
  %v292 = vld [vmem:[%s7 + $0x30] sm:$0xff]
  %v293 = vld [vmem:[%s7 + $0x38] sm:$0xff]
  %vm294 = vcmask 523264
  %v296 = vsel %vm294, %v285, 0
  %298 = vmatprep.subr.mxu0 0.0
  %299 = vmatpush1.msra.mxu0 %v286
  %300 = vmatprep.subr.mxu0 0.0
  %301 = vmatpush1.msra.mxu0 %v287
  %302 = vmatprep.subr.mxu0 0.0
  %303 = vmatpush1.msra.mxu0 %v288
  %304 = vmatprep.subr.mxu0 0.0
  %305 = vmatpush1.msra.mxu0 %v289
  %306 = vmatprep.subr.mxu0 0.0
  %307 = vmatpush1.msra.mxu0 %v290
  %308 = vmatprep.subr.mxu0 0.0
  %309 = vmatpush1.msra.mxu0 %v291
  %310 = vmatprep.subr.mxu0 0.0
  %311 = vmatpush1.msra.mxu0 %v292
  %312 = vmatprep.subr.mxu0 0.0
  %313 = vmatpush1.msra.mxu0 %v293
  %314 = vmatprep.subr.mxu0 0.0
  %315 = vmatpush1.msra.mxu0 0.0
  %316 = vmatprep.subr.mxu0 0.0
  %317 = vmatpush1.msra.mxu0 0.0
  %318 = vmatprep.subr.mxu0 0.0
  %319 = vmatpush1.msra.mxu0 0.0
  %320 = vmatprep.subr.mxu0 0.0
  %321 = vmatpush1.msra.mxu0 0.0
  %322 = vmatprep.subr.mxu0 0.0
  %323 = vmatpush1.msra.mxu0 0.0
  %324 = vmatprep.subr.mxu0 0.0
  %325 = vmatpush1.msra.mxu0 0.0
  %326 = vmatprep.subr.mxu0 0.0
  %327 = vmatpush1.msra.mxu0 0.0
  %328 = vmatprep.subr.mxu0 0.0
  %329 = vmatpush1.msra.mxu0 0.0
  %330 = vmatprep.subr.mxu0 0.0
  %331 = vmatpush1.msra.mxu0 0.0
  %332 = vmatprep.subr.mxu0 0.0
  %333 = vmatpush1.msra.mxu0 0.0
  %334 = vmatprep.subr.mxu0 0.0
  %335 = vmatpush1.msra.mxu0 0.0
  %336 = vmatprep.subr.mxu0 0.0
  %337 = vmatpush1.msra.mxu0 0.0
  %338 = vmatprep.subr.mxu0 0.0
  %339 = vmatpush1.msra.mxu0 0.0
  %340 = vmatprep.subr.mxu0 0.0
  %341 = vmatpush1.msra.mxu0 0.0
  %342 = vmatprep.subr.mxu0 0.0
  %343 = vmatpush1.msra.mxu0 0.0
  %344 = vmatprep.subr.mxu0 0.0
  %345 = vmatpush1.msra.mxu0 0.0
  %346 = vmatprep.subr.mxu0 0.0
  %347 = vmatpush1.msra.mxu0 0.0
  %348 = vmatprep.subr.mxu0 0.0
  %349 = vmatpush1.msra.mxu0 0.0
  %350 = vmatprep.subr.mxu0 0.0
  %351 = vmatpush1.msra.mxu0 0.0
  %352 = vmatprep.subr.mxu0 0.0
  %353 = vmatpush1.msra.mxu0 0.0
  %354 = vmatprep.subr.mxu0 0.0
  %355 = vmatpush1.msra.mxu0 0.0
  %356 = vmatprep.subr.mxu0 0.0
  %357 = vmatpush1.msra.mxu0 0.0
  %358 = vmatprep.subr.mxu0 0.0
  %359 = vmatpush1.msra.mxu0 0.0
  %360 = vmatprep.subr.mxu0 0.0
  %361 = vmatpush1.msra.mxu0 0.0
  %362 = vmatprep.mubr.f32.mxu0 0.0
  %363 = vmatmul.mubr.f32.gmra.mrb[0].mxu0 %v296
  %v364 = vpop.f32.mrb[0].mxu0
  %v365 = vadd.f32 0.0, %v364
  %v366 = vpop.f32.mrb[0].mxu0
  %367 = vdwg.mxu0
  %vm368 = vcmask 261120
  %v370 = vsel %vm368, %v280, 0
  %372 = vmatprep.subr.mxu0 0.0
  %373 = vmatpush1.msra.mxu0 %v281
  %374 = vmatprep.subr.mxu0 0.0
  %375 = vmatpush1.msra.mxu0 %v282
  %376 = vmatprep.subr.mxu0 0.0
  %377 = vmatpush1.msra.mxu0 %v283
  %378 = vmatprep.subr.mxu0 0.0
  %379 = vmatpush1.msra.mxu0 %v284
  %380 = vmatprep.subr.mxu0 0.0
  %381 = vmatpush1.msra.mxu0 0.0
  %382 = vmatprep.subr.mxu0 0.0
  %383 = vmatpush1.msra.mxu0 0.0
  %384 = vmatprep.subr.mxu0 0.0
  %385 = vmatpush1.msra.mxu0 0.0
  %386 = vmatprep.subr.mxu0 0.0
  %387 = vmatpush1.msra.mxu0 0.0
  %388 = vmatprep.subr.mxu0 0.0
  %389 = vmatpush1.msra.mxu0 0.0
  %390 = vmatprep.subr.mxu0 0.0
  %391 = vmatpush1.msra.mxu0 0.0
  %392 = vmatprep.subr.mxu0 0.0
  %393 = vmatpush1.msra.mxu0 0.0
  %394 = vmatprep.subr.mxu0 0.0
  %395 = vmatpush1.msra.mxu0 0.0
  %396 = vmatprep.subr.mxu0 0.0
  %397 = vmatpush1.msra.mxu0 0.0
  %398 = vmatprep.subr.mxu0 0.0
  %399 = vmatpush1.msra.mxu0 0.0
  %400 = vmatprep.subr.mxu0 0.0
  %401 = vmatpush1.msra.mxu0 0.0
  %402 = vmatprep.subr.mxu0 0.0
  %403 = vmatpush1.msra.mxu0 0.0
  %404 = vmatprep.subr.mxu0 0.0
  %405 = vmatpush1.msra.mxu0 0.0
  %406 = vmatprep.subr.mxu0 0.0
  %407 = vmatpush1.msra.mxu0 0.0
  %408 = vmatprep.subr.mxu0 0.0
  %409 = vmatpush1.msra.mxu0 0.0
  %410 = vmatprep.subr.mxu0 0.0
  %411 = vmatpush1.msra.mxu0 0.0
  %412 = vmatprep.subr.mxu0 0.0
  %413 = vmatpush1.msra.mxu0 0.0
  %414 = vmatprep.subr.mxu0 0.0
  %415 = vmatpush1.msra.mxu0 0.0
  %416 = vmatprep.subr.mxu0 0.0
  %417 = vmatpush1.msra.mxu0 0.0
  %418 = vmatprep.subr.mxu0 0.0
  %419 = vmatpush1.msra.mxu0 0.0
  %420 = vmatprep.subr.mxu0 0.0
  %421 = vmatpush1.msra.mxu0 0.0
  %422 = vmatprep.subr.mxu0 0.0
  %423 = vmatpush1.msra.mxu0 0.0
  %424 = vmatprep.subr.mxu0 0.0
  %425 = vmatpush1.msra.mxu0 0.0
  %426 = vmatprep.subr.mxu0 0.0
  %427 = vmatpush1.msra.mxu0 0.0
  %428 = vmatprep.subr.mxu0 0.0
  %429 = vmatpush1.msra.mxu0 0.0
  %430 = vmatprep.subr.mxu0 0.0
  %431 = vmatpush1.msra.mxu0 0.0
  %432 = vmatprep.subr.mxu0 0.0
  %433 = vmatpush1.msra.mxu0 0.0
  %434 = vmatprep.subr.mxu0 0.0
  %435 = vmatpush1.msra.mxu0 0.0
  %436 = vmatprep.mubr.f32.mxu0 0.0
  %437 = vmatmul.mubr.f32.gmra.mrb[0].mxu0 %v370
  %v438 = vpop.f32.mrb[0].mxu0
  %v439 = vadd.f32 %v365, %v438
  %v440 = vpop.f32.mrb[0].mxu0
  %441 = vdwg.mxu0
  %vm442 = vcmask 254976
  %443 = vst.msk [vmem:[#allocation2] sm:$0x3] %vm442, %v439
  %444 = vst.msk [vmem:[#allocation2 + $0x2] sm:$0xff] %vm368, %v146
  %445 = vst.msk [vmem:[#allocation2 + $0xa] sm:$0xff] %vm368, %v151
  %v446 = vld [vmem:[#allocation2] sm:$0xff]
  %v447 = vld [vmem:[#allocation2 + $0x8] sm:$0xff]
  %v448 = vld [vmem:[#allocation2 + $0x10] sm:$0x3]
  %v449 = vld [vmem:[%s8] sm:$0xff]
  %v450 = vld [vmem:[%s8 + $0x8] sm:$0xff]
  %v451 = vld [vmem:[%s8 + $0x10] sm:$0x3]
  %v452 = vadd.f32 %v446, %v449
  %v453 = vadd.f32 %v447, %v450
  %v454 = vadd.f32 %v448, %v451
  %v455 = vld [vmem:[%s9] sm:$0xff]
  %v456 = vld [vmem:[%s9 + $0x8] sm:$0xff]
  %v457 = vld [vmem:[%s9 + $0x10] sm:$0x3]
  %v458 = vsel %vm368, %v452, 0.0
  %459 = vadd.xlane.f32.xlu0 %v458
  %v460 = vpop.xlane.xlu0 %459
  %v461 = vsel %vm368, %v453, 0.0
  %462 = vadd.xlane.f32.xlu0 %v461
  %v463 = vpop.xlane.xlu0 %462
  %v464 = vsel %vm442, %v454, 0.0
  %465 = vadd.xlane.f32.xlu0 %v464
  %v466 = vpop.xlane.xlu0 %465
  %v467 = vrcp.pop 32.0
  %v468 = vmul.f32 %v460, %v467
  %v469 = vmul.f32 %v463, %v467
  %v470 = vmul.f32 %v466, %v467
  %v471 = vsub.f32 %v452, %v468
  %v472 = vsub.f32 %v453, %v469
  %v473 = vsub.f32 %v454, %v470
  %v474 = vmul.f32 %v471, %v471
  %v475 = vmul.f32 %v472, %v472
  %v476 = vmul.f32 %v473, %v473
  %v477 = vsel %vm368, %v474, 0.0
  %478 = vadd.xlane.f32.xlu0 %v477
  %v479 = vpop.xlane.xlu0 %478
  %v480 = vsel %vm368, %v475, 0.0
  %481 = vadd.xlane.f32.xlu0 %v480
  %v482 = vpop.xlane.xlu0 %481
  %v483 = vsel %vm442, %v476, 0.0
  %484 = vadd.xlane.f32.xlu0 %v483
  %v485 = vpop.xlane.xlu0 %484
  %v486 = vmul.f32 %v479, %v467
  %v487 = vmul.f32 %v482, %v467
  %v488 = vmul.f32 %v485, %v467
  %v489 = vadd.f32 %v486, 1e-06
  %v490 = vadd.f32 %v487, 1e-06
  %v491 = vadd.f32 %v488, 1e-06
  %v492 = vrsqrt.pop %v489
  %v493 = vrsqrt.pop %v490
  %v494 = vrsqrt.pop %v491
  %v495 = vmul.f32 %v471, %v492
  %v496 = vmul.f32 %v472, %v493
  %v497 = vmul.f32 %v473, %v494
  %v498 = vld [vmem:[%s10] sm:$0xff]
  %v499 = vld [vmem:[%s10 + $0x8] sm:$0xff]
  %v500 = vld [vmem:[%s10 + $0x10] sm:$0xff]
  %v501 = vld [vmem:[%s10 + $0x18] sm:$0xff]
  %v502 = vld [vmem:[%s11] sm:$0x1]
  %v504 = vlaneseq
  %v505 = vshrl.u32 %v504, 7
  %v506 = vsub.s32 0, %v505
  %v507 = vrot.slane %v502, %v506
  %v510 = vsel %vm368, %v495, 0
  %v513 = vsel %vm368, %v496, 0
  %v516 = vsel %vm368, %v497, 0
  %518 = vmatprep.subr.mxu0 0.0
  %519 = vmatpush1.msra.mxu0 %v498
  %520 = vmatprep.subr.mxu0 0.0
  %521 = vmatpush1.msra.mxu0 %v499
  %522 = vmatprep.subr.mxu0 0.0
  %523 = vmatpush1.msra.mxu0 %v500
  %524 = vmatprep.subr.mxu0 0.0
  %525 = vmatpush1.msra.mxu0 %v501
  %526 = vmatprep.subr.mxu0 0.0
  %527 = vmatpush1.msra.mxu0 0.0
  %528 = vmatprep.subr.mxu0 0.0
  %529 = vmatpush1.msra.mxu0 0.0
  %530 = vmatprep.subr.mxu0 0.0
  %531 = vmatpush1.msra.mxu0 0.0
  %532 = vmatprep.subr.mxu0 0.0
  %533 = vmatpush1.msra.mxu0 0.0
  %534 = vmatprep.subr.mxu0 0.0
  %535 = vmatpush1.msra.mxu0 0.0
  %536 = vmatprep.subr.mxu0 0.0
  %537 = vmatpush1.msra.mxu0 0.0
  %538 = vmatprep.subr.mxu0 0.0
  %539 = vmatpush1.msra.mxu0 0.0
  %540 = vmatprep.subr.mxu0 0.0
  %541 = vmatpush1.msra.mxu0 0.0
  %542 = vmatprep.subr.mxu0 0.0
  %543 = vmatpush1.msra.mxu0 0.0
  %544 = vmatprep.subr.mxu0 0.0
  %545 = vmatpush1.msra.mxu0 0.0
  %546 = vmatprep.subr.mxu0 0.0
  %547 = vmatpush1.msra.mxu0 0.0
  %548 = vmatprep.subr.mxu0 0.0
  %549 = vmatpush1.msra.mxu0 0.0
  %550 = vmatprep.subr.mxu0 0.0
  %551 = vmatpush1.msra.mxu0 0.0
  %552 = vmatprep.subr.mxu0 0.0
  %553 = vmatpush1.msra.mxu0 0.0
  %554 = vmatprep.subr.mxu0 0.0
  %555 = vmatpush1.msra.mxu0 0.0
  %556 = vmatprep.subr.mxu0 0.0
  %557 = vmatpush1.msra.mxu0 0.0
  %558 = vmatprep.subr.mxu0 0.0
  %559 = vmatpush1.msra.mxu0 0.0
  %560 = vmatprep.subr.mxu0 0.0
  %561 = vmatpush1.msra.mxu0 0.0
  %562 = vmatprep.subr.mxu0 0.0
  %563 = vmatpush1.msra.mxu0 0.0
  %564 = vmatprep.subr.mxu0 0.0
  %565 = vmatpush1.msra.mxu0 0.0
  %566 = vmatprep.subr.mxu0 0.0
  %567 = vmatpush1.msra.mxu0 0.0
  %568 = vmatprep.subr.mxu0 0.0
  %569 = vmatpush1.msra.mxu0 0.0
  %570 = vmatprep.subr.mxu0 0.0
  %571 = vmatpush1.msra.mxu0 0.0
  %572 = vmatprep.subr.mxu0 0.0
  %573 = vmatpush1.msra.mxu0 0.0
  %574 = vmatprep.subr.mxu0 0.0
  %575 = vmatpush1.msra.mxu0 0.0
  %576 = vmatprep.subr.mxu0 0.0
  %577 = vmatpush1.msra.mxu0 0.0
  %578 = vmatprep.subr.mxu0 0.0
  %579 = vmatpush1.msra.mxu0 0.0
  %580 = vmatprep.subr.mxu0 0.0
  %581 = vmatpush1.msra.mxu0 0.0
  %582 = vmatprep.mubr.f32.mxu0 0.0
  %583 = vmatmul.mubr.f32.gmra.mrb[0].mxu0 %v510
  %v584 = vpop.f32.mrb[0].mxu0
  %v585 = vadd.f32 %v507, %v584
  %v586 = vpop.f32.mrb[0].mxu0
  %587 = vmatprep.mubr.f32.mxu0 0.0
  %588 = vmatmul.mubr.f32.gmra.mrb[0].mxu0 %v513
  %v589 = vpop.f32.mrb[0].mxu0
  %v590 = vadd.f32 %v507, %v589
  %v591 = vpop.f32.mrb[0].mxu0
  %592 = vmatprep.mubr.f32.mxu0 0.0
  %593 = vmatmul.mubr.f32.gmra.mrb[0].mxu0 %v516
  %v594 = vpop.f32.mrb[0].mxu0
  %v595 = vadd.f32 %v507, %v594
  %v596 = vpop.f32.mrb[0].mxu0
  %597 = vdwg.mxu0
  %v598 = vld [vmem:[%s12] sm:$0xff]
  %v599 = vld [vmem:[%s12 + $0x8] sm:$0xff]
  %v600 = vld [vmem:[%s12 + $0x10] sm:$0xff]
  %v601 = vld [vmem:[%s12 + $0x18] sm:$0xff]
  %605 = vrot.lane.b32.xlu0 %v585, 96
  %v606 = vpop.permute.xlu0 %605
  %607 = vrot.lane.b32.xlu0 %v590, 96
  %v608 = vpop.permute.xlu0 %607
  %609 = vrot.lane.b32.xlu0 %v595, 96
  %v610 = vpop.permute.xlu0 %609
  %vm611 = vcmask 64512
  %v612 = vsel %vm611, %v585, 0
  %v614 = vsel %vm611, %v590, 0
  %v616 = vsel %vm611, %v595, 0
  %v618 = vsel %vm611, %v606, 0
  %v620 = vsel %vm611, %v608, 0
  %v622 = vsel %vm611, %v610, 0
  %624 = vmatprep.subr.mxu0 0.0
  %625 = vmatpush1.xpose.msra.mxu0 %v618
  %626 = vmatprep.subr.mxu0 0.0
  %627 = vmatpush1.xpose.msra.mxu0 %v620
  %628 = vmatprep.subr.mxu0 0.0
  %629 = vmatpush1.xpose.msra.mxu0 %v622
  %630 = vmatprep.subr.mxu0 0.0
  %631 = vmatpush1.xpose.msra.mxu0 0.0
  %632 = vmatprep.subr.mxu0 0.0
  %633 = vmatpush1.xpose.msra.mxu0 0.0
  %634 = vmatprep.subr.mxu0 0.0
  %635 = vmatpush1.xpose.msra.mxu0 0.0
  %636 = vmatprep.subr.mxu0 0.0
  %637 = vmatpush1.xpose.msra.mxu0 0.0
  %638 = vmatprep.subr.mxu0 0.0
  %639 = vmatpush1.xpose.msra.mxu0 0.0
  %640 = vmatprep.subr.mxu0 0.0
  %641 = vmatpush1.xpose.msra.mxu0 0.0
  %642 = vmatprep.subr.mxu0 0.0
  %643 = vmatpush1.xpose.msra.mxu0 0.0
  %644 = vmatprep.subr.mxu0 0.0
  %645 = vmatpush1.xpose.msra.mxu0 0.0
  %646 = vmatprep.subr.mxu0 0.0
  %647 = vmatpush1.xpose.msra.mxu0 0.0
  %648 = vmatprep.subr.mxu0 0.0
  %649 = vmatpush1.xpose.msra.mxu0 0.0
  %650 = vmatprep.subr.mxu0 0.0
  %651 = vmatpush1.xpose.msra.mxu0 0.0
  %652 = vmatprep.subr.mxu0 0.0
  %653 = vmatpush1.xpose.msra.mxu0 0.0
  %654 = vmatprep.subr.mxu0 0.0
  %655 = vmatpush1.xpose.msra.mxu0 0.0
  %656 = vmatprep.subr.mxu0 0.0
  %657 = vmatpush1.xpose.msra.mxu0 0.0
  %658 = vmatprep.subr.mxu0 0.0
  %659 = vmatpush1.xpose.msra.mxu0 0.0
  %660 = vmatprep.subr.mxu0 0.0
  %661 = vmatpush1.xpose.msra.mxu0 0.0
  %662 = vmatprep.subr.mxu0 0.0
  %663 = vmatpush1.xpose.msra.mxu0 0.0
  %664 = vmatprep.subr.mxu0 0.0
  %665 = vmatpush1.xpose.msra.mxu0 0.0
  %666 = vmatprep.subr.mxu0 0.0
  %667 = vmatpush1.xpose.msra.mxu0 0.0
  %668 = vmatprep.subr.mxu0 0.0
  %669 = vmatpush1.xpose.msra.mxu0 0.0
  %670 = vmatprep.subr.mxu0 0.0
  %671 = vmatpush1.xpose.msra.mxu0 0.0
  %672 = vmatprep.subr.mxu0 0.0
  %673 = vmatpush1.xpose.msra.mxu0 0.0
  %674 = vmatprep.subr.mxu0 0.0
  %675 = vmatpush1.xpose.msra.mxu0 0.0
  %676 = vmatprep.subr.mxu0 0.0
  %677 = vmatpush1.xpose.msra.mxu0 0.0
  %678 = vmatprep.subr.mxu0 0.0
  %679 = vmatpush1.xpose.msra.mxu0 0.0
  %680 = vmatprep.subr.mxu0 0.0
  %681 = vmatpush1.xpose.msra.mxu0 0.0
  %682 = vmatprep.subr.mxu0 0.0
  %683 = vmatpush1.xpose.msra.mxu0 0.0
  %684 = vmatprep.subr.mxu0 0.0
  %685 = vmatpush1.xpose.msra.mxu0 0.0
  %686 = vmatprep.subr.mxu0 0.0
  %687 = vmatpush1.xpose.msra.mxu0 0.0
  %688 = vmatprep.mubr.f32.mxu0 0.0
  %689 = vmatmul.mubr.f32.gmra.mrb[0].mxu0 %v612
  %v690 = vpop.f32.mrb[0].mxu0
  %v691 = vadd.f32 0.0, %v690
  %v692 = vpop.f32.mrb[0].mxu0
  %693 = vmatprep.mubr.f32.mxu0 0.0
  %694 = vmatmul.mubr.f32.gmra.mrb[0].mxu0 %v614
  %v695 = vpop.f32.mrb[0].mxu0
  %v696 = vadd.f32 0.0, %v695
  %v697 = vpop.f32.mrb[0].mxu0
  %698 = vmatprep.mubr.f32.mxu0 0.0
  %699 = vmatmul.mubr.f32.gmra.mrb[0].mxu0 %v616
  %v700 = vpop.f32.mrb[0].mxu0
  %v701 = vadd.f32 0.0, %v700
  %v702 = vpop.f32.mrb[0].mxu0
  %703 = vdwg.mxu0
  %v704 = vmul.f32 %v691, 0.35355338
  %v705 = vmul.f32 %v696, 0.35355338
  %v706 = vmul.f32 %v701, 0.35355338
  %v707 = vadd.f32 %v704, %v455
  %v708 = vadd.f32 %v705, %v456
  %v709 = vadd.f32 %v706, %v457
  %vm710 = vcmask 146432
  %v711 = vsel %vm710, %v707, -inf
  %712 = vmax.xlane.f32.xlu0 %v711
  %v713 = vpop.xlane.xlu0 %712
  %v714 = vsel %vm710, %v708, -inf
  %715 = vmax.xlane.f32.xlu0 %v714
  %v716 = vpop.xlane.xlu0 %715
  %vm717 = vcmask 140288
  %v718 = vsel %vm717, %v709, -inf
  %719 = vmax.xlane.f32.xlu0 %v718
  %v720 = vpop.xlane.xlu0 %719
  %v721 = vsub.f32 %v707, %v713
  %v722 = vsub.f32 %v708, %v716
  %v723 = vsub.f32 %v709, %v720
  %v724 = vmul.f32 %v721, 1.442695
  %v725 = vpow.pop %v724
  %v726 = vmul.f32 %v722, 1.442695
  %v727 = vpow.pop %v726
  %v728 = vmul.f32 %v723, 1.442695
  %v729 = vpow.pop %v728
  %v730 = vsel %vm710, %v725, 0.0
  %731 = vadd.xlane.f32.xlu0 %v730
  %v732 = vpop.xlane.xlu0 %731
  %v733 = vsel %vm710, %v727, 0.0
  %734 = vadd.xlane.f32.xlu0 %v733
  %v735 = vpop.xlane.xlu0 %734
  %v736 = vsel %vm717, %v729, 0.0
  %737 = vadd.xlane.f32.xlu0 %v736
  %v738 = vpop.xlane.xlu0 %737
  %v739 = vrcp.pop %v732
  %v740 = vrcp.pop %v735
  %v741 = vrcp.pop %v738
  %v742 = vmul.f32 %v725, %v739
  %v743 = vmul.f32 %v727, %v740
  %v744 = vmul.f32 %v729, %v741
  %745 = vrot.lane.b32.xlu0 %v585, 64
  %v746 = vpop.permute.xlu0 %745
  %747 = vrot.lane.b32.xlu0 %v590, 64
  %v748 = vpop.permute.xlu0 %747
  %749 = vrot.lane.b32.xlu0 %v595, 64
  %v750 = vpop.permute.xlu0 %749
  %v754 = vsel %vm710, %v742, 0
  %v757 = vsel %vm710, %v743, 0
  %v760 = vsel %vm710, %v744, 0
  %vm762 = vcmask 1041408
  %v763 = vsel %vm762, %v750, 0
  %765 = vmatprep.subr.mxu0 0.0
  %766 = vmatpush1.msra.mxu0 %v746
  %767 = vmatprep.subr.mxu0 0.0
  %768 = vmatpush1.msra.mxu0 %v748
  %769 = vmatprep.subr.mxu0 0.0
  %770 = vmatpush1.msra.mxu0 %v763
  %771 = vmatprep.subr.mxu0 0.0
  %772 = vmatpush1.msra.mxu0 0.0
  %773 = vmatprep.subr.mxu0 0.0
  %774 = vmatpush1.msra.mxu0 0.0
  %775 = vmatprep.subr.mxu0 0.0
  %776 = vmatpush1.msra.mxu0 0.0
  %777 = vmatprep.subr.mxu0 0.0
  %778 = vmatpush1.msra.mxu0 0.0
  %779 = vmatprep.subr.mxu0 0.0
  %780 = vmatpush1.msra.mxu0 0.0
  %781 = vmatprep.subr.mxu0 0.0
  %782 = vmatpush1.msra.mxu0 0.0
  %783 = vmatprep.subr.mxu0 0.0
  %784 = vmatpush1.msra.mxu0 0.0
  %785 = vmatprep.subr.mxu0 0.0
  %786 = vmatpush1.msra.mxu0 0.0
  %787 = vmatprep.subr.mxu0 0.0
  %788 = vmatpush1.msra.mxu0 0.0
  %789 = vmatprep.subr.mxu0 0.0
  %790 = vmatpush1.msra.mxu0 0.0
  %791 = vmatprep.subr.mxu0 0.0
  %792 = vmatpush1.msra.mxu0 0.0
  %793 = vmatprep.subr.mxu0 0.0
  %794 = vmatpush1.msra.mxu0 0.0
  %795 = vmatprep.subr.mxu0 0.0
  %796 = vmatpush1.msra.mxu0 0.0
  %797 = vmatprep.subr.mxu0 0.0
  %798 = vmatpush1.msra.mxu0 0.0
  %799 = vmatprep.subr.mxu0 0.0
  %800 = vmatpush1.msra.mxu0 0.0
  %801 = vmatprep.subr.mxu0 0.0
  %802 = vmatpush1.msra.mxu0 0.0
  %803 = vmatprep.subr.mxu0 0.0
  %804 = vmatpush1.msra.mxu0 0.0
  %805 = vmatprep.subr.mxu0 0.0
  %806 = vmatpush1.msra.mxu0 0.0
  %807 = vmatprep.subr.mxu0 0.0
  %808 = vmatpush1.msra.mxu0 0.0
  %809 = vmatprep.subr.mxu0 0.0
  %810 = vmatpush1.msra.mxu0 0.0
  %811 = vmatprep.subr.mxu0 0.0
  %812 = vmatpush1.msra.mxu0 0.0
  %813 = vmatprep.subr.mxu0 0.0
  %814 = vmatpush1.msra.mxu0 0.0
  %815 = vmatprep.subr.mxu0 0.0
  %816 = vmatpush1.msra.mxu0 0.0
  %817 = vmatprep.subr.mxu0 0.0
  %818 = vmatpush1.msra.mxu0 0.0
  %819 = vmatprep.subr.mxu0 0.0
  %820 = vmatpush1.msra.mxu0 0.0
  %821 = vmatprep.subr.mxu0 0.0
  %822 = vmatpush1.msra.mxu0 0.0
  %823 = vmatprep.subr.mxu0 0.0
  %824 = vmatpush1.msra.mxu0 0.0
  %825 = vmatprep.subr.mxu0 0.0
  %826 = vmatpush1.msra.mxu0 0.0
  %827 = vmatprep.subr.mxu0 0.0
  %828 = vmatpush1.msra.mxu0 0.0
  %829 = vmatprep.mubr.f32.mxu0 0.0
  %830 = vmatmul.mubr.f32.gmra.mrb[0].mxu0 %v754
  %v831 = vpop.f32.mrb[0].mxu0
  %v832 = vadd.f32 0.0, %v831
  %v833 = vpop.f32.mrb[0].mxu0
  %834 = vmatprep.mubr.f32.mxu0 0.0
  %835 = vmatmul.mubr.f32.gmra.mrb[0].mxu0 %v757
  %v836 = vpop.f32.mrb[0].mxu0
  %v837 = vadd.f32 0.0, %v836
  %v838 = vpop.f32.mrb[0].mxu0
  %839 = vmatprep.mubr.f32.mxu0 0.0
  %840 = vmatmul.mubr.f32.gmra.mrb[0].mxu0 %v760
  %v841 = vpop.f32.mrb[0].mxu0
  %v842 = vadd.f32 0.0, %v841
  %v843 = vpop.f32.mrb[0].mxu0
  %844 = vdwg.mxu0
  %845 = vrot.lane.b32.xlu0 %v585, 120
  %v846 = vpop.permute.xlu0 %845
  %847 = vrot.lane.b32.xlu0 %v590, 120
  %v848 = vpop.permute.xlu0 %847
  %849 = vrot.lane.b32.xlu0 %v595, 120
  %v850 = vpop.permute.xlu0 %849
  %851 = vrot.lane.b32.xlu0 %v585, 88
  %v852 = vpop.permute.xlu0 %851
  %853 = vrot.lane.b32.xlu0 %v590, 88
  %v854 = vpop.permute.xlu0 %853
  %855 = vrot.lane.b32.xlu0 %v595, 88
  %v856 = vpop.permute.xlu0 %855
  %v857 = vsel %vm611, %v846, 0
  %v859 = vsel %vm611, %v848, 0
  %v861 = vsel %vm611, %v850, 0
  %v863 = vsel %vm611, %v852, 0
  %v865 = vsel %vm611, %v854, 0
  %v867 = vsel %vm611, %v856, 0
  %869 = vmatprep.subr.mxu0 0.0
  %870 = vmatpush1.xpose.msra.mxu0 %v863
  %871 = vmatprep.subr.mxu0 0.0
  %872 = vmatpush1.xpose.msra.mxu0 %v865
  %873 = vmatprep.subr.mxu0 0.0
  %874 = vmatpush1.xpose.msra.mxu0 %v867
  %875 = vmatprep.subr.mxu0 0.0
  %876 = vmatpush1.xpose.msra.mxu0 0.0
  %877 = vmatprep.subr.mxu0 0.0
  %878 = vmatpush1.xpose.msra.mxu0 0.0
  %879 = vmatprep.subr.mxu0 0.0
  %880 = vmatpush1.xpose.msra.mxu0 0.0
  %881 = vmatprep.subr.mxu0 0.0
  %882 = vmatpush1.xpose.msra.mxu0 0.0
  %883 = vmatprep.subr.mxu0 0.0
  %884 = vmatpush1.xpose.msra.mxu0 0.0
  %885 = vmatprep.subr.mxu0 0.0
  %886 = vmatpush1.xpose.msra.mxu0 0.0
  %887 = vmatprep.subr.mxu0 0.0
  %888 = vmatpush1.xpose.msra.mxu0 0.0
  %889 = vmatprep.subr.mxu0 0.0
  %890 = vmatpush1.xpose.msra.mxu0 0.0
  %891 = vmatprep.subr.mxu0 0.0
  %892 = vmatpush1.xpose.msra.mxu0 0.0
  %893 = vmatprep.subr.mxu0 0.0
  %894 = vmatpush1.xpose.msra.mxu0 0.0
  %895 = vmatprep.subr.mxu0 0.0
  %896 = vmatpush1.xpose.msra.mxu0 0.0
  %897 = vmatprep.subr.mxu0 0.0
  %898 = vmatpush1.xpose.msra.mxu0 0.0
  %899 = vmatprep.subr.mxu0 0.0
  %900 = vmatpush1.xpose.msra.mxu0 0.0
  %901 = vmatprep.subr.mxu0 0.0
  %902 = vmatpush1.xpose.msra.mxu0 0.0
  %903 = vmatprep.subr.mxu0 0.0
  %904 = vmatpush1.xpose.msra.mxu0 0.0
  %905 = vmatprep.subr.mxu0 0.0
  %906 = vmatpush1.xpose.msra.mxu0 0.0
  %907 = vmatprep.subr.mxu0 0.0
  %908 = vmatpush1.xpose.msra.mxu0 0.0
  %909 = vmatprep.subr.mxu0 0.0
  %910 = vmatpush1.xpose.msra.mxu0 0.0
  %911 = vmatprep.subr.mxu0 0.0
  %912 = vmatpush1.xpose.msra.mxu0 0.0
  %913 = vmatprep.subr.mxu0 0.0
  %914 = vmatpush1.xpose.msra.mxu0 0.0
  %915 = vmatprep.subr.mxu0 0.0
  %916 = vmatpush1.xpose.msra.mxu0 0.0
  %917 = vmatprep.subr.mxu0 0.0
  %918 = vmatpush1.xpose.msra.mxu0 0.0
  %919 = vmatprep.subr.mxu0 0.0
  %920 = vmatpush1.xpose.msra.mxu0 0.0
  %921 = vmatprep.subr.mxu0 0.0
  %922 = vmatpush1.xpose.msra.mxu0 0.0
  %923 = vmatprep.subr.mxu0 0.0
  %924 = vmatpush1.xpose.msra.mxu0 0.0
  %925 = vmatprep.subr.mxu0 0.0
  %926 = vmatpush1.xpose.msra.mxu0 0.0
  %927 = vmatprep.subr.mxu0 0.0
  %928 = vmatpush1.xpose.msra.mxu0 0.0
  %929 = vmatprep.subr.mxu0 0.0
  %930 = vmatpush1.xpose.msra.mxu0 0.0
  %931 = vmatprep.subr.mxu0 0.0
  %932 = vmatpush1.xpose.msra.mxu0 0.0
  %933 = vmatprep.mubr.f32.mxu0 0.0
  %934 = vmatmul.mubr.f32.gmra.mrb[0].mxu0 %v857
  %v935 = vpop.f32.mrb[0].mxu0
  %v936 = vadd.f32 0.0, %v935
  %v937 = vpop.f32.mrb[0].mxu0
  %938 = vmatprep.mubr.f32.mxu0 0.0
  %939 = vmatmul.mubr.f32.gmra.mrb[0].mxu0 %v859
  %v940 = vpop.f32.mrb[0].mxu0
  %v941 = vadd.f32 0.0, %v940
  %v942 = vpop.f32.mrb[0].mxu0
  %943 = vmatprep.mubr.f32.mxu0 0.0
  %944 = vmatmul.mubr.f32.gmra.mrb[0].mxu0 %v861
  %v945 = vpop.f32.mrb[0].mxu0
  %v946 = vadd.f32 0.0, %v945
  %v947 = vpop.f32.mrb[0].mxu0
  %948 = vdwg.mxu0
  %v949 = vmul.f32 %v936, 0.35355338
  %v950 = vmul.f32 %v941, 0.35355338
  %v951 = vmul.f32 %v946, 0.35355338
  %v952 = vadd.f32 %v949, %v455
  %v953 = vadd.f32 %v950, %v456
  %v954 = vadd.f32 %v951, %v457
  %v955 = vsel %vm710, %v952, -inf
  %956 = vmax.xlane.f32.xlu0 %v955
  %v957 = vpop.xlane.xlu0 %956
  %v958 = vsel %vm710, %v953, -inf
  %959 = vmax.xlane.f32.xlu0 %v958
  %v960 = vpop.xlane.xlu0 %959
  %v961 = vsel %vm717, %v954, -inf
  %962 = vmax.xlane.f32.xlu0 %v961
  %v963 = vpop.xlane.xlu0 %962
  %v964 = vsub.f32 %v952, %v957
  %v965 = vsub.f32 %v953, %v960
  %v966 = vsub.f32 %v954, %v963
  %v967 = vmul.f32 %v964, 1.442695
  %v968 = vpow.pop %v967
  %v969 = vmul.f32 %v965, 1.442695
  %v970 = vpow.pop %v969
  %v971 = vmul.f32 %v966, 1.442695
  %v972 = vpow.pop %v971
  %v973 = vsel %vm710, %v968, 0.0
  %974 = vadd.xlane.f32.xlu0 %v973
  %v975 = vpop.xlane.xlu0 %974
  %v976 = vsel %vm710, %v970, 0.0
  %977 = vadd.xlane.f32.xlu0 %v976
  %v978 = vpop.xlane.xlu0 %977
  %v979 = vsel %vm717, %v972, 0.0
  %980 = vadd.xlane.f32.xlu0 %v979
  %v981 = vpop.xlane.xlu0 %980
  %v982 = vrcp.pop %v975
  %v983 = vrcp.pop %v978
  %v984 = vrcp.pop %v981
  %v985 = vmul.f32 %v968, %v982
  %v986 = vmul.f32 %v970, %v983
  %v987 = vmul.f32 %v972, %v984
  %988 = vrot.lane.b32.xlu0 %v585, 56
  %v989 = vpop.permute.xlu0 %988
  %990 = vrot.lane.b32.xlu0 %v590, 56
  %v991 = vpop.permute.xlu0 %990
  %992 = vrot.lane.b32.xlu0 %v595, 56
  %v993 = vpop.permute.xlu0 %992
  %v997 = vsel %vm710, %v985, 0
  %v1000 = vsel %vm710, %v986, 0
  %v1003 = vsel %vm710, %v987, 0
  %v1005 = vsel %vm762, %v993, 0
  %1007 = vmatprep.subr.mxu0 0.0
  %1008 = vmatpush1.msra.mxu0 %v989
  %1009 = vmatprep.subr.mxu0 0.0
  %1010 = vmatpush1.msra.mxu0 %v991
  %1011 = vmatprep.subr.mxu0 0.0
  %1012 = vmatpush1.msra.mxu0 %v1005
  %1013 = vmatprep.subr.mxu0 0.0
  %1014 = vmatpush1.msra.mxu0 0.0
  %1015 = vmatprep.subr.mxu0 0.0
  %1016 = vmatpush1.msra.mxu0 0.0
  %1017 = vmatprep.subr.mxu0 0.0
  %1018 = vmatpush1.msra.mxu0 0.0
  %1019 = vmatprep.subr.mxu0 0.0
  %1020 = vmatpush1.msra.mxu0 0.0
  %1021 = vmatprep.subr.mxu0 0.0
  %1022 = vmatpush1.msra.mxu0 0.0
  %1023 = vmatprep.subr.mxu0 0.0
  %1024 = vmatpush1.msra.mxu0 0.0
  %1025 = vmatprep.subr.mxu0 0.0
  %1026 = vmatpush1.msra.mxu0 0.0
  %1027 = vmatprep.subr.mxu0 0.0
  %1028 = vmatpush1.msra.mxu0 0.0
  %1029 = vmatprep.subr.mxu0 0.0
  %1030 = vmatpush1.msra.mxu0 0.0
  %1031 = vmatprep.subr.mxu0 0.0
  %1032 = vmatpush1.msra.mxu0 0.0
  %1033 = vmatprep.subr.mxu0 0.0
  %1034 = vmatpush1.msra.mxu0 0.0
  %1035 = vmatprep.subr.mxu0 0.0
  %1036 = vmatpush1.msra.mxu0 0.0
  %1037 = vmatprep.subr.mxu0 0.0
  %1038 = vmatpush1.msra.mxu0 0.0
  %1039 = vmatprep.subr.mxu0 0.0
  %1040 = vmatpush1.msra.mxu0 0.0
  %1041 = vmatprep.subr.mxu0 0.0
  %1042 = vmatpush1.msra.mxu0 0.0
  %1043 = vmatprep.subr.mxu0 0.0
  %1044 = vmatpush1.msra.mxu0 0.0
  %1045 = vmatprep.subr.mxu0 0.0
  %1046 = vmatpush1.msra.mxu0 0.0
  %1047 = vmatprep.subr.mxu0 0.0
  %1048 = vmatpush1.msra.mxu0 0.0
  %1049 = vmatprep.subr.mxu0 0.0
  %1050 = vmatpush1.msra.mxu0 0.0
  %1051 = vmatprep.subr.mxu0 0.0
  %1052 = vmatpush1.msra.mxu0 0.0
  %1053 = vmatprep.subr.mxu0 0.0
  %1054 = vmatpush1.msra.mxu0 0.0
  %1055 = vmatprep.subr.mxu0 0.0
  %1056 = vmatpush1.msra.mxu0 0.0
  %1057 = vmatprep.subr.mxu0 0.0
  %1058 = vmatpush1.msra.mxu0 0.0
  %1059 = vmatprep.subr.mxu0 0.0
  %1060 = vmatpush1.msra.mxu0 0.0
  %1061 = vmatprep.subr.mxu0 0.0
  %1062 = vmatpush1.msra.mxu0 0.0
  %1063 = vmatprep.subr.mxu0 0.0
  %1064 = vmatpush1.msra.mxu0 0.0
  %1065 = vmatprep.subr.mxu0 0.0
  %1066 = vmatpush1.msra.mxu0 0.0
  %1067 = vmatprep.subr.mxu0 0.0
  %1068 = vmatpush1.msra.mxu0 0.0
  %1069 = vmatprep.subr.mxu0 0.0
  %1070 = vmatpush1.msra.mxu0 0.0
  %1071 = vmatprep.mubr.f32.mxu0 0.0
  %1072 = vmatmul.mubr.f32.gmra.mrb[0].mxu0 %v997
  %v1073 = vpop.f32.mrb[0].mxu0
  %v1074 = vadd.f32 0.0, %v1073
  %v1075 = vpop.f32.mrb[0].mxu0
  %1076 = vmatprep.mubr.f32.mxu0 0.0
  %1077 = vmatmul.mubr.f32.gmra.mrb[0].mxu0 %v1000
  %v1078 = vpop.f32.mrb[0].mxu0
  %v1079 = vadd.f32 0.0, %v1078
  %v1080 = vpop.f32.mrb[0].mxu0
  %1081 = vmatprep.mubr.f32.mxu0 0.0
  %1082 = vmatmul.mubr.f32.gmra.mrb[0].mxu0 %v1003
  %v1083 = vpop.f32.mrb[0].mxu0
  %v1084 = vadd.f32 0.0, %v1083
  %v1085 = vpop.f32.mrb[0].mxu0
  %1086 = vdwg.mxu0
  %v1088 = vsel %vm611, %v1074, 0
  %v1091 = vsel %vm611, %v1079, 0
  %v1094 = vsel %vm611, %v1084, 0
  %1096 = vmatprep.subr.mxu0 0.0
  %1097 = vmatpush1.msra.mxu0 %v599
  %1098 = vmatprep.subr.mxu0 0.0
  %1099 = vmatpush1.msra.mxu0 0.0
  %1100 = vmatprep.subr.mxu0 0.0
  %1101 = vmatpush1.msra.mxu0 0.0
  %1102 = vmatprep.subr.mxu0 0.0
  %1103 = vmatpush1.msra.mxu0 0.0
  %1104 = vmatprep.subr.mxu0 0.0
  %1105 = vmatpush1.msra.mxu0 0.0
  %1106 = vmatprep.subr.mxu0 0.0
  %1107 = vmatpush1.msra.mxu0 0.0
  %1108 = vmatprep.subr.mxu0 0.0
  %1109 = vmatpush1.msra.mxu0 0.0
  %1110 = vmatprep.subr.mxu0 0.0
  %1111 = vmatpush1.msra.mxu0 0.0
  %1112 = vmatprep.subr.mxu0 0.0
  %1113 = vmatpush1.msra.mxu0 0.0
  %1114 = vmatprep.subr.mxu0 0.0
  %1115 = vmatpush1.msra.mxu0 0.0
  %1116 = vmatprep.subr.mxu0 0.0
  %1117 = vmatpush1.msra.mxu0 0.0
  %1118 = vmatprep.subr.mxu0 0.0
  %1119 = vmatpush1.msra.mxu0 0.0
  %1120 = vmatprep.subr.mxu0 0.0
  %1121 = vmatpush1.msra.mxu0 0.0
  %1122 = vmatprep.subr.mxu0 0.0
  %1123 = vmatpush1.msra.mxu0 0.0
  %1124 = vmatprep.subr.mxu0 0.0
  %1125 = vmatpush1.msra.mxu0 0.0
  %1126 = vmatprep.subr.mxu0 0.0
  %1127 = vmatpush1.msra.mxu0 0.0
  %1128 = vmatprep.subr.mxu0 0.0
  %1129 = vmatpush1.msra.mxu0 0.0
  %1130 = vmatprep.subr.mxu0 0.0
  %1131 = vmatpush1.msra.mxu0 0.0
  %1132 = vmatprep.subr.mxu0 0.0
  %1133 = vmatpush1.msra.mxu0 0.0
  %1134 = vmatprep.subr.mxu0 0.0
  %1135 = vmatpush1.msra.mxu0 0.0
  %1136 = vmatprep.subr.mxu0 0.0
  %1137 = vmatpush1.msra.mxu0 0.0
  %1138 = vmatprep.subr.mxu0 0.0
  %1139 = vmatpush1.msra.mxu0 0.0
  %1140 = vmatprep.subr.mxu0 0.0
  %1141 = vmatpush1.msra.mxu0 0.0
  %1142 = vmatprep.subr.mxu0 0.0
  %1143 = vmatpush1.msra.mxu0 0.0
  %1144 = vmatprep.subr.mxu0 0.0
  %1145 = vmatpush1.msra.mxu0 0.0
  %1146 = vmatprep.subr.mxu0 0.0
  %1147 = vmatpush1.msra.mxu0 0.0
  %1148 = vmatprep.subr.mxu0 0.0
  %1149 = vmatpush1.msra.mxu0 0.0
  %1150 = vmatprep.subr.mxu0 0.0
  %1151 = vmatpush1.msra.mxu0 0.0
  %1152 = vmatprep.subr.mxu0 0.0
  %1153 = vmatpush1.msra.mxu0 0.0
  %1154 = vmatprep.subr.mxu0 0.0
  %1155 = vmatpush1.msra.mxu0 0.0
  %1156 = vmatprep.subr.mxu0 0.0
  %1157 = vmatpush1.msra.mxu0 0.0
  %1158 = vmatprep.subr.mxu0 0.0
  %1159 = vmatpush1.msra.mxu0 0.0
  %1160 = vmatprep.mubr.f32.mxu0 0.0
  %1161 = vmatmul.mubr.f32.gmra.mrb[0].mxu0 %v1088
  %v1162 = vpop.f32.mrb[0].mxu0
  %v1163 = vadd.f32 0.0, %v1162
  %v1164 = vpop.f32.mrb[0].mxu0
  %1165 = vmatprep.mubr.f32.mxu0 0.0
  %1166 = vmatmul.mubr.f32.gmra.mrb[0].mxu0 %v1091
  %v1167 = vpop.f32.mrb[0].mxu0
  %v1168 = vadd.f32 0.0, %v1167
  %v1169 = vpop.f32.mrb[0].mxu0
  %1170 = vmatprep.mubr.f32.mxu0 0.0
  %1171 = vmatmul.mubr.f32.gmra.mrb[0].mxu0 %v1094
  %v1172 = vpop.f32.mrb[0].mxu0
  %v1173 = vadd.f32 0.0, %v1172
  %v1174 = vpop.f32.mrb[0].mxu0
  %1175 = vdwg.mxu0
  %v1177 = vsel %vm611, %v832, 0
  %v1180 = vsel %vm611, %v837, 0
  %v1183 = vsel %vm611, %v842, 0
  %1185 = vmatprep.subr.mxu0 0.0
  %1186 = vmatpush1.msra.mxu0 %v598
  %1187 = vmatprep.subr.mxu0 0.0
  %1188 = vmatpush1.msra.mxu0 0.0
  %1189 = vmatprep.subr.mxu0 0.0
  %1190 = vmatpush1.msra.mxu0 0.0
  %1191 = vmatprep.subr.mxu0 0.0
  %1192 = vmatpush1.msra.mxu0 0.0
  %1193 = vmatprep.subr.mxu0 0.0
  %1194 = vmatpush1.msra.mxu0 0.0
  %1195 = vmatprep.subr.mxu0 0.0
  %1196 = vmatpush1.msra.mxu0 0.0
  %1197 = vmatprep.subr.mxu0 0.0
  %1198 = vmatpush1.msra.mxu0 0.0
  %1199 = vmatprep.subr.mxu0 0.0
  %1200 = vmatpush1.msra.mxu0 0.0
  %1201 = vmatprep.subr.mxu0 0.0
  %1202 = vmatpush1.msra.mxu0 0.0
  %1203 = vmatprep.subr.mxu0 0.0
  %1204 = vmatpush1.msra.mxu0 0.0
  %1205 = vmatprep.subr.mxu0 0.0
  %1206 = vmatpush1.msra.mxu0 0.0
  %1207 = vmatprep.subr.mxu0 0.0
  %1208 = vmatpush1.msra.mxu0 0.0
  %1209 = vmatprep.subr.mxu0 0.0
  %1210 = vmatpush1.msra.mxu0 0.0
  %1211 = vmatprep.subr.mxu0 0.0
  %1212 = vmatpush1.msra.mxu0 0.0
  %1213 = vmatprep.subr.mxu0 0.0
  %1214 = vmatpush1.msra.mxu0 0.0
  %1215 = vmatprep.subr.mxu0 0.0
  %1216 = vmatpush1.msra.mxu0 0.0
  %1217 = vmatprep.subr.mxu0 0.0
  %1218 = vmatpush1.msra.mxu0 0.0
  %1219 = vmatprep.subr.mxu0 0.0
  %1220 = vmatpush1.msra.mxu0 0.0
  %1221 = vmatprep.subr.mxu0 0.0
  %1222 = vmatpush1.msra.mxu0 0.0
  %1223 = vmatprep.subr.mxu0 0.0
  %1224 = vmatpush1.msra.mxu0 0.0
  %1225 = vmatprep.subr.mxu0 0.0
  %1226 = vmatpush1.msra.mxu0 0.0
  %1227 = vmatprep.subr.mxu0 0.0
  %1228 = vmatpush1.msra.mxu0 0.0
  %1229 = vmatprep.subr.mxu0 0.0
  %1230 = vmatpush1.msra.mxu0 0.0
  %1231 = vmatprep.subr.mxu0 0.0
  %1232 = vmatpush1.msra.mxu0 0.0
  %1233 = vmatprep.subr.mxu0 0.0
  %1234 = vmatpush1.msra.mxu0 0.0
  %1235 = vmatprep.subr.mxu0 0.0
  %1236 = vmatpush1.msra.mxu0 0.0
  %1237 = vmatprep.subr.mxu0 0.0
  %1238 = vmatpush1.msra.mxu0 0.0
  %1239 = vmatprep.subr.mxu0 0.0
  %1240 = vmatpush1.msra.mxu0 0.0
  %1241 = vmatprep.subr.mxu0 0.0
  %1242 = vmatpush1.msra.mxu0 0.0
  %1243 = vmatprep.subr.mxu0 0.0
  %1244 = vmatpush1.msra.mxu0 0.0
  %1245 = vmatprep.subr.mxu0 0.0
  %1246 = vmatpush1.msra.mxu0 0.0
  %1247 = vmatprep.subr.mxu0 0.0
  %1248 = vmatpush1.msra.mxu0 0.0
  %1249 = vmatprep.mubr.f32.mxu0 0.0
  %1250 = vmatmul.mubr.f32.gmra.mrb[0].mxu0 %v1177
  %v1251 = vpop.f32.mrb[0].mxu0
  %v1252 = vadd.f32 %v1163, %v1251
  %v1253 = vpop.f32.mrb[0].mxu0
  %1254 = vmatprep.mubr.f32.mxu0 0.0
  %1255 = vmatmul.mubr.f32.gmra.mrb[0].mxu0 %v1180
  %v1256 = vpop.f32.mrb[0].mxu0
  %v1257 = vadd.f32 %v1168, %v1256
  %v1258 = vpop.f32.mrb[0].mxu0
  %1259 = vmatprep.mubr.f32.mxu0 0.0
  %1260 = vmatmul.mubr.f32.gmra.mrb[0].mxu0 %v1183
  %v1261 = vpop.f32.mrb[0].mxu0
  %v1262 = vadd.f32 %v1173, %v1261
  %v1263 = vpop.f32.mrb[0].mxu0
  %1264 = vdwg.mxu0
  %1265 = vrot.lane.b32.xlu0 %v585, 112
  %v1266 = vpop.permute.xlu0 %1265
  %1267 = vrot.lane.b32.xlu0 %v590, 112
  %v1268 = vpop.permute.xlu0 %1267
  %1269 = vrot.lane.b32.xlu0 %v595, 112
  %v1270 = vpop.permute.xlu0 %1269
  %1271 = vrot.lane.b32.xlu0 %v585, 80
  %v1272 = vpop.permute.xlu0 %1271
  %1273 = vrot.lane.b32.xlu0 %v590, 80
  %v1274 = vpop.permute.xlu0 %1273
  %1275 = vrot.lane.b32.xlu0 %v595, 80
  %v1276 = vpop.permute.xlu0 %1275
  %v1277 = vsel %vm611, %v1266, 0
  %v1279 = vsel %vm611, %v1268, 0
  %v1281 = vsel %vm611, %v1270, 0
  %v1283 = vsel %vm611, %v1272, 0
  %v1285 = vsel %vm611, %v1274, 0
  %v1287 = vsel %vm611, %v1276, 0
  %1289 = vmatprep.subr.mxu0 0.0
  %1290 = vmatpush1.xpose.msra.mxu0 %v1283
  %1291 = vmatprep.subr.mxu0 0.0
  %1292 = vmatpush1.xpose.msra.mxu0 %v1285
  %1293 = vmatprep.subr.mxu0 0.0
  %1294 = vmatpush1.xpose.msra.mxu0 %v1287
  %1295 = vmatprep.subr.mxu0 0.0
  %1296 = vmatpush1.xpose.msra.mxu0 0.0
  %1297 = vmatprep.subr.mxu0 0.0
  %1298 = vmatpush1.xpose.msra.mxu0 0.0
  %1299 = vmatprep.subr.mxu0 0.0
  %1300 = vmatpush1.xpose.msra.mxu0 0.0
  %1301 = vmatprep.subr.mxu0 0.0
  %1302 = vmatpush1.xpose.msra.mxu0 0.0
  %1303 = vmatprep.subr.mxu0 0.0
  %1304 = vmatpush1.xpose.msra.mxu0 0.0
  %1305 = vmatprep.subr.mxu0 0.0
  %1306 = vmatpush1.xpose.msra.mxu0 0.0
  %1307 = vmatprep.subr.mxu0 0.0
  %1308 = vmatpush1.xpose.msra.mxu0 0.0
  %1309 = vmatprep.subr.mxu0 0.0
  %1310 = vmatpush1.xpose.msra.mxu0 0.0
  %1311 = vmatprep.subr.mxu0 0.0
  %1312 = vmatpush1.xpose.msra.mxu0 0.0
  %1313 = vmatprep.subr.mxu0 0.0
  %1314 = vmatpush1.xpose.msra.mxu0 0.0
  %1315 = vmatprep.subr.mxu0 0.0
  %1316 = vmatpush1.xpose.msra.mxu0 0.0
  %1317 = vmatprep.subr.mxu0 0.0
  %1318 = vmatpush1.xpose.msra.mxu0 0.0
  %1319 = vmatprep.subr.mxu0 0.0
  %1320 = vmatpush1.xpose.msra.mxu0 0.0
  %1321 = vmatprep.subr.mxu0 0.0
  %1322 = vmatpush1.xpose.msra.mxu0 0.0
  %1323 = vmatprep.subr.mxu0 0.0
  %1324 = vmatpush1.xpose.msra.mxu0 0.0
  %1325 = vmatprep.subr.mxu0 0.0
  %1326 = vmatpush1.xpose.msra.mxu0 0.0
  %1327 = vmatprep.subr.mxu0 0.0
  %1328 = vmatpush1.xpose.msra.mxu0 0.0
  %1329 = vmatprep.subr.mxu0 0.0
  %1330 = vmatpush1.xpose.msra.mxu0 0.0
  %1331 = vmatprep.subr.mxu0 0.0
  %1332 = vmatpush1.xpose.msra.mxu0 0.0
  %1333 = vmatprep.subr.mxu0 0.0
  %1334 = vmatpush1.xpose.msra.mxu0 0.0
  %1335 = vmatprep.subr.mxu0 0.0
  %1336 = vmatpush1.xpose.msra.mxu0 0.0
  %1337 = vmatprep.subr.mxu0 0.0
  %1338 = vmatpush1.xpose.msra.mxu0 0.0
  %1339 = vmatprep.subr.mxu0 0.0
  %1340 = vmatpush1.xpose.msra.mxu0 0.0
  %1341 = vmatprep.subr.mxu0 0.0
  %1342 = vmatpush1.xpose.msra.mxu0 0.0
  %1343 = vmatprep.subr.mxu0 0.0
  %1344 = vmatpush1.xpose.msra.mxu0 0.0
  %1345 = vmatprep.subr.mxu0 0.0
  %1346 = vmatpush1.xpose.msra.mxu0 0.0
  %1347 = vmatprep.subr.mxu0 0.0
  %1348 = vmatpush1.xpose.msra.mxu0 0.0
  %1349 = vmatprep.subr.mxu0 0.0
  %1350 = vmatpush1.xpose.msra.mxu0 0.0
  %1351 = vmatprep.subr.mxu0 0.0
  %1352 = vmatpush1.xpose.msra.mxu0 0.0
  %1353 = vmatprep.mubr.f32.mxu0 0.0
  %1354 = vmatmul.mubr.f32.gmra.mrb[0].mxu0 %v1277
  %v1355 = vpop.f32.mrb[0].mxu0
  %v1356 = vadd.f32 0.0, %v1355
  %v1357 = vpop.f32.mrb[0].mxu0
  %1358 = vmatprep.mubr.f32.mxu0 0.0
  %1359 = vmatmul.mubr.f32.gmra.mrb[0].mxu0 %v1279
  %v1360 = vpop.f32.mrb[0].mxu0
  %v1361 = vadd.f32 0.0, %v1360
  %v1362 = vpop.f32.mrb[0].mxu0
  %1363 = vmatprep.mubr.f32.mxu0 0.0
  %1364 = vmatmul.mubr.f32.gmra.mrb[0].mxu0 %v1281
  %v1365 = vpop.f32.mrb[0].mxu0
  %v1366 = vadd.f32 0.0, %v1365
  %v1367 = vpop.f32.mrb[0].mxu0
  %1368 = vdwg.mxu0
  %v1369 = vmul.f32 %v1356, 0.35355338
  %v1370 = vmul.f32 %v1361, 0.35355338
  %v1371 = vmul.f32 %v1366, 0.35355338
  %v1372 = vadd.f32 %v1369, %v455
  %v1373 = vadd.f32 %v1370, %v456
  %v1374 = vadd.f32 %v1371, %v457
  %v1375 = vsel %vm710, %v1372, -inf
  %1376 = vmax.xlane.f32.xlu0 %v1375
  %v1377 = vpop.xlane.xlu0 %1376
  %v1378 = vsel %vm710, %v1373, -inf
  %1379 = vmax.xlane.f32.xlu0 %v1378
  %v1380 = vpop.xlane.xlu0 %1379
  %v1381 = vsel %vm717, %v1374, -inf
  %1382 = vmax.xlane.f32.xlu0 %v1381
  %v1383 = vpop.xlane.xlu0 %1382
  %v1384 = vsub.f32 %v1372, %v1377
  %v1385 = vsub.f32 %v1373, %v1380
  %v1386 = vsub.f32 %v1374, %v1383
  %v1387 = vmul.f32 %v1384, 1.442695
  %v1388 = vpow.pop %v1387
  %v1389 = vmul.f32 %v1385, 1.442695
  %v1390 = vpow.pop %v1389
  %v1391 = vmul.f32 %v1386, 1.442695
  %v1392 = vpow.pop %v1391
  %v1393 = vsel %vm710, %v1388, 0.0
  %1394 = vadd.xlane.f32.xlu0 %v1393
  %v1395 = vpop.xlane.xlu0 %1394
  %v1396 = vsel %vm710, %v1390, 0.0
  %1397 = vadd.xlane.f32.xlu0 %v1396
  %v1398 = vpop.xlane.xlu0 %1397
  %v1399 = vsel %vm717, %v1392, 0.0
  %1400 = vadd.xlane.f32.xlu0 %v1399
  %v1401 = vpop.xlane.xlu0 %1400
  %v1402 = vrcp.pop %v1395
  %v1403 = vrcp.pop %v1398
  %v1404 = vrcp.pop %v1401
  %v1405 = vmul.f32 %v1388, %v1402
  %v1406 = vmul.f32 %v1390, %v1403
  %v1407 = vmul.f32 %v1392, %v1404
  %1408 = vrot.lane.b32.xlu0 %v585, 48
  %v1409 = vpop.permute.xlu0 %1408
  %1410 = vrot.lane.b32.xlu0 %v590, 48
  %v1411 = vpop.permute.xlu0 %1410
  %1412 = vrot.lane.b32.xlu0 %v595, 48
  %v1413 = vpop.permute.xlu0 %1412
  %v1417 = vsel %vm710, %v1405, 0
  %v1420 = vsel %vm710, %v1406, 0
  %v1423 = vsel %vm710, %v1407, 0
  %v1425 = vsel %vm762, %v1413, 0
  %1427 = vmatprep.subr.mxu0 0.0
  %1428 = vmatpush1.msra.mxu0 %v1409
  %1429 = vmatprep.subr.mxu0 0.0
  %1430 = vmatpush1.msra.mxu0 %v1411
  %1431 = vmatprep.subr.mxu0 0.0
  %1432 = vmatpush1.msra.mxu0 %v1425
  %1433 = vmatprep.subr.mxu0 0.0
  %1434 = vmatpush1.msra.mxu0 0.0
  %1435 = vmatprep.subr.mxu0 0.0
  %1436 = vmatpush1.msra.mxu0 0.0
  %1437 = vmatprep.subr.mxu0 0.0
  %1438 = vmatpush1.msra.mxu0 0.0
  %1439 = vmatprep.subr.mxu0 0.0
  %1440 = vmatpush1.msra.mxu0 0.0
  %1441 = vmatprep.subr.mxu0 0.0
  %1442 = vmatpush1.msra.mxu0 0.0
  %1443 = vmatprep.subr.mxu0 0.0
  %1444 = vmatpush1.msra.mxu0 0.0
  %1445 = vmatprep.subr.mxu0 0.0
  %1446 = vmatpush1.msra.mxu0 0.0
  %1447 = vmatprep.subr.mxu0 0.0
  %1448 = vmatpush1.msra.mxu0 0.0
  %1449 = vmatprep.subr.mxu0 0.0
  %1450 = vmatpush1.msra.mxu0 0.0
  %1451 = vmatprep.subr.mxu0 0.0
  %1452 = vmatpush1.msra.mxu0 0.0
  %1453 = vmatprep.subr.mxu0 0.0
  %1454 = vmatpush1.msra.mxu0 0.0
  %1455 = vmatprep.subr.mxu0 0.0
  %1456 = vmatpush1.msra.mxu0 0.0
  %1457 = vmatprep.subr.mxu0 0.0
  %1458 = vmatpush1.msra.mxu0 0.0
  %1459 = vmatprep.subr.mxu0 0.0
  %1460 = vmatpush1.msra.mxu0 0.0
  %1461 = vmatprep.subr.mxu0 0.0
  %1462 = vmatpush1.msra.mxu0 0.0
  %1463 = vmatprep.subr.mxu0 0.0
  %1464 = vmatpush1.msra.mxu0 0.0
  %1465 = vmatprep.subr.mxu0 0.0
  %1466 = vmatpush1.msra.mxu0 0.0
  %1467 = vmatprep.subr.mxu0 0.0
  %1468 = vmatpush1.msra.mxu0 0.0
  %1469 = vmatprep.subr.mxu0 0.0
  %1470 = vmatpush1.msra.mxu0 0.0
  %1471 = vmatprep.subr.mxu0 0.0
  %1472 = vmatpush1.msra.mxu0 0.0
  %1473 = vmatprep.subr.mxu0 0.0
  %1474 = vmatpush1.msra.mxu0 0.0
  %1475 = vmatprep.subr.mxu0 0.0
  %1476 = vmatpush1.msra.mxu0 0.0
  %1477 = vmatprep.subr.mxu0 0.0
  %1478 = vmatpush1.msra.mxu0 0.0
  %1479 = vmatprep.subr.mxu0 0.0
  %1480 = vmatpush1.msra.mxu0 0.0
  %1481 = vmatprep.subr.mxu0 0.0
  %1482 = vmatpush1.msra.mxu0 0.0
  %1483 = vmatprep.subr.mxu0 0.0
  %1484 = vmatpush1.msra.mxu0 0.0
  %1485 = vmatprep.subr.mxu0 0.0
  %1486 = vmatpush1.msra.mxu0 0.0
  %1487 = vmatprep.subr.mxu0 0.0
  %1488 = vmatpush1.msra.mxu0 0.0
  %1489 = vmatprep.subr.mxu0 0.0
  %1490 = vmatpush1.msra.mxu0 0.0
  %1491 = vmatprep.mubr.f32.mxu0 0.0
  %1492 = vmatmul.mubr.f32.gmra.mrb[0].mxu0 %v1417
  %v1493 = vpop.f32.mrb[0].mxu0
  %v1494 = vadd.f32 0.0, %v1493
  %v1495 = vpop.f32.mrb[0].mxu0
  %1496 = vmatprep.mubr.f32.mxu0 0.0
  %1497 = vmatmul.mubr.f32.gmra.mrb[0].mxu0 %v1420
  %v1498 = vpop.f32.mrb[0].mxu0
  %v1499 = vadd.f32 0.0, %v1498
  %v1500 = vpop.f32.mrb[0].mxu0
  %1501 = vmatprep.mubr.f32.mxu0 0.0
  %1502 = vmatmul.mubr.f32.gmra.mrb[0].mxu0 %v1423
  %v1503 = vpop.f32.mrb[0].mxu0
  %v1504 = vadd.f32 0.0, %v1503
  %v1505 = vpop.f32.mrb[0].mxu0
  %1506 = vdwg.mxu0
  %v1508 = vsel %vm611, %v1494, 0
  %v1511 = vsel %vm611, %v1499, 0
  %v1514 = vsel %vm611, %v1504, 0
  %1516 = vmatprep.subr.mxu0 0.0
  %1517 = vmatpush1.msra.mxu0 %v600
  %1518 = vmatprep.subr.mxu0 0.0
  %1519 = vmatpush1.msra.mxu0 0.0
  %1520 = vmatprep.subr.mxu0 0.0
  %1521 = vmatpush1.msra.mxu0 0.0
  %1522 = vmatprep.subr.mxu0 0.0
  %1523 = vmatpush1.msra.mxu0 0.0
  %1524 = vmatprep.subr.mxu0 0.0
  %1525 = vmatpush1.msra.mxu0 0.0
  %1526 = vmatprep.subr.mxu0 0.0
  %1527 = vmatpush1.msra.mxu0 0.0
  %1528 = vmatprep.subr.mxu0 0.0
  %1529 = vmatpush1.msra.mxu0 0.0
  %1530 = vmatprep.subr.mxu0 0.0
  %1531 = vmatpush1.msra.mxu0 0.0
  %1532 = vmatprep.subr.mxu0 0.0
  %1533 = vmatpush1.msra.mxu0 0.0
  %1534 = vmatprep.subr.mxu0 0.0
  %1535 = vmatpush1.msra.mxu0 0.0
  %1536 = vmatprep.subr.mxu0 0.0
  %1537 = vmatpush1.msra.mxu0 0.0
  %1538 = vmatprep.subr.mxu0 0.0
  %1539 = vmatpush1.msra.mxu0 0.0
  %1540 = vmatprep.subr.mxu0 0.0
  %1541 = vmatpush1.msra.mxu0 0.0
  %1542 = vmatprep.subr.mxu0 0.0
  %1543 = vmatpush1.msra.mxu0 0.0
  %1544 = vmatprep.subr.mxu0 0.0
  %1545 = vmatpush1.msra.mxu0 0.0
  %1546 = vmatprep.subr.mxu0 0.0
  %1547 = vmatpush1.msra.mxu0 0.0
  %1548 = vmatprep.subr.mxu0 0.0
  %1549 = vmatpush1.msra.mxu0 0.0
  %1550 = vmatprep.subr.mxu0 0.0
  %1551 = vmatpush1.msra.mxu0 0.0
  %1552 = vmatprep.subr.mxu0 0.0
  %1553 = vmatpush1.msra.mxu0 0.0
  %1554 = vmatprep.subr.mxu0 0.0
  %1555 = vmatpush1.msra.mxu0 0.0
  %1556 = vmatprep.subr.mxu0 0.0
  %1557 = vmatpush1.msra.mxu0 0.0
  %1558 = vmatprep.subr.mxu0 0.0
  %1559 = vmatpush1.msra.mxu0 0.0
  %1560 = vmatprep.subr.mxu0 0.0
  %1561 = vmatpush1.msra.mxu0 0.0
  %1562 = vmatprep.subr.mxu0 0.0
  %1563 = vmatpush1.msra.mxu0 0.0
  %1564 = vmatprep.subr.mxu0 0.0
  %1565 = vmatpush1.msra.mxu0 0.0
  %1566 = vmatprep.subr.mxu0 0.0
  %1567 = vmatpush1.msra.mxu0 0.0
  %1568 = vmatprep.subr.mxu0 0.0
  %1569 = vmatpush1.msra.mxu0 0.0
  %1570 = vmatprep.subr.mxu0 0.0
  %1571 = vmatpush1.msra.mxu0 0.0
  %1572 = vmatprep.subr.mxu0 0.0
  %1573 = vmatpush1.msra.mxu0 0.0
  %1574 = vmatprep.subr.mxu0 0.0
  %1575 = vmatpush1.msra.mxu0 0.0
  %1576 = vmatprep.subr.mxu0 0.0
  %1577 = vmatpush1.msra.mxu0 0.0
  %1578 = vmatprep.subr.mxu0 0.0
  %1579 = vmatpush1.msra.mxu0 0.0
  %1580 = vmatprep.mubr.f32.mxu0 0.0
  %1581 = vmatmul.mubr.f32.gmra.mrb[0].mxu0 %v1508
  %v1582 = vpop.f32.mrb[0].mxu0
  %v1583 = vadd.f32 0.0, %v1582
  %v1584 = vpop.f32.mrb[0].mxu0
  %1585 = vmatprep.mubr.f32.mxu0 0.0
  %1586 = vmatmul.mubr.f32.gmra.mrb[0].mxu0 %v1511
  %v1587 = vpop.f32.mrb[0].mxu0
  %v1588 = vadd.f32 0.0, %v1587
  %v1589 = vpop.f32.mrb[0].mxu0
  %1590 = vmatprep.mubr.f32.mxu0 0.0
  %1591 = vmatmul.mubr.f32.gmra.mrb[0].mxu0 %v1514
  %v1592 = vpop.f32.mrb[0].mxu0
  %v1593 = vadd.f32 0.0, %v1592
  %v1594 = vpop.f32.mrb[0].mxu0
  %1595 = vdwg.mxu0
  %v1596 = vadd.f32 %v1252, %v1583
  %v1597 = vadd.f32 %v1257, %v1588
  %v1598 = vadd.f32 %v1262, %v1593
  %1599 = vrot.lane.b32.xlu0 %v585, 104
  %v1600 = vpop.permute.xlu0 %1599
  %1601 = vrot.lane.b32.xlu0 %v590, 104
  %v1602 = vpop.permute.xlu0 %1601
  %1603 = vrot.lane.b32.xlu0 %v595, 104
  %v1604 = vpop.permute.xlu0 %1603
  %1605 = vrot.lane.b32.xlu0 %v585, 72
  %v1606 = vpop.permute.xlu0 %1605
  %1607 = vrot.lane.b32.xlu0 %v590, 72
  %v1608 = vpop.permute.xlu0 %1607
  %1609 = vrot.lane.b32.xlu0 %v595, 72
  %v1610 = vpop.permute.xlu0 %1609
  %v1611 = vsel %vm611, %v1600, 0
  %v1613 = vsel %vm611, %v1602, 0
  %v1615 = vsel %vm611, %v1604, 0
  %v1617 = vsel %vm611, %v1606, 0
  %v1619 = vsel %vm611, %v1608, 0
  %v1621 = vsel %vm611, %v1610, 0
  %1623 = vmatprep.subr.mxu0 0.0
  %1624 = vmatpush1.xpose.msra.mxu0 %v1617
  %1625 = vmatprep.subr.mxu0 0.0
  %1626 = vmatpush1.xpose.msra.mxu0 %v1619
  %1627 = vmatprep.subr.mxu0 0.0
  %1628 = vmatpush1.xpose.msra.mxu0 %v1621
  %1629 = vmatprep.subr.mxu0 0.0
  %1630 = vmatpush1.xpose.msra.mxu0 0.0
  %1631 = vmatprep.subr.mxu0 0.0
  %1632 = vmatpush1.xpose.msra.mxu0 0.0
  %1633 = vmatprep.subr.mxu0 0.0
  %1634 = vmatpush1.xpose.msra.mxu0 0.0
  %1635 = vmatprep.subr.mxu0 0.0
  %1636 = vmatpush1.xpose.msra.mxu0 0.0
  %1637 = vmatprep.subr.mxu0 0.0
  %1638 = vmatpush1.xpose.msra.mxu0 0.0
  %1639 = vmatprep.subr.mxu0 0.0
  %1640 = vmatpush1.xpose.msra.mxu0 0.0
  %1641 = vmatprep.subr.mxu0 0.0
  %1642 = vmatpush1.xpose.msra.mxu0 0.0
  %1643 = vmatprep.subr.mxu0 0.0
  %1644 = vmatpush1.xpose.msra.mxu0 0.0
  %1645 = vmatprep.subr.mxu0 0.0
  %1646 = vmatpush1.xpose.msra.mxu0 0.0
  %1647 = vmatprep.subr.mxu0 0.0
  %1648 = vmatpush1.xpose.msra.mxu0 0.0
  %1649 = vmatprep.subr.mxu0 0.0
  %1650 = vmatpush1.xpose.msra.mxu0 0.0
  %1651 = vmatprep.subr.mxu0 0.0
  %1652 = vmatpush1.xpose.msra.mxu0 0.0
  %1653 = vmatprep.subr.mxu0 0.0
  %1654 = vmatpush1.xpose.msra.mxu0 0.0
  %1655 = vmatprep.subr.mxu0 0.0
  %1656 = vmatpush1.xpose.msra.mxu0 0.0
  %1657 = vmatprep.subr.mxu0 0.0
  %1658 = vmatpush1.xpose.msra.mxu0 0.0
  %1659 = vmatprep.subr.mxu0 0.0
  %1660 = vmatpush1.xpose.msra.mxu0 0.0
  %1661 = vmatprep.subr.mxu0 0.0
  %1662 = vmatpush1.xpose.msra.mxu0 0.0
  %1663 = vmatprep.subr.mxu0 0.0
  %1664 = vmatpush1.xpose.msra.mxu0 0.0
  %1665 = vmatprep.subr.mxu0 0.0
  %1666 = vmatpush1.xpose.msra.mxu0 0.0
  %1667 = vmatprep.subr.mxu0 0.0
  %1668 = vmatpush1.xpose.msra.mxu0 0.0
  %1669 = vmatprep.subr.mxu0 0.0
  %1670 = vmatpush1.xpose.msra.mxu0 0.0
  %1671 = vmatprep.subr.mxu0 0.0
  %1672 = vmatpush1.xpose.msra.mxu0 0.0
  %1673 = vmatprep.subr.mxu0 0.0
  %1674 = vmatpush1.xpose.msra.mxu0 0.0
  %1675 = vmatprep.subr.mxu0 0.0
  %1676 = vmatpush1.xpose.msra.mxu0 0.0
  %1677 = vmatprep.subr.mxu0 0.0
  %1678 = vmatpush1.xpose.msra.mxu0 0.0
  %1679 = vmatprep.subr.mxu0 0.0
  %1680 = vmatpush1.xpose.msra.mxu0 0.0
  %1681 = vmatprep.subr.mxu0 0.0
  %1682 = vmatpush1.xpose.msra.mxu0 0.0
  %1683 = vmatprep.subr.mxu0 0.0
  %1684 = vmatpush1.xpose.msra.mxu0 0.0
  %1685 = vmatprep.subr.mxu0 0.0
  %1686 = vmatpush1.xpose.msra.mxu0 0.0
  %1687 = vmatprep.mubr.f32.mxu0 0.0
  %1688 = vmatmul.mubr.f32.gmra.mrb[0].mxu0 %v1611
  %v1689 = vpop.f32.mrb[0].mxu0
  %v1690 = vadd.f32 0.0, %v1689
  %v1691 = vpop.f32.mrb[0].mxu0
  %1692 = vmatprep.mubr.f32.mxu0 0.0
  %1693 = vmatmul.mubr.f32.gmra.mrb[0].mxu0 %v1613
  %v1694 = vpop.f32.mrb[0].mxu0
  %v1695 = vadd.f32 0.0, %v1694
  %v1696 = vpop.f32.mrb[0].mxu0
  %1697 = vmatprep.mubr.f32.mxu0 0.0
  %1698 = vmatmul.mubr.f32.gmra.mrb[0].mxu0 %v1615
  %v1699 = vpop.f32.mrb[0].mxu0
  %v1700 = vadd.f32 0.0, %v1699
  %v1701 = vpop.f32.mrb[0].mxu0
  %1702 = vdwg.mxu0
  %v1703 = vmul.f32 %v1690, 0.35355338
  %v1704 = vmul.f32 %v1695, 0.35355338
  %v1705 = vmul.f32 %v1700, 0.35355338
  %v1706 = vadd.f32 %v1703, %v455
  %v1707 = vadd.f32 %v1704, %v456
  %v1708 = vadd.f32 %v1705, %v457
  %v1709 = vsel %vm710, %v1706, -inf
  %1710 = vmax.xlane.f32.xlu0 %v1709
  %v1711 = vpop.xlane.xlu0 %1710
  %v1712 = vsel %vm710, %v1707, -inf
  %1713 = vmax.xlane.f32.xlu0 %v1712
  %v1714 = vpop.xlane.xlu0 %1713
  %v1715 = vsel %vm717, %v1708, -inf
  %1716 = vmax.xlane.f32.xlu0 %v1715
  %v1717 = vpop.xlane.xlu0 %1716
  %v1718 = vsub.f32 %v1706, %v1711
  %v1719 = vsub.f32 %v1707, %v1714
  %v1720 = vsub.f32 %v1708, %v1717
  %v1721 = vmul.f32 %v1718, 1.442695
  %v1722 = vpow.pop %v1721
  %v1723 = vmul.f32 %v1719, 1.442695
  %v1724 = vpow.pop %v1723
  %v1725 = vmul.f32 %v1720, 1.442695
  %v1726 = vpow.pop %v1725
  %v1727 = vsel %vm710, %v1722, 0.0
  %1728 = vadd.xlane.f32.xlu0 %v1727
  %v1729 = vpop.xlane.xlu0 %1728
  %v1730 = vsel %vm710, %v1724, 0.0
  %1731 = vadd.xlane.f32.xlu0 %v1730
  %v1732 = vpop.xlane.xlu0 %1731
  %v1733 = vsel %vm717, %v1726, 0.0
  %1734 = vadd.xlane.f32.xlu0 %v1733
  %v1735 = vpop.xlane.xlu0 %1734
  %v1736 = vrcp.pop %v1729
  %v1737 = vrcp.pop %v1732
  %v1738 = vrcp.pop %v1735
  %v1739 = vmul.f32 %v1722, %v1736
  %v1740 = vmul.f32 %v1724, %v1737
  %v1741 = vmul.f32 %v1726, %v1738
  %1742 = vrot.lane.b32.xlu0 %v585, 40
  %v1743 = vpop.permute.xlu0 %1742
  %1744 = vrot.lane.b32.xlu0 %v590, 40
  %v1745 = vpop.permute.xlu0 %1744
  %1746 = vrot.lane.b32.xlu0 %v595, 40
  %v1747 = vpop.permute.xlu0 %1746
  %v1751 = vsel %vm710, %v1739, 0
  %v1754 = vsel %vm710, %v1740, 0
  %v1757 = vsel %vm710, %v1741, 0
  %v1759 = vsel %vm762, %v1747, 0
  %1761 = vmatprep.subr.mxu0 0.0
  %1762 = vmatpush1.msra.mxu0 %v1743
  %1763 = vmatprep.subr.mxu0 0.0
  %1764 = vmatpush1.msra.mxu0 %v1745
  %1765 = vmatprep.subr.mxu0 0.0
  %1766 = vmatpush1.msra.mxu0 %v1759
  %1767 = vmatprep.subr.mxu0 0.0
  %1768 = vmatpush1.msra.mxu0 0.0
  %1769 = vmatprep.subr.mxu0 0.0
  %1770 = vmatpush1.msra.mxu0 0.0
  %1771 = vmatprep.subr.mxu0 0.0
  %1772 = vmatpush1.msra.mxu0 0.0
  %1773 = vmatprep.subr.mxu0 0.0
  %1774 = vmatpush1.msra.mxu0 0.0
  %1775 = vmatprep.subr.mxu0 0.0
  %1776 = vmatpush1.msra.mxu0 0.0
  %1777 = vmatprep.subr.mxu0 0.0
  %1778 = vmatpush1.msra.mxu0 0.0
  %1779 = vmatprep.subr.mxu0 0.0
  %1780 = vmatpush1.msra.mxu0 0.0
  %1781 = vmatprep.subr.mxu0 0.0
  %1782 = vmatpush1.msra.mxu0 0.0
  %1783 = vmatprep.subr.mxu0 0.0
  %1784 = vmatpush1.msra.mxu0 0.0
  %1785 = vmatprep.subr.mxu0 0.0
  %1786 = vmatpush1.msra.mxu0 0.0
  %1787 = vmatprep.subr.mxu0 0.0
  %1788 = vmatpush1.msra.mxu0 0.0
  %1789 = vmatprep.subr.mxu0 0.0
  %1790 = vmatpush1.msra.mxu0 0.0
  %1791 = vmatprep.subr.mxu0 0.0
  %1792 = vmatpush1.msra.mxu0 0.0
  %1793 = vmatprep.subr.mxu0 0.0
  %1794 = vmatpush1.msra.mxu0 0.0
  %1795 = vmatprep.subr.mxu0 0.0
  %1796 = vmatpush1.msra.mxu0 0.0
  %1797 = vmatprep.subr.mxu0 0.0
  %1798 = vmatpush1.msra.mxu0 0.0
  %1799 = vmatprep.subr.mxu0 0.0
  %1800 = vmatpush1.msra.mxu0 0.0
  %1801 = vmatprep.subr.mxu0 0.0
  %1802 = vmatpush1.msra.mxu0 0.0
  %1803 = vmatprep.subr.mxu0 0.0
  %1804 = vmatpush1.msra.mxu0 0.0
  %1805 = vmatprep.subr.mxu0 0.0
  %1806 = vmatpush1.msra.mxu0 0.0
  %1807 = vmatprep.subr.mxu0 0.0
  %1808 = vmatpush1.msra.mxu0 0.0
  %1809 = vmatprep.subr.mxu0 0.0
  %1810 = vmatpush1.msra.mxu0 0.0
  %1811 = vmatprep.subr.mxu0 0.0
  %1812 = vmatpush1.msra.mxu0 0.0
  %1813 = vmatprep.subr.mxu0 0.0
  %1814 = vmatpush1.msra.mxu0 0.0
  %1815 = vmatprep.subr.mxu0 0.0
  %1816 = vmatpush1.msra.mxu0 0.0
  %1817 = vmatprep.subr.mxu0 0.0
  %1818 = vmatpush1.msra.mxu0 0.0
  %1819 = vmatprep.subr.mxu0 0.0
  %1820 = vmatpush1.msra.mxu0 0.0
  %1821 = vmatprep.subr.mxu0 0.0
  %1822 = vmatpush1.msra.mxu0 0.0
  %1823 = vmatprep.subr.mxu0 0.0
  %1824 = vmatpush1.msra.mxu0 0.0
  %1825 = vmatprep.mubr.f32.mxu0 0.0
  %1826 = vmatmul.mubr.f32.gmra.mrb[0].mxu0 %v1751
  %v1827 = vpop.f32.mrb[0].mxu0
  %v1828 = vadd.f32 0.0, %v1827
  %v1829 = vpop.f32.mrb[0].mxu0
  %1830 = vmatprep.mubr.f32.mxu0 0.0
  %1831 = vmatmul.mubr.f32.gmra.mrb[0].mxu0 %v1754
  %v1832 = vpop.f32.mrb[0].mxu0
  %v1833 = vadd.f32 0.0, %v1832
  %v1834 = vpop.f32.mrb[0].mxu0
  %1835 = vmatprep.mubr.f32.mxu0 0.0
  %1836 = vmatmul.mubr.f32.gmra.mrb[0].mxu0 %v1757
  %v1837 = vpop.f32.mrb[0].mxu0
  %v1838 = vadd.f32 0.0, %v1837
  %v1839 = vpop.f32.mrb[0].mxu0
  %1840 = vdwg.mxu0
  %v1842 = vsel %vm611, %v1828, 0
  %v1845 = vsel %vm611, %v1833, 0
  %v1848 = vsel %vm611, %v1838, 0
  %1850 = vmatprep.subr.mxu0 0.0
  %1851 = vmatpush1.msra.mxu0 %v601
  %1852 = vmatprep.subr.mxu0 0.0
  %1853 = vmatpush1.msra.mxu0 0.0
  %1854 = vmatprep.subr.mxu0 0.0
  %1855 = vmatpush1.msra.mxu0 0.0
  %1856 = vmatprep.subr.mxu0 0.0
  %1857 = vmatpush1.msra.mxu0 0.0
  %1858 = vmatprep.subr.mxu0 0.0
  %1859 = vmatpush1.msra.mxu0 0.0
  %1860 = vmatprep.subr.mxu0 0.0
  %1861 = vmatpush1.msra.mxu0 0.0
  %1862 = vmatprep.subr.mxu0 0.0
  %1863 = vmatpush1.msra.mxu0 0.0
  %1864 = vmatprep.subr.mxu0 0.0
  %1865 = vmatpush1.msra.mxu0 0.0
  %1866 = vmatprep.subr.mxu0 0.0
  %1867 = vmatpush1.msra.mxu0 0.0
  %1868 = vmatprep.subr.mxu0 0.0
  %1869 = vmatpush1.msra.mxu0 0.0
  %1870 = vmatprep.subr.mxu0 0.0
  %1871 = vmatpush1.msra.mxu0 0.0
  %1872 = vmatprep.subr.mxu0 0.0
  %1873 = vmatpush1.msra.mxu0 0.0
  %1874 = vmatprep.subr.mxu0 0.0
  %1875 = vmatpush1.msra.mxu0 0.0
  %1876 = vmatprep.subr.mxu0 0.0
  %1877 = vmatpush1.msra.mxu0 0.0
  %1878 = vmatprep.subr.mxu0 0.0
  %1879 = vmatpush1.msra.mxu0 0.0
  %1880 = vmatprep.subr.mxu0 0.0
  %1881 = vmatpush1.msra.mxu0 0.0
  %1882 = vmatprep.subr.mxu0 0.0
  %1883 = vmatpush1.msra.mxu0 0.0
  %1884 = vmatprep.subr.mxu0 0.0
  %1885 = vmatpush1.msra.mxu0 0.0
  %1886 = vmatprep.subr.mxu0 0.0
  %1887 = vmatpush1.msra.mxu0 0.0
  %1888 = vmatprep.subr.mxu0 0.0
  %1889 = vmatpush1.msra.mxu0 0.0
  %1890 = vmatprep.subr.mxu0 0.0
  %1891 = vmatpush1.msra.mxu0 0.0
  %1892 = vmatprep.subr.mxu0 0.0
  %1893 = vmatpush1.msra.mxu0 0.0
  %1894 = vmatprep.subr.mxu0 0.0
  %1895 = vmatpush1.msra.mxu0 0.0
  %1896 = vmatprep.subr.mxu0 0.0
  %1897 = vmatpush1.msra.mxu0 0.0
  %1898 = vmatprep.subr.mxu0 0.0
  %1899 = vmatpush1.msra.mxu0 0.0
  %1900 = vmatprep.subr.mxu0 0.0
  %1901 = vmatpush1.msra.mxu0 0.0
  %1902 = vmatprep.subr.mxu0 0.0
  %1903 = vmatpush1.msra.mxu0 0.0
  %1904 = vmatprep.subr.mxu0 0.0
  %1905 = vmatpush1.msra.mxu0 0.0
  %1906 = vmatprep.subr.mxu0 0.0
  %1907 = vmatpush1.msra.mxu0 0.0
  %1908 = vmatprep.subr.mxu0 0.0
  %1909 = vmatpush1.msra.mxu0 0.0
  %1910 = vmatprep.subr.mxu0 0.0
  %1911 = vmatpush1.msra.mxu0 0.0
  %1912 = vmatprep.subr.mxu0 0.0
  %1913 = vmatpush1.msra.mxu0 0.0
  %1914 = vmatprep.mubr.f32.mxu0 0.0
  %1915 = vmatmul.mubr.f32.gmra.mrb[0].mxu0 %v1842
  %v1916 = vpop.f32.mrb[0].mxu0
  %v1917 = vadd.f32 0.0, %v1916
  %v1918 = vpop.f32.mrb[0].mxu0
  %1919 = vmatprep.mubr.f32.mxu0 0.0
  %1920 = vmatmul.mubr.f32.gmra.mrb[0].mxu0 %v1845
  %v1921 = vpop.f32.mrb[0].mxu0
  %v1922 = vadd.f32 0.0, %v1921
  %v1923 = vpop.f32.mrb[0].mxu0
  %1924 = vmatprep.mubr.f32.mxu0 0.0
  %1925 = vmatmul.mubr.f32.gmra.mrb[0].mxu0 %v1848
  %v1926 = vpop.f32.mrb[0].mxu0
  %v1927 = vadd.f32 0.0, %v1926
  %v1928 = vpop.f32.mrb[0].mxu0
  %1929 = vdwg.mxu0
  %v1930 = vadd.f32 %v1596, %v1917
  %v1931 = vadd.f32 %v1597, %v1922
  %v1932 = vadd.f32 %v1598, %v1927
  %v1933 = vadd.f32 %v452, %v1930
  %v1934 = vadd.f32 %v453, %v1931
  %v1935 = vadd.f32 %v454, %v1932
  %v1936 = vld [vmem:[%s13] sm:$0x1]
  %v1938 = vlaneseq
  %v1939 = vshrl.u32 %v1938, 7
  %v1940 = vsub.s32 0, %v1939
  %v1941 = vrot.slane %v1936, %v1940
  %v1943 = vadd.f32 %v1933, %v1941
  %v1944 = vadd.f32 %v1934, %v1941
  %v1945 = vadd.f32 %v1935, %v1941
  %v1946 = vsel %vm368, %v1943, 0.0
  %1947 = vadd.xlane.f32.xlu0 %v1946
  %v1948 = vpop.xlane.xlu0 %1947
  %v1949 = vsel %vm368, %v1944, 0.0
  %1950 = vadd.xlane.f32.xlu0 %v1949
  %v1951 = vpop.xlane.xlu0 %1950
  %v1952 = vsel %vm442, %v1945, 0.0
  %1953 = vadd.xlane.f32.xlu0 %v1952
  %v1954 = vpop.xlane.xlu0 %1953
  %v1955 = vmul.f32 %v1948, %v467
  %v1956 = vmul.f32 %v1951, %v467
  %v1957 = vmul.f32 %v1954, %v467
  %v1958 = vsub.f32 %v1943, %v1955
  %v1959 = vsub.f32 %v1944, %v1956
  %v1960 = vsub.f32 %v1945, %v1957
  %v1961 = vmul.f32 %v1958, %v1958
  %v1962 = vmul.f32 %v1959, %v1959
  %v1963 = vmul.f32 %v1960, %v1960
  %v1964 = vsel %vm368, %v1961, 0.0
  %1965 = vadd.xlane.f32.xlu0 %v1964
  %v1966 = vpop.xlane.xlu0 %1965
  %v1967 = vsel %vm368, %v1962, 0.0
  %1968 = vadd.xlane.f32.xlu0 %v1967
  %v1969 = vpop.xlane.xlu0 %1968
  %v1970 = vsel %vm442, %v1963, 0.0
  %1971 = vadd.xlane.f32.xlu0 %v1970
  %v1972 = vpop.xlane.xlu0 %1971
  %v1973 = vmul.f32 %v1966, %v467
  %v1974 = vmul.f32 %v1969, %v467
  %v1975 = vmul.f32 %v1972, %v467
  %v1976 = vadd.f32 %v1973, 1e-06
  %v1977 = vadd.f32 %v1974, 1e-06
  %v1978 = vadd.f32 %v1975, 1e-06
  %v1979 = vrsqrt.pop %v1976
  %v1980 = vrsqrt.pop %v1977
  %v1981 = vrsqrt.pop %v1978
  %v1982 = vmul.f32 %v1958, %v1979
  %v1983 = vmul.f32 %v1959, %v1980
  %v1984 = vmul.f32 %v1960, %v1981
  %v1985 = vld [vmem:[%s14] sm:$0xff]
  %v1986 = vld [vmem:[%s14 + $0x8] sm:$0xff]
  %v1987 = vld [vmem:[%s14 + $0x10] sm:$0xff]
  %v1988 = vld [vmem:[%s14 + $0x18] sm:$0xff]
  %v1989 = vld [vmem:[%s15] sm:$0x1]
  %v1991 = vlaneseq
  %v1992 = vshrl.u32 %v1991, 7
  %v1993 = vsub.s32 0, %v1992
  %v1994 = vrot.slane %v1989, %v1993
  %v1997 = vsel %vm368, %v1982, 0
  %v2000 = vsel %vm368, %v1983, 0
  %v2003 = vsel %vm368, %v1984, 0
  %2005 = vmatprep.subr.mxu0 0.0
  %2006 = vmatpush1.msra.mxu0 %v1985
  %2007 = vmatprep.subr.mxu0 0.0
  %2008 = vmatpush1.msra.mxu0 %v1986
  %2009 = vmatprep.subr.mxu0 0.0
  %2010 = vmatpush1.msra.mxu0 %v1987
  %2011 = vmatprep.subr.mxu0 0.0
  %2012 = vmatpush1.msra.mxu0 %v1988
  %2013 = vmatprep.subr.mxu0 0.0
  %2014 = vmatpush1.msra.mxu0 0.0
  %2015 = vmatprep.subr.mxu0 0.0
  %2016 = vmatpush1.msra.mxu0 0.0
  %2017 = vmatprep.subr.mxu0 0.0
  %2018 = vmatpush1.msra.mxu0 0.0
  %2019 = vmatprep.subr.mxu0 0.0
  %2020 = vmatpush1.msra.mxu0 0.0
  %2021 = vmatprep.subr.mxu0 0.0
  %2022 = vmatpush1.msra.mxu0 0.0
  %2023 = vmatprep.subr.mxu0 0.0
  %2024 = vmatpush1.msra.mxu0 0.0
  %2025 = vmatprep.subr.mxu0 0.0
  %2026 = vmatpush1.msra.mxu0 0.0
  %2027 = vmatprep.subr.mxu0 0.0
  %2028 = vmatpush1.msra.mxu0 0.0
  %2029 = vmatprep.subr.mxu0 0.0
  %2030 = vmatpush1.msra.mxu0 0.0
  %2031 = vmatprep.subr.mxu0 0.0
  %2032 = vmatpush1.msra.mxu0 0.0
  %2033 = vmatprep.subr.mxu0 0.0
  %2034 = vmatpush1.msra.mxu0 0.0
  %2035 = vmatprep.subr.mxu0 0.0
  %2036 = vmatpush1.msra.mxu0 0.0
  %2037 = vmatprep.subr.mxu0 0.0
  %2038 = vmatpush1.msra.mxu0 0.0
  %2039 = vmatprep.subr.mxu0 0.0
  %2040 = vmatpush1.msra.mxu0 0.0
  %2041 = vmatprep.subr.mxu0 0.0
  %2042 = vmatpush1.msra.mxu0 0.0
  %2043 = vmatprep.subr.mxu0 0.0
  %2044 = vmatpush1.msra.mxu0 0.0
  %2045 = vmatprep.subr.mxu0 0.0
  %2046 = vmatpush1.msra.mxu0 0.0
  %2047 = vmatprep.subr.mxu0 0.0
  %2048 = vmatpush1.msra.mxu0 0.0
  %2049 = vmatprep.subr.mxu0 0.0
  %2050 = vmatpush1.msra.mxu0 0.0
  %2051 = vmatprep.subr.mxu0 0.0
  %2052 = vmatpush1.msra.mxu0 0.0
  %2053 = vmatprep.subr.mxu0 0.0
  %2054 = vmatpush1.msra.mxu0 0.0
  %2055 = vmatprep.subr.mxu0 0.0
  %2056 = vmatpush1.msra.mxu0 0.0
  %2057 = vmatprep.subr.mxu0 0.0
  %2058 = vmatpush1.msra.mxu0 0.0
  %2059 = vmatprep.subr.mxu0 0.0
  %2060 = vmatpush1.msra.mxu0 0.0
  %2061 = vmatprep.subr.mxu0 0.0
  %2062 = vmatpush1.msra.mxu0 0.0
  %2063 = vmatprep.subr.mxu0 0.0
  %2064 = vmatpush1.msra.mxu0 0.0
  %2065 = vmatprep.subr.mxu0 0.0
  %2066 = vmatpush1.msra.mxu0 0.0
  %2067 = vmatprep.subr.mxu0 0.0
  %2068 = vmatpush1.msra.mxu0 0.0
  %2069 = vmatprep.mubr.f32.mxu0 0.0
  %2070 = vmatmul.mubr.f32.gmra.mrb[0].mxu0 %v1997
  %v2071 = vpop.f32.mrb[0].mxu0
  %v2072 = vadd.f32 %v1994, %v2071
  %v2073 = vpop.f32.mrb[0].mxu0
  %2074 = vmatprep.mubr.f32.mxu0 0.0
  %2075 = vmatmul.mubr.f32.gmra.mrb[0].mxu0 %v2000
  %v2076 = vpop.f32.mrb[0].mxu0
  %v2077 = vadd.f32 %v1994, %v2076
  %v2078 = vpop.f32.mrb[0].mxu0
  %2079 = vmatprep.mubr.f32.mxu0 0.0
  %2080 = vmatmul.mubr.f32.gmra.mrb[0].mxu0 %v2003
  %v2081 = vpop.f32.mrb[0].mxu0
  %v2082 = vadd.f32 %v1994, %v2081
  %v2083 = vpop.f32.mrb[0].mxu0
  %2084 = vdwg.mxu0
  %v2085 = vmul.f32 %v2072, %v2072
  %v2086 = vmul.f32 %v2077, %v2077
  %v2087 = vmul.f32 %v2082, %v2082
  %v2088 = vmul.f32 %v2072, %v2085
  %v2089 = vmul.f32 %v2077, %v2086
  %v2090 = vmul.f32 %v2082, %v2087
  %v2091 = vmul.f32 %v2088, 0.044715
  %v2092 = vmul.f32 %v2089, 0.044715
  %v2093 = vmul.f32 %v2090, 0.044715
  %v2094 = vadd.f32 %v2072, %v2091
  %v2095 = vadd.f32 %v2077, %v2092
  %v2096 = vadd.f32 %v2082, %v2093
  %v2097 = vmul.f32 %v2094, 0.7978846
  %v2098 = vmul.f32 %v2095, 0.7978846
  %v2099 = vmul.f32 %v2096, 0.7978846
  %v2100 = vtanh.pop %v2097
  %v2101 = vtanh.pop %v2098
  %v2102 = vtanh.pop %v2099
  %v2103 = vadd.f32 %v2100, 1.0
  %v2104 = vadd.f32 %v2101, 1.0
  %v2105 = vadd.f32 %v2102, 1.0
  %v2106 = vmul.f32 %v2103, 0.5
  %v2107 = vmul.f32 %v2104, 0.5
  %v2108 = vmul.f32 %v2105, 0.5
  %v2109 = vmul.f32 %v2072, %v2106
  %v2110 = vmul.f32 %v2077, %v2107
  %v2111 = vmul.f32 %v2082, %v2108
  %v2112 = vld [vmem:[%s16] sm:$0xff]
  %v2113 = vld [vmem:[%s16 + $0x8] sm:$0xff]
  %v2114 = vld [vmem:[%s16 + $0x10] sm:$0xff]
  %v2115 = vld [vmem:[%s16 + $0x18] sm:$0xff]
  %v2116 = vld [vmem:[%s16 + $0x20] sm:$0xff]
  %v2117 = vld [vmem:[%s16 + $0x28] sm:$0xff]
  %v2118 = vld [vmem:[%s16 + $0x30] sm:$0xff]
  %v2119 = vld [vmem:[%s16 + $0x38] sm:$0xff]
  %v2120 = vld [vmem:[%s16 + $0x40] sm:$0xff]
  %v2121 = vld [vmem:[%s16 + $0x48] sm:$0xff]
  %v2122 = vld [vmem:[%s16 + $0x50] sm:$0xff]
  %v2123 = vld [vmem:[%s16 + $0x58] sm:$0xff]
  %v2124 = vld [vmem:[%s16 + $0x60] sm:$0xff]
  %v2125 = vld [vmem:[%s16 + $0x68] sm:$0xff]
  %v2126 = vld [vmem:[%s16 + $0x70] sm:$0xff]
  %v2127 = vld [vmem:[%s16 + $0x78] sm:$0xff]
  %2128 = vmatprep.subr.mxu0 0.0
  %2129 = vmatpush1.msra.mxu0 %v2112
  %2130 = vmatprep.subr.mxu0 0.0
  %2131 = vmatpush1.msra.mxu0 %v2113
  %2132 = vmatprep.subr.mxu0 0.0
  %2133 = vmatpush1.msra.mxu0 %v2114
  %2134 = vmatprep.subr.mxu0 0.0
  %2135 = vmatpush1.msra.mxu0 %v2115
  %2136 = vmatprep.subr.mxu0 0.0
  %2137 = vmatpush1.msra.mxu0 %v2116
  %2138 = vmatprep.subr.mxu0 0.0
  %2139 = vmatpush1.msra.mxu0 %v2117
  %2140 = vmatprep.subr.mxu0 0.0
  %2141 = vmatpush1.msra.mxu0 %v2118
  %2142 = vmatprep.subr.mxu0 0.0
  %2143 = vmatpush1.msra.mxu0 %v2119
  %2144 = vmatprep.subr.mxu0 0.0
  %2145 = vmatpush1.msra.mxu0 %v2120
  %2146 = vmatprep.subr.mxu0 0.0
  %2147 = vmatpush1.msra.mxu0 %v2121
  %2148 = vmatprep.subr.mxu0 0.0
  %2149 = vmatpush1.msra.mxu0 %v2122
  %2150 = vmatprep.subr.mxu0 0.0
  %2151 = vmatpush1.msra.mxu0 %v2123
  %2152 = vmatprep.subr.mxu0 0.0
  %2153 = vmatpush1.msra.mxu0 %v2124
  %2154 = vmatprep.subr.mxu0 0.0
  %2155 = vmatpush1.msra.mxu0 %v2125
  %2156 = vmatprep.subr.mxu0 0.0
  %2157 = vmatpush1.msra.mxu0 %v2126
  %2158 = vmatprep.subr.mxu0 0.0
  %2159 = vmatpush1.msra.mxu0 %v2127
  %2160 = vmatprep.subr.mxu0 0.0
  %2161 = vmatpush1.msra.mxu0 0.0
  %2162 = vmatprep.subr.mxu0 0.0
  %2163 = vmatpush1.msra.mxu0 0.0
  %2164 = vmatprep.subr.mxu0 0.0
  %2165 = vmatpush1.msra.mxu0 0.0
  %2166 = vmatprep.subr.mxu0 0.0
  %2167 = vmatpush1.msra.mxu0 0.0
  %2168 = vmatprep.subr.mxu0 0.0
  %2169 = vmatpush1.msra.mxu0 0.0
  %2170 = vmatprep.subr.mxu0 0.0
  %2171 = vmatpush1.msra.mxu0 0.0
  %2172 = vmatprep.subr.mxu0 0.0
  %2173 = vmatpush1.msra.mxu0 0.0
  %2174 = vmatprep.subr.mxu0 0.0
  %2175 = vmatpush1.msra.mxu0 0.0
  %2176 = vmatprep.subr.mxu0 0.0
  %2177 = vmatpush1.msra.mxu0 0.0
  %2178 = vmatprep.subr.mxu0 0.0
  %2179 = vmatpush1.msra.mxu0 0.0
  %2180 = vmatprep.subr.mxu0 0.0
  %2181 = vmatpush1.msra.mxu0 0.0
  %2182 = vmatprep.subr.mxu0 0.0
  %2183 = vmatpush1.msra.mxu0 0.0
  %2184 = vmatprep.subr.mxu0 0.0
  %2185 = vmatpush1.msra.mxu0 0.0
  %2186 = vmatprep.subr.mxu0 0.0
  %2187 = vmatpush1.msra.mxu0 0.0
  %2188 = vmatprep.subr.mxu0 0.0
  %2189 = vmatpush1.msra.mxu0 0.0
  %2190 = vmatprep.subr.mxu0 0.0
  %2191 = vmatpush1.msra.mxu0 0.0
  %2192 = vmatprep.mubr.f32.mxu0 0.0
  %2193 = vmatmul.mubr.f32.gmra.mrb[0].mxu0 %v2109
  %v2194 = vpop.f32.mrb[0].mxu0
  %v2195 = vadd.f32 0.0, %v2194
  %v2196 = vpop.f32.mrb[0].mxu0
  %2197 = vmatprep.mubr.f32.mxu0 0.0
  %2198 = vmatmul.mubr.f32.gmra.mrb[0].mxu0 %v2110
  %v2199 = vpop.f32.mrb[0].mxu0
  %v2200 = vadd.f32 0.0, %v2199
  %v2201 = vpop.f32.mrb[0].mxu0
  %2202 = vmatprep.mubr.f32.mxu0 0.0
  %2203 = vmatmul.mubr.f32.gmra.mrb[0].mxu0 %v2111
  %v2204 = vpop.f32.mrb[0].mxu0
  %v2205 = vadd.f32 0.0, %v2204
  %v2206 = vpop.f32.mrb[0].mxu0
  %2207 = vdwg.mxu0
  %v2208 = vadd.f32 %v1943, %v2195
  %v2209 = vadd.f32 %v1944, %v2200
  %v2210 = vadd.f32 %v1945, %v2205
  %v2211 = vld [vmem:[%s17] sm:$0x1]
  %v2213 = vlaneseq
  %v2214 = vshrl.u32 %v2213, 7
  %v2215 = vsub.s32 0, %v2214
  %v2216 = vrot.slane %v2211, %v2215
  %v2218 = vadd.f32 %v2208, %v2216
  %v2219 = vadd.f32 %v2209, %v2216
  %v2220 = vadd.f32 %v2210, %v2216
  %v2221 = vsel %vm368, %v2218, 0.0
  %2222 = vadd.xlane.f32.xlu0 %v2221
  %v2223 = vpop.xlane.xlu0 %2222
  %v2224 = vsel %vm368, %v2219, 0.0
  %2225 = vadd.xlane.f32.xlu0 %v2224
  %v2226 = vpop.xlane.xlu0 %2225
  %v2227 = vsel %vm442, %v2220, 0.0
  %2228 = vadd.xlane.f32.xlu0 %v2227
  %v2229 = vpop.xlane.xlu0 %2228
  %v2230 = vmul.f32 %v2223, %v467
  %v2231 = vmul.f32 %v2226, %v467
  %v2232 = vmul.f32 %v2229, %v467
  %v2233 = vsub.f32 %v2218, %v2230
  %v2234 = vsub.f32 %v2219, %v2231
  %v2235 = vsub.f32 %v2220, %v2232
  %v2236 = vmul.f32 %v2233, %v2233
  %v2237 = vmul.f32 %v2234, %v2234
  %v2238 = vmul.f32 %v2235, %v2235
  %v2239 = vsel %vm368, %v2236, 0.0
  %2240 = vadd.xlane.f32.xlu0 %v2239
  %v2241 = vpop.xlane.xlu0 %2240
  %v2242 = vsel %vm368, %v2237, 0.0
  %2243 = vadd.xlane.f32.xlu0 %v2242
  %v2244 = vpop.xlane.xlu0 %2243
  %v2245 = vsel %vm442, %v2238, 0.0
  %2246 = vadd.xlane.f32.xlu0 %v2245
  %v2247 = vpop.xlane.xlu0 %2246
  %v2248 = vmul.f32 %v2241, %v467
  %v2249 = vmul.f32 %v2244, %v467
  %v2250 = vmul.f32 %v2247, %v467
  %v2251 = vadd.f32 %v2248, 1e-06
  %v2252 = vadd.f32 %v2249, 1e-06
  %v2253 = vadd.f32 %v2250, 1e-06
  %v2254 = vrsqrt.pop %v2251
  %v2255 = vrsqrt.pop %v2252
  %v2256 = vrsqrt.pop %v2253
  %v2257 = vmul.f32 %v2233, %v2254
  %v2258 = vmul.f32 %v2234, %v2255
  %v2259 = vmul.f32 %v2235, %v2256
  %s2260 = scalar_lea.vmem %s10, 32
  %v2261 = vld [vmem:[%s2260] sm:$0xff]
  %v2262 = vld [vmem:[%s2260 + $0x8] sm:$0xff]
  %v2263 = vld [vmem:[%s2260 + $0x10] sm:$0xff]
  %v2264 = vld [vmem:[%s2260 + $0x18] sm:$0xff]
  %s2265 = scalar_lea.vmem %s11, 1
  %v2266 = vld [vmem:[%s2265] sm:$0x1]
  %v2268 = vlaneseq
  %v2269 = vshrl.u32 %v2268, 7
  %v2270 = vsub.s32 0, %v2269
  %v2271 = vrot.slane %v2266, %v2270
  %v2274 = vsel %vm368, %v2257, 0
  %v2277 = vsel %vm368, %v2258, 0
  %v2280 = vsel %vm368, %v2259, 0
  %2282 = vmatprep.subr.mxu0 0.0
  %2283 = vmatpush1.msra.mxu0 %v2261
  %2284 = vmatprep.subr.mxu0 0.0
  %2285 = vmatpush1.msra.mxu0 %v2262
  %2286 = vmatprep.subr.mxu0 0.0
  %2287 = vmatpush1.msra.mxu0 %v2263
  %2288 = vmatprep.subr.mxu0 0.0
  %2289 = vmatpush1.msra.mxu0 %v2264
  %2290 = vmatprep.subr.mxu0 0.0
  %2291 = vmatpush1.msra.mxu0 0.0
  %2292 = vmatprep.subr.mxu0 0.0
  %2293 = vmatpush1.msra.mxu0 0.0
  %2294 = vmatprep.subr.mxu0 0.0
  %2295 = vmatpush1.msra.mxu0 0.0
  %2296 = vmatprep.subr.mxu0 0.0
  %2297 = vmatpush1.msra.mxu0 0.0
  %2298 = vmatprep.subr.mxu0 0.0
  %2299 = vmatpush1.msra.mxu0 0.0
  %2300 = vmatprep.subr.mxu0 0.0
  %2301 = vmatpush1.msra.mxu0 0.0
  %2302 = vmatprep.subr.mxu0 0.0
  %2303 = vmatpush1.msra.mxu0 0.0
  %2304 = vmatprep.subr.mxu0 0.0
  %2305 = vmatpush1.msra.mxu0 0.0
  %2306 = vmatprep.subr.mxu0 0.0
  %2307 = vmatpush1.msra.mxu0 0.0
  %2308 = vmatprep.subr.mxu0 0.0
  %2309 = vmatpush1.msra.mxu0 0.0
  %2310 = vmatprep.subr.mxu0 0.0
  %2311 = vmatpush1.msra.mxu0 0.0
  %2312 = vmatprep.subr.mxu0 0.0
  %2313 = vmatpush1.msra.mxu0 0.0
  %2314 = vmatprep.subr.mxu0 0.0
  %2315 = vmatpush1.msra.mxu0 0.0
  %2316 = vmatprep.subr.mxu0 0.0
  %2317 = vmatpush1.msra.mxu0 0.0
  %2318 = vmatprep.subr.mxu0 0.0
  %2319 = vmatpush1.msra.mxu0 0.0
  %2320 = vmatprep.subr.mxu0 0.0
  %2321 = vmatpush1.msra.mxu0 0.0
  %2322 = vmatprep.subr.mxu0 0.0
  %2323 = vmatpush1.msra.mxu0 0.0
  %2324 = vmatprep.subr.mxu0 0.0
  %2325 = vmatpush1.msra.mxu0 0.0
  %2326 = vmatprep.subr.mxu0 0.0
  %2327 = vmatpush1.msra.mxu0 0.0
  %2328 = vmatprep.subr.mxu0 0.0
  %2329 = vmatpush1.msra.mxu0 0.0
  %2330 = vmatprep.subr.mxu0 0.0
  %2331 = vmatpush1.msra.mxu0 0.0
  %2332 = vmatprep.subr.mxu0 0.0
  %2333 = vmatpush1.msra.mxu0 0.0
  %2334 = vmatprep.subr.mxu0 0.0
  %2335 = vmatpush1.msra.mxu0 0.0
  %2336 = vmatprep.subr.mxu0 0.0
  %2337 = vmatpush1.msra.mxu0 0.0
  %2338 = vmatprep.subr.mxu0 0.0
  %2339 = vmatpush1.msra.mxu0 0.0
  %2340 = vmatprep.subr.mxu0 0.0
  %2341 = vmatpush1.msra.mxu0 0.0
  %2342 = vmatprep.subr.mxu0 0.0
  %2343 = vmatpush1.msra.mxu0 0.0
  %2344 = vmatprep.subr.mxu0 0.0
  %2345 = vmatpush1.msra.mxu0 0.0
  %2346 = vmatprep.mubr.f32.mxu0 0.0
  %2347 = vmatmul.mubr.f32.gmra.mrb[0].mxu0 %v2274
  %v2348 = vpop.f32.mrb[0].mxu0
  %v2349 = vadd.f32 %v2271, %v2348
  %v2350 = vpop.f32.mrb[0].mxu0
  %2351 = vmatprep.mubr.f32.mxu0 0.0
  %2352 = vmatmul.mubr.f32.gmra.mrb[0].mxu0 %v2277
  %v2353 = vpop.f32.mrb[0].mxu0
  %v2354 = vadd.f32 %v2271, %v2353
  %v2355 = vpop.f32.mrb[0].mxu0
  %2356 = vmatprep.mubr.f32.mxu0 0.0
  %2357 = vmatmul.mubr.f32.gmra.mrb[0].mxu0 %v2280
  %v2358 = vpop.f32.mrb[0].mxu0
  %v2359 = vadd.f32 %v2271, %v2358
  %v2360 = vpop.f32.mrb[0].mxu0
  %2361 = vdwg.mxu0
  %s2362 = scalar_lea.vmem %s12, 32
  %v2363 = vld [vmem:[%s2362] sm:$0xff]
  %v2364 = vld [vmem:[%s2362 + $0x8] sm:$0xff]
  %v2365 = vld [vmem:[%s2362 + $0x10] sm:$0xff]
  %v2366 = vld [vmem:[%s2362 + $0x18] sm:$0xff]
  %2370 = vrot.lane.b32.xlu0 %v2349, 96
  %v2371 = vpop.permute.xlu0 %2370
  %2372 = vrot.lane.b32.xlu0 %v2354, 96
  %v2373 = vpop.permute.xlu0 %2372
  %2374 = vrot.lane.b32.xlu0 %v2359, 96
  %v2375 = vpop.permute.xlu0 %2374
  %v2376 = vsel %vm611, %v2349, 0
  %v2378 = vsel %vm611, %v2354, 0
  %v2380 = vsel %vm611, %v2359, 0
  %v2382 = vsel %vm611, %v2371, 0
  %v2384 = vsel %vm611, %v2373, 0
  %v2386 = vsel %vm611, %v2375, 0
  %2388 = vmatprep.subr.mxu0 0.0
  %2389 = vmatpush1.xpose.msra.mxu0 %v2382
  %2390 = vmatprep.subr.mxu0 0.0
  %2391 = vmatpush1.xpose.msra.mxu0 %v2384
  %2392 = vmatprep.subr.mxu0 0.0
  %2393 = vmatpush1.xpose.msra.mxu0 %v2386
  %2394 = vmatprep.subr.mxu0 0.0
  %2395 = vmatpush1.xpose.msra.mxu0 0.0
  %2396 = vmatprep.subr.mxu0 0.0
  %2397 = vmatpush1.xpose.msra.mxu0 0.0
  %2398 = vmatprep.subr.mxu0 0.0
  %2399 = vmatpush1.xpose.msra.mxu0 0.0
  %2400 = vmatprep.subr.mxu0 0.0
  %2401 = vmatpush1.xpose.msra.mxu0 0.0
  %2402 = vmatprep.subr.mxu0 0.0
  %2403 = vmatpush1.xpose.msra.mxu0 0.0
  %2404 = vmatprep.subr.mxu0 0.0
  %2405 = vmatpush1.xpose.msra.mxu0 0.0
  %2406 = vmatprep.subr.mxu0 0.0
  %2407 = vmatpush1.xpose.msra.mxu0 0.0
  %2408 = vmatprep.subr.mxu0 0.0
  %2409 = vmatpush1.xpose.msra.mxu0 0.0
  %2410 = vmatprep.subr.mxu0 0.0
  %2411 = vmatpush1.xpose.msra.mxu0 0.0
  %2412 = vmatprep.subr.mxu0 0.0
  %2413 = vmatpush1.xpose.msra.mxu0 0.0
  %2414 = vmatprep.subr.mxu0 0.0
  %2415 = vmatpush1.xpose.msra.mxu0 0.0
  %2416 = vmatprep.subr.mxu0 0.0
  %2417 = vmatpush1.xpose.msra.mxu0 0.0
  %2418 = vmatprep.subr.mxu0 0.0
  %2419 = vmatpush1.xpose.msra.mxu0 0.0
  %2420 = vmatprep.subr.mxu0 0.0
  %2421 = vmatpush1.xpose.msra.mxu0 0.0
  %2422 = vmatprep.subr.mxu0 0.0
  %2423 = vmatpush1.xpose.msra.mxu0 0.0
  %2424 = vmatprep.subr.mxu0 0.0
  %2425 = vmatpush1.xpose.msra.mxu0 0.0
  %2426 = vmatprep.subr.mxu0 0.0
  %2427 = vmatpush1.xpose.msra.mxu0 0.0
  %2428 = vmatprep.subr.mxu0 0.0
  %2429 = vmatpush1.xpose.msra.mxu0 0.0
  %2430 = vmatprep.subr.mxu0 0.0
  %2431 = vmatpush1.xpose.msra.mxu0 0.0
  %2432 = vmatprep.subr.mxu0 0.0
  %2433 = vmatpush1.xpose.msra.mxu0 0.0
  %2434 = vmatprep.subr.mxu0 0.0
  %2435 = vmatpush1.xpose.msra.mxu0 0.0
  %2436 = vmatprep.subr.mxu0 0.0
  %2437 = vmatpush1.xpose.msra.mxu0 0.0
  %2438 = vmatprep.subr.mxu0 0.0
  %2439 = vmatpush1.xpose.msra.mxu0 0.0
  %2440 = vmatprep.subr.mxu0 0.0
  %2441 = vmatpush1.xpose.msra.mxu0 0.0
  %2442 = vmatprep.subr.mxu0 0.0
  %2443 = vmatpush1.xpose.msra.mxu0 0.0
  %2444 = vmatprep.subr.mxu0 0.0
  %2445 = vmatpush1.xpose.msra.mxu0 0.0
  %2446 = vmatprep.subr.mxu0 0.0
  %2447 = vmatpush1.xpose.msra.mxu0 0.0
  %2448 = vmatprep.subr.mxu0 0.0
  %2449 = vmatpush1.xpose.msra.mxu0 0.0
  %2450 = vmatprep.subr.mxu0 0.0
  %2451 = vmatpush1.xpose.msra.mxu0 0.0
  %2452 = vmatprep.mubr.f32.mxu0 0.0
  %2453 = vmatmul.mubr.f32.gmra.mrb[0].mxu0 %v2376
  %v2454 = vpop.f32.mrb[0].mxu0
  %v2455 = vadd.f32 0.0, %v2454
  %v2456 = vpop.f32.mrb[0].mxu0
  %2457 = vmatprep.mubr.f32.mxu0 0.0
  %2458 = vmatmul.mubr.f32.gmra.mrb[0].mxu0 %v2378
  %v2459 = vpop.f32.mrb[0].mxu0
  %v2460 = vadd.f32 0.0, %v2459
  %v2461 = vpop.f32.mrb[0].mxu0
  %2462 = vmatprep.mubr.f32.mxu0 0.0
  %2463 = vmatmul.mubr.f32.gmra.mrb[0].mxu0 %v2380
  %v2464 = vpop.f32.mrb[0].mxu0
  %v2465 = vadd.f32 0.0, %v2464
  %v2466 = vpop.f32.mrb[0].mxu0
  %2467 = vdwg.mxu0
  %v2468 = vmul.f32 %v2455, 0.35355338
  %v2469 = vmul.f32 %v2460, 0.35355338
  %v2470 = vmul.f32 %v2465, 0.35355338
  %v2471 = vadd.f32 %v2468, %v455
  %v2472 = vadd.f32 %v2469, %v456
  %v2473 = vadd.f32 %v2470, %v457
  %v2474 = vsel %vm710, %v2471, -inf
  %2475 = vmax.xlane.f32.xlu0 %v2474
  %v2476 = vpop.xlane.xlu0 %2475
  %v2477 = vsel %vm710, %v2472, -inf
  %2478 = vmax.xlane.f32.xlu0 %v2477
  %v2479 = vpop.xlane.xlu0 %2478
  %v2480 = vsel %vm717, %v2473, -inf
  %2481 = vmax.xlane.f32.xlu0 %v2480
  %v2482 = vpop.xlane.xlu0 %2481
  %v2483 = vsub.f32 %v2471, %v2476
  %v2484 = vsub.f32 %v2472, %v2479
  %v2485 = vsub.f32 %v2473, %v2482
  %v2486 = vmul.f32 %v2483, 1.442695
  %v2487 = vpow.pop %v2486
  %v2488 = vmul.f32 %v2484, 1.442695
  %v2489 = vpow.pop %v2488
  %v2490 = vmul.f32 %v2485, 1.442695
  %v2491 = vpow.pop %v2490
  %v2492 = vsel %vm710, %v2487, 0.0
  %2493 = vadd.xlane.f32.xlu0 %v2492
  %v2494 = vpop.xlane.xlu0 %2493
  %v2495 = vsel %vm710, %v2489, 0.0
  %2496 = vadd.xlane.f32.xlu0 %v2495
  %v2497 = vpop.xlane.xlu0 %2496
  %v2498 = vsel %vm717, %v2491, 0.0
  %2499 = vadd.xlane.f32.xlu0 %v2498
  %v2500 = vpop.xlane.xlu0 %2499
  %v2501 = vrcp.pop %v2494
  %v2502 = vrcp.pop %v2497
  %v2503 = vrcp.pop %v2500
  %v2504 = vmul.f32 %v2487, %v2501
  %v2505 = vmul.f32 %v2489, %v2502
  %v2506 = vmul.f32 %v2491, %v2503
  %2507 = vrot.lane.b32.xlu0 %v2349, 64
  %v2508 = vpop.permute.xlu0 %2507
  %2509 = vrot.lane.b32.xlu0 %v2354, 64
  %v2510 = vpop.permute.xlu0 %2509
  %2511 = vrot.lane.b32.xlu0 %v2359, 64
  %v2512 = vpop.permute.xlu0 %2511
  %v2516 = vsel %vm710, %v2504, 0
  %v2519 = vsel %vm710, %v2505, 0
  %v2522 = vsel %vm710, %v2506, 0
  %v2524 = vsel %vm762, %v2512, 0
  %2526 = vmatprep.subr.mxu0 0.0
  %2527 = vmatpush1.msra.mxu0 %v2508
  %2528 = vmatprep.subr.mxu0 0.0
  %2529 = vmatpush1.msra.mxu0 %v2510
  %2530 = vmatprep.subr.mxu0 0.0
  %2531 = vmatpush1.msra.mxu0 %v2524
  %2532 = vmatprep.subr.mxu0 0.0
  %2533 = vmatpush1.msra.mxu0 0.0
  %2534 = vmatprep.subr.mxu0 0.0
  %2535 = vmatpush1.msra.mxu0 0.0
  %2536 = vmatprep.subr.mxu0 0.0
  %2537 = vmatpush1.msra.mxu0 0.0
  %2538 = vmatprep.subr.mxu0 0.0
  %2539 = vmatpush1.msra.mxu0 0.0
  %2540 = vmatprep.subr.mxu0 0.0
  %2541 = vmatpush1.msra.mxu0 0.0
  %2542 = vmatprep.subr.mxu0 0.0
  %2543 = vmatpush1.msra.mxu0 0.0
  %2544 = vmatprep.subr.mxu0 0.0
  %2545 = vmatpush1.msra.mxu0 0.0
  %2546 = vmatprep.subr.mxu0 0.0
  %2547 = vmatpush1.msra.mxu0 0.0
  %2548 = vmatprep.subr.mxu0 0.0
  %2549 = vmatpush1.msra.mxu0 0.0
  %2550 = vmatprep.subr.mxu0 0.0
  %2551 = vmatpush1.msra.mxu0 0.0
  %2552 = vmatprep.subr.mxu0 0.0
  %2553 = vmatpush1.msra.mxu0 0.0
  %2554 = vmatprep.subr.mxu0 0.0
  %2555 = vmatpush1.msra.mxu0 0.0
  %2556 = vmatprep.subr.mxu0 0.0
  %2557 = vmatpush1.msra.mxu0 0.0
  %2558 = vmatprep.subr.mxu0 0.0
  %2559 = vmatpush1.msra.mxu0 0.0
  %2560 = vmatprep.subr.mxu0 0.0
  %2561 = vmatpush1.msra.mxu0 0.0
  %2562 = vmatprep.subr.mxu0 0.0
  %2563 = vmatpush1.msra.mxu0 0.0
  %2564 = vmatprep.subr.mxu0 0.0
  %2565 = vmatpush1.msra.mxu0 0.0
  %2566 = vmatprep.subr.mxu0 0.0
  %2567 = vmatpush1.msra.mxu0 0.0
  %2568 = vmatprep.subr.mxu0 0.0
  %2569 = vmatpush1.msra.mxu0 0.0
  %2570 = vmatprep.subr.mxu0 0.0
  %2571 = vmatpush1.msra.mxu0 0.0
  %2572 = vmatprep.subr.mxu0 0.0
  %2573 = vmatpush1.msra.mxu0 0.0
  %2574 = vmatprep.subr.mxu0 0.0
  %2575 = vmatpush1.msra.mxu0 0.0
  %2576 = vmatprep.subr.mxu0 0.0
  %2577 = vmatpush1.msra.mxu0 0.0
  %2578 = vmatprep.subr.mxu0 0.0
  %2579 = vmatpush1.msra.mxu0 0.0
  %2580 = vmatprep.subr.mxu0 0.0
  %2581 = vmatpush1.msra.mxu0 0.0
  %2582 = vmatprep.subr.mxu0 0.0
  %2583 = vmatpush1.msra.mxu0 0.0
  %2584 = vmatprep.subr.mxu0 0.0
  %2585 = vmatpush1.msra.mxu0 0.0
  %2586 = vmatprep.subr.mxu0 0.0
  %2587 = vmatpush1.msra.mxu0 0.0
  %2588 = vmatprep.subr.mxu0 0.0
  %2589 = vmatpush1.msra.mxu0 0.0
  %2590 = vmatprep.mubr.f32.mxu0 0.0
  %2591 = vmatmul.mubr.f32.gmra.mrb[0].mxu0 %v2516
  %v2592 = vpop.f32.mrb[0].mxu0
  %v2593 = vadd.f32 0.0, %v2592
  %v2594 = vpop.f32.mrb[0].mxu0
  %2595 = vmatprep.mubr.f32.mxu0 0.0
  %2596 = vmatmul.mubr.f32.gmra.mrb[0].mxu0 %v2519
  %v2597 = vpop.f32.mrb[0].mxu0
  %v2598 = vadd.f32 0.0, %v2597
  %v2599 = vpop.f32.mrb[0].mxu0
  %2600 = vmatprep.mubr.f32.mxu0 0.0
  %2601 = vmatmul.mubr.f32.gmra.mrb[0].mxu0 %v2522
  %v2602 = vpop.f32.mrb[0].mxu0
  %v2603 = vadd.f32 0.0, %v2602
  %v2604 = vpop.f32.mrb[0].mxu0
  %2605 = vdwg.mxu0
  %2606 = vrot.lane.b32.xlu0 %v2349, 120
  %v2607 = vpop.permute.xlu0 %2606
  %2608 = vrot.lane.b32.xlu0 %v2354, 120
  %v2609 = vpop.permute.xlu0 %2608
  %2610 = vrot.lane.b32.xlu0 %v2359, 120
  %v2611 = vpop.permute.xlu0 %2610
  %2612 = vrot.lane.b32.xlu0 %v2349, 88
  %v2613 = vpop.permute.xlu0 %2612
  %2614 = vrot.lane.b32.xlu0 %v2354, 88
  %v2615 = vpop.permute.xlu0 %2614
  %2616 = vrot.lane.b32.xlu0 %v2359, 88
  %v2617 = vpop.permute.xlu0 %2616
  %v2618 = vsel %vm611, %v2607, 0
  %v2620 = vsel %vm611, %v2609, 0
  %v2622 = vsel %vm611, %v2611, 0
  %v2624 = vsel %vm611, %v2613, 0
  %v2626 = vsel %vm611, %v2615, 0
  %v2628 = vsel %vm611, %v2617, 0
  %2630 = vmatprep.subr.mxu0 0.0
  %2631 = vmatpush1.xpose.msra.mxu0 %v2624
  %2632 = vmatprep.subr.mxu0 0.0
  %2633 = vmatpush1.xpose.msra.mxu0 %v2626
  %2634 = vmatprep.subr.mxu0 0.0
  %2635 = vmatpush1.xpose.msra.mxu0 %v2628
  %2636 = vmatprep.subr.mxu0 0.0
  %2637 = vmatpush1.xpose.msra.mxu0 0.0
  %2638 = vmatprep.subr.mxu0 0.0
  %2639 = vmatpush1.xpose.msra.mxu0 0.0
  %2640 = vmatprep.subr.mxu0 0.0
  %2641 = vmatpush1.xpose.msra.mxu0 0.0
  %2642 = vmatprep.subr.mxu0 0.0
  %2643 = vmatpush1.xpose.msra.mxu0 0.0
  %2644 = vmatprep.subr.mxu0 0.0
  %2645 = vmatpush1.xpose.msra.mxu0 0.0
  %2646 = vmatprep.subr.mxu0 0.0
  %2647 = vmatpush1.xpose.msra.mxu0 0.0
  %2648 = vmatprep.subr.mxu0 0.0
  %2649 = vmatpush1.xpose.msra.mxu0 0.0
  %2650 = vmatprep.subr.mxu0 0.0
  %2651 = vmatpush1.xpose.msra.mxu0 0.0
  %2652 = vmatprep.subr.mxu0 0.0
  %2653 = vmatpush1.xpose.msra.mxu0 0.0
  %2654 = vmatprep.subr.mxu0 0.0
  %2655 = vmatpush1.xpose.msra.mxu0 0.0
  %2656 = vmatprep.subr.mxu0 0.0
  %2657 = vmatpush1.xpose.msra.mxu0 0.0
  %2658 = vmatprep.subr.mxu0 0.0
  %2659 = vmatpush1.xpose.msra.mxu0 0.0
  %2660 = vmatprep.subr.mxu0 0.0
  %2661 = vmatpush1.xpose.msra.mxu0 0.0
  %2662 = vmatprep.subr.mxu0 0.0
  %2663 = vmatpush1.xpose.msra.mxu0 0.0
  %2664 = vmatprep.subr.mxu0 0.0
  %2665 = vmatpush1.xpose.msra.mxu0 0.0
  %2666 = vmatprep.subr.mxu0 0.0
  %2667 = vmatpush1.xpose.msra.mxu0 0.0
  %2668 = vmatprep.subr.mxu0 0.0
  %2669 = vmatpush1.xpose.msra.mxu0 0.0
  %2670 = vmatprep.subr.mxu0 0.0
  %2671 = vmatpush1.xpose.msra.mxu0 0.0
  %2672 = vmatprep.subr.mxu0 0.0
  %2673 = vmatpush1.xpose.msra.mxu0 0.0
  %2674 = vmatprep.subr.mxu0 0.0
  %2675 = vmatpush1.xpose.msra.mxu0 0.0
  %2676 = vmatprep.subr.mxu0 0.0
  %2677 = vmatpush1.xpose.msra.mxu0 0.0
  %2678 = vmatprep.subr.mxu0 0.0
  %2679 = vmatpush1.xpose.msra.mxu0 0.0
  %2680 = vmatprep.subr.mxu0 0.0
  %2681 = vmatpush1.xpose.msra.mxu0 0.0
  %2682 = vmatprep.subr.mxu0 0.0
  %2683 = vmatpush1.xpose.msra.mxu0 0.0
  %2684 = vmatprep.subr.mxu0 0.0
  %2685 = vmatpush1.xpose.msra.mxu0 0.0
  %2686 = vmatprep.subr.mxu0 0.0
  %2687 = vmatpush1.xpose.msra.mxu0 0.0
  %2688 = vmatprep.subr.mxu0 0.0
  %2689 = vmatpush1.xpose.msra.mxu0 0.0
  %2690 = vmatprep.subr.mxu0 0.0
  %2691 = vmatpush1.xpose.msra.mxu0 0.0
  %2692 = vmatprep.subr.mxu0 0.0
  %2693 = vmatpush1.xpose.msra.mxu0 0.0
  %2694 = vmatprep.mubr.f32.mxu0 0.0
  %2695 = vmatmul.mubr.f32.gmra.mrb[0].mxu0 %v2618
  %v2696 = vpop.f32.mrb[0].mxu0
  %v2697 = vadd.f32 0.0, %v2696
  %v2698 = vpop.f32.mrb[0].mxu0
  %2699 = vmatprep.mubr.f32.mxu0 0.0
  %2700 = vmatmul.mubr.f32.gmra.mrb[0].mxu0 %v2620
  %v2701 = vpop.f32.mrb[0].mxu0
  %v2702 = vadd.f32 0.0, %v2701
  %v2703 = vpop.f32.mrb[0].mxu0
  %2704 = vmatprep.mubr.f32.mxu0 0.0
  %2705 = vmatmul.mubr.f32.gmra.mrb[0].mxu0 %v2622
  %v2706 = vpop.f32.mrb[0].mxu0
  %v2707 = vadd.f32 0.0, %v2706
  %v2708 = vpop.f32.mrb[0].mxu0
  %2709 = vdwg.mxu0
  %v2710 = vmul.f32 %v2697, 0.35355338
  %v2711 = vmul.f32 %v2702, 0.35355338
  %v2712 = vmul.f32 %v2707, 0.35355338
  %v2713 = vadd.f32 %v2710, %v455
  %v2714 = vadd.f32 %v2711, %v456
  %v2715 = vadd.f32 %v2712, %v457
  %v2716 = vsel %vm710, %v2713, -inf
  %2717 = vmax.xlane.f32.xlu0 %v2716
  %v2718 = vpop.xlane.xlu0 %2717
  %v2719 = vsel %vm710, %v2714, -inf
  %2720 = vmax.xlane.f32.xlu0 %v2719
  %v2721 = vpop.xlane.xlu0 %2720
  %v2722 = vsel %vm717, %v2715, -inf
  %2723 = vmax.xlane.f32.xlu0 %v2722
  %v2724 = vpop.xlane.xlu0 %2723
  %v2725 = vsub.f32 %v2713, %v2718
  %v2726 = vsub.f32 %v2714, %v2721
  %v2727 = vsub.f32 %v2715, %v2724
  %v2728 = vmul.f32 %v2725, 1.442695
  %v2729 = vpow.pop %v2728
  %v2730 = vmul.f32 %v2726, 1.442695
  %v2731 = vpow.pop %v2730
  %v2732 = vmul.f32 %v2727, 1.442695
  %v2733 = vpow.pop %v2732
  %v2734 = vsel %vm710, %v2729, 0.0
  %2735 = vadd.xlane.f32.xlu0 %v2734
  %v2736 = vpop.xlane.xlu0 %2735
  %v2737 = vsel %vm710, %v2731, 0.0
  %2738 = vadd.xlane.f32.xlu0 %v2737
  %v2739 = vpop.xlane.xlu0 %2738
  %v2740 = vsel %vm717, %v2733, 0.0
  %2741 = vadd.xlane.f32.xlu0 %v2740
  %v2742 = vpop.xlane.xlu0 %2741
  %v2743 = vrcp.pop %v2736
  %v2744 = vrcp.pop %v2739
  %v2745 = vrcp.pop %v2742
  %v2746 = vmul.f32 %v2729, %v2743
  %v2747 = vmul.f32 %v2731, %v2744
  %v2748 = vmul.f32 %v2733, %v2745
  %2749 = vrot.lane.b32.xlu0 %v2349, 56
  %v2750 = vpop.permute.xlu0 %2749
  %2751 = vrot.lane.b32.xlu0 %v2354, 56
  %v2752 = vpop.permute.xlu0 %2751
  %2753 = vrot.lane.b32.xlu0 %v2359, 56
  %v2754 = vpop.permute.xlu0 %2753
  %v2758 = vsel %vm710, %v2746, 0
  %v2761 = vsel %vm710, %v2747, 0
  %v2764 = vsel %vm710, %v2748, 0
  %v2766 = vsel %vm762, %v2754, 0
  %2768 = vmatprep.subr.mxu0 0.0
  %2769 = vmatpush1.msra.mxu0 %v2750
  %2770 = vmatprep.subr.mxu0 0.0
  %2771 = vmatpush1.msra.mxu0 %v2752
  %2772 = vmatprep.subr.mxu0 0.0
  %2773 = vmatpush1.msra.mxu0 %v2766
  %2774 = vmatprep.subr.mxu0 0.0
  %2775 = vmatpush1.msra.mxu0 0.0
  %2776 = vmatprep.subr.mxu0 0.0
  %2777 = vmatpush1.msra.mxu0 0.0
  %2778 = vmatprep.subr.mxu0 0.0
  %2779 = vmatpush1.msra.mxu0 0.0
  %2780 = vmatprep.subr.mxu0 0.0
  %2781 = vmatpush1.msra.mxu0 0.0
  %2782 = vmatprep.subr.mxu0 0.0
  %2783 = vmatpush1.msra.mxu0 0.0
  %2784 = vmatprep.subr.mxu0 0.0
  %2785 = vmatpush1.msra.mxu0 0.0
  %2786 = vmatprep.subr.mxu0 0.0
  %2787 = vmatpush1.msra.mxu0 0.0
  %2788 = vmatprep.subr.mxu0 0.0
  %2789 = vmatpush1.msra.mxu0 0.0
  %2790 = vmatprep.subr.mxu0 0.0
  %2791 = vmatpush1.msra.mxu0 0.0
  %2792 = vmatprep.subr.mxu0 0.0
  %2793 = vmatpush1.msra.mxu0 0.0
  %2794 = vmatprep.subr.mxu0 0.0
  %2795 = vmatpush1.msra.mxu0 0.0
  %2796 = vmatprep.subr.mxu0 0.0
  %2797 = vmatpush1.msra.mxu0 0.0
  %2798 = vmatprep.subr.mxu0 0.0
  %2799 = vmatpush1.msra.mxu0 0.0
  %2800 = vmatprep.subr.mxu0 0.0
  %2801 = vmatpush1.msra.mxu0 0.0
  %2802 = vmatprep.subr.mxu0 0.0
  %2803 = vmatpush1.msra.mxu0 0.0
  %2804 = vmatprep.subr.mxu0 0.0
  %2805 = vmatpush1.msra.mxu0 0.0
  %2806 = vmatprep.subr.mxu0 0.0
  %2807 = vmatpush1.msra.mxu0 0.0
  %2808 = vmatprep.subr.mxu0 0.0
  %2809 = vmatpush1.msra.mxu0 0.0
  %2810 = vmatprep.subr.mxu0 0.0
  %2811 = vmatpush1.msra.mxu0 0.0
  %2812 = vmatprep.subr.mxu0 0.0
  %2813 = vmatpush1.msra.mxu0 0.0
  %2814 = vmatprep.subr.mxu0 0.0
  %2815 = vmatpush1.msra.mxu0 0.0
  %2816 = vmatprep.subr.mxu0 0.0
  %2817 = vmatpush1.msra.mxu0 0.0
  %2818 = vmatprep.subr.mxu0 0.0
  %2819 = vmatpush1.msra.mxu0 0.0
  %2820 = vmatprep.subr.mxu0 0.0
  %2821 = vmatpush1.msra.mxu0 0.0
  %2822 = vmatprep.subr.mxu0 0.0
  %2823 = vmatpush1.msra.mxu0 0.0
  %2824 = vmatprep.subr.mxu0 0.0
  %2825 = vmatpush1.msra.mxu0 0.0
  %2826 = vmatprep.subr.mxu0 0.0
  %2827 = vmatpush1.msra.mxu0 0.0
  %2828 = vmatprep.subr.mxu0 0.0
  %2829 = vmatpush1.msra.mxu0 0.0
  %2830 = vmatprep.subr.mxu0 0.0
  %2831 = vmatpush1.msra.mxu0 0.0
  %2832 = vmatprep.mubr.f32.mxu0 0.0
  %2833 = vmatmul.mubr.f32.gmra.mrb[0].mxu0 %v2758
  %v2834 = vpop.f32.mrb[0].mxu0
  %v2835 = vadd.f32 0.0, %v2834
  %v2836 = vpop.f32.mrb[0].mxu0
  %2837 = vmatprep.mubr.f32.mxu0 0.0
  %2838 = vmatmul.mubr.f32.gmra.mrb[0].mxu0 %v2761
  %v2839 = vpop.f32.mrb[0].mxu0
  %v2840 = vadd.f32 0.0, %v2839
  %v2841 = vpop.f32.mrb[0].mxu0
  %2842 = vmatprep.mubr.f32.mxu0 0.0
  %2843 = vmatmul.mubr.f32.gmra.mrb[0].mxu0 %v2764
  %v2844 = vpop.f32.mrb[0].mxu0
  %v2845 = vadd.f32 0.0, %v2844
  %v2846 = vpop.f32.mrb[0].mxu0
  %2847 = vdwg.mxu0
  %v2849 = vsel %vm611, %v2835, 0
  %v2852 = vsel %vm611, %v2840, 0
  %v2855 = vsel %vm611, %v2845, 0
  %2857 = vmatprep.subr.mxu0 0.0
  %2858 = vmatpush1.msra.mxu0 %v2364
  %2859 = vmatprep.subr.mxu0 0.0
  %2860 = vmatpush1.msra.mxu0 0.0
  %2861 = vmatprep.subr.mxu0 0.0
  %2862 = vmatpush1.msra.mxu0 0.0
  %2863 = vmatprep.subr.mxu0 0.0
  %2864 = vmatpush1.msra.mxu0 0.0
  %2865 = vmatprep.subr.mxu0 0.0
  %2866 = vmatpush1.msra.mxu0 0.0
  %2867 = vmatprep.subr.mxu0 0.0
  %2868 = vmatpush1.msra.mxu0 0.0
  %2869 = vmatprep.subr.mxu0 0.0
  %2870 = vmatpush1.msra.mxu0 0.0
  %2871 = vmatprep.subr.mxu0 0.0
  %2872 = vmatpush1.msra.mxu0 0.0
  %2873 = vmatprep.subr.mxu0 0.0
  %2874 = vmatpush1.msra.mxu0 0.0
  %2875 = vmatprep.subr.mxu0 0.0
  %2876 = vmatpush1.msra.mxu0 0.0
  %2877 = vmatprep.subr.mxu0 0.0
  %2878 = vmatpush1.msra.mxu0 0.0
  %2879 = vmatprep.subr.mxu0 0.0
  %2880 = vmatpush1.msra.mxu0 0.0
  %2881 = vmatprep.subr.mxu0 0.0
  %2882 = vmatpush1.msra.mxu0 0.0
  %2883 = vmatprep.subr.mxu0 0.0
  %2884 = vmatpush1.msra.mxu0 0.0
  %2885 = vmatprep.subr.mxu0 0.0
  %2886 = vmatpush1.msra.mxu0 0.0
  %2887 = vmatprep.subr.mxu0 0.0
  %2888 = vmatpush1.msra.mxu0 0.0
  %2889 = vmatprep.subr.mxu0 0.0
  %2890 = vmatpush1.msra.mxu0 0.0
  %2891 = vmatprep.subr.mxu0 0.0
  %2892 = vmatpush1.msra.mxu0 0.0
  %2893 = vmatprep.subr.mxu0 0.0
  %2894 = vmatpush1.msra.mxu0 0.0
  %2895 = vmatprep.subr.mxu0 0.0
  %2896 = vmatpush1.msra.mxu0 0.0
  %2897 = vmatprep.subr.mxu0 0.0
  %2898 = vmatpush1.msra.mxu0 0.0
  %2899 = vmatprep.subr.mxu0 0.0
  %2900 = vmatpush1.msra.mxu0 0.0
  %2901 = vmatprep.subr.mxu0 0.0
  %2902 = vmatpush1.msra.mxu0 0.0
  %2903 = vmatprep.subr.mxu0 0.0
  %2904 = vmatpush1.msra.mxu0 0.0
  %2905 = vmatprep.subr.mxu0 0.0
  %2906 = vmatpush1.msra.mxu0 0.0
  %2907 = vmatprep.subr.mxu0 0.0
  %2908 = vmatpush1.msra.mxu0 0.0
  %2909 = vmatprep.subr.mxu0 0.0
  %2910 = vmatpush1.msra.mxu0 0.0
  %2911 = vmatprep.subr.mxu0 0.0
  %2912 = vmatpush1.msra.mxu0 0.0
  %2913 = vmatprep.subr.mxu0 0.0
  %2914 = vmatpush1.msra.mxu0 0.0
  %2915 = vmatprep.subr.mxu0 0.0
  %2916 = vmatpush1.msra.mxu0 0.0
  %2917 = vmatprep.subr.mxu0 0.0
  %2918 = vmatpush1.msra.mxu0 0.0
  %2919 = vmatprep.subr.mxu0 0.0
  %2920 = vmatpush1.msra.mxu0 0.0
  %2921 = vmatprep.mubr.f32.mxu0 0.0
  %2922 = vmatmul.mubr.f32.gmra.mrb[0].mxu0 %v2849
  %v2923 = vpop.f32.mrb[0].mxu0
  %v2924 = vadd.f32 0.0, %v2923
  %v2925 = vpop.f32.mrb[0].mxu0
  %2926 = vmatprep.mubr.f32.mxu0 0.0
  %2927 = vmatmul.mubr.f32.gmra.mrb[0].mxu0 %v2852
  %v2928 = vpop.f32.mrb[0].mxu0
  %v2929 = vadd.f32 0.0, %v2928
  %v2930 = vpop.f32.mrb[0].mxu0
  %2931 = vmatprep.mubr.f32.mxu0 0.0
  %2932 = vmatmul.mubr.f32.gmra.mrb[0].mxu0 %v2855
  %v2933 = vpop.f32.mrb[0].mxu0
  %v2934 = vadd.f32 0.0, %v2933
  %v2935 = vpop.f32.mrb[0].mxu0
  %2936 = vdwg.mxu0
  %v2938 = vsel %vm611, %v2593, 0
  %v2941 = vsel %vm611, %v2598, 0
  %v2944 = vsel %vm611, %v2603, 0
  %2946 = vmatprep.subr.mxu0 0.0
  %2947 = vmatpush1.msra.mxu0 %v2363
  %2948 = vmatprep.subr.mxu0 0.0
  %2949 = vmatpush1.msra.mxu0 0.0
  %2950 = vmatprep.subr.mxu0 0.0
  %2951 = vmatpush1.msra.mxu0 0.0
  %2952 = vmatprep.subr.mxu0 0.0
  %2953 = vmatpush1.msra.mxu0 0.0
  %2954 = vmatprep.subr.mxu0 0.0
  %2955 = vmatpush1.msra.mxu0 0.0
  %2956 = vmatprep.subr.mxu0 0.0
  %2957 = vmatpush1.msra.mxu0 0.0
  %2958 = vmatprep.subr.mxu0 0.0
  %2959 = vmatpush1.msra.mxu0 0.0
  %2960 = vmatprep.subr.mxu0 0.0
  %2961 = vmatpush1.msra.mxu0 0.0
  %2962 = vmatprep.subr.mxu0 0.0
  %2963 = vmatpush1.msra.mxu0 0.0
  %2964 = vmatprep.subr.mxu0 0.0
  %2965 = vmatpush1.msra.mxu0 0.0
  %2966 = vmatprep.subr.mxu0 0.0
  %2967 = vmatpush1.msra.mxu0 0.0
  %2968 = vmatprep.subr.mxu0 0.0
  %2969 = vmatpush1.msra.mxu0 0.0
  %2970 = vmatprep.subr.mxu0 0.0
  %2971 = vmatpush1.msra.mxu0 0.0
  %2972 = vmatprep.subr.mxu0 0.0
  %2973 = vmatpush1.msra.mxu0 0.0
  %2974 = vmatprep.subr.mxu0 0.0
  %2975 = vmatpush1.msra.mxu0 0.0
  %2976 = vmatprep.subr.mxu0 0.0
  %2977 = vmatpush1.msra.mxu0 0.0
  %2978 = vmatprep.subr.mxu0 0.0
  %2979 = vmatpush1.msra.mxu0 0.0
  %2980 = vmatprep.subr.mxu0 0.0
  %2981 = vmatpush1.msra.mxu0 0.0
  %2982 = vmatprep.subr.mxu0 0.0
  %2983 = vmatpush1.msra.mxu0 0.0
  %2984 = vmatprep.subr.mxu0 0.0
  %2985 = vmatpush1.msra.mxu0 0.0
  %2986 = vmatprep.subr.mxu0 0.0
  %2987 = vmatpush1.msra.mxu0 0.0
  %2988 = vmatprep.subr.mxu0 0.0
  %2989 = vmatpush1.msra.mxu0 0.0
  %2990 = vmatprep.subr.mxu0 0.0
  %2991 = vmatpush1.msra.mxu0 0.0
  %2992 = vmatprep.subr.mxu0 0.0
  %2993 = vmatpush1.msra.mxu0 0.0
  %2994 = vmatprep.subr.mxu0 0.0
  %2995 = vmatpush1.msra.mxu0 0.0
  %2996 = vmatprep.subr.mxu0 0.0
  %2997 = vmatpush1.msra.mxu0 0.0
  %2998 = vmatprep.subr.mxu0 0.0
  %2999 = vmatpush1.msra.mxu0 0.0
  %3000 = vmatprep.subr.mxu0 0.0
  %3001 = vmatpush1.msra.mxu0 0.0
  %3002 = vmatprep.subr.mxu0 0.0
  %3003 = vmatpush1.msra.mxu0 0.0
  %3004 = vmatprep.subr.mxu0 0.0
  %3005 = vmatpush1.msra.mxu0 0.0
  %3006 = vmatprep.subr.mxu0 0.0
  %3007 = vmatpush1.msra.mxu0 0.0
  %3008 = vmatprep.subr.mxu0 0.0
  %3009 = vmatpush1.msra.mxu0 0.0
  %3010 = vmatprep.mubr.f32.mxu0 0.0
  %3011 = vmatmul.mubr.f32.gmra.mrb[0].mxu0 %v2938
  %v3012 = vpop.f32.mrb[0].mxu0
  %v3013 = vadd.f32 %v2924, %v3012
  %v3014 = vpop.f32.mrb[0].mxu0
  %3015 = vmatprep.mubr.f32.mxu0 0.0
  %3016 = vmatmul.mubr.f32.gmra.mrb[0].mxu0 %v2941
  %v3017 = vpop.f32.mrb[0].mxu0
  %v3018 = vadd.f32 %v2929, %v3017
  %v3019 = vpop.f32.mrb[0].mxu0
  %3020 = vmatprep.mubr.f32.mxu0 0.0
  %3021 = vmatmul.mubr.f32.gmra.mrb[0].mxu0 %v2944
  %v3022 = vpop.f32.mrb[0].mxu0
  %v3023 = vadd.f32 %v2934, %v3022
  %v3024 = vpop.f32.mrb[0].mxu0
  %3025 = vdwg.mxu0
  %3026 = vrot.lane.b32.xlu0 %v2349, 112
  %v3027 = vpop.permute.xlu0 %3026
  %3028 = vrot.lane.b32.xlu0 %v2354, 112
  %v3029 = vpop.permute.xlu0 %3028
  %3030 = vrot.lane.b32.xlu0 %v2359, 112
  %v3031 = vpop.permute.xlu0 %3030
  %3032 = vrot.lane.b32.xlu0 %v2349, 80
  %v3033 = vpop.permute.xlu0 %3032
  %3034 = vrot.lane.b32.xlu0 %v2354, 80
  %v3035 = vpop.permute.xlu0 %3034
  %3036 = vrot.lane.b32.xlu0 %v2359, 80
  %v3037 = vpop.permute.xlu0 %3036
  %v3038 = vsel %vm611, %v3027, 0
  %v3040 = vsel %vm611, %v3029, 0
  %v3042 = vsel %vm611, %v3031, 0
  %v3044 = vsel %vm611, %v3033, 0
  %v3046 = vsel %vm611, %v3035, 0
  %v3048 = vsel %vm611, %v3037, 0
  %3050 = vmatprep.subr.mxu0 0.0
  %3051 = vmatpush1.xpose.msra.mxu0 %v3044
  %3052 = vmatprep.subr.mxu0 0.0
  %3053 = vmatpush1.xpose.msra.mxu0 %v3046
  %3054 = vmatprep.subr.mxu0 0.0
  %3055 = vmatpush1.xpose.msra.mxu0 %v3048
  %3056 = vmatprep.subr.mxu0 0.0
  %3057 = vmatpush1.xpose.msra.mxu0 0.0
  %3058 = vmatprep.subr.mxu0 0.0
  %3059 = vmatpush1.xpose.msra.mxu0 0.0
  %3060 = vmatprep.subr.mxu0 0.0
  %3061 = vmatpush1.xpose.msra.mxu0 0.0
  %3062 = vmatprep.subr.mxu0 0.0
  %3063 = vmatpush1.xpose.msra.mxu0 0.0
  %3064 = vmatprep.subr.mxu0 0.0
  %3065 = vmatpush1.xpose.msra.mxu0 0.0
  %3066 = vmatprep.subr.mxu0 0.0
  %3067 = vmatpush1.xpose.msra.mxu0 0.0
  %3068 = vmatprep.subr.mxu0 0.0
  %3069 = vmatpush1.xpose.msra.mxu0 0.0
  %3070 = vmatprep.subr.mxu0 0.0
  %3071 = vmatpush1.xpose.msra.mxu0 0.0
  %3072 = vmatprep.subr.mxu0 0.0
  %3073 = vmatpush1.xpose.msra.mxu0 0.0
  %3074 = vmatprep.subr.mxu0 0.0
  %3075 = vmatpush1.xpose.msra.mxu0 0.0
  %3076 = vmatprep.subr.mxu0 0.0
  %3077 = vmatpush1.xpose.msra.mxu0 0.0
  %3078 = vmatprep.subr.mxu0 0.0
  %3079 = vmatpush1.xpose.msra.mxu0 0.0
  %3080 = vmatprep.subr.mxu0 0.0
  %3081 = vmatpush1.xpose.msra.mxu0 0.0
  %3082 = vmatprep.subr.mxu0 0.0
  %3083 = vmatpush1.xpose.msra.mxu0 0.0
  %3084 = vmatprep.subr.mxu0 0.0
  %3085 = vmatpush1.xpose.msra.mxu0 0.0
  %3086 = vmatprep.subr.mxu0 0.0
  %3087 = vmatpush1.xpose.msra.mxu0 0.0
  %3088 = vmatprep.subr.mxu0 0.0
  %3089 = vmatpush1.xpose.msra.mxu0 0.0
  %3090 = vmatprep.subr.mxu0 0.0
  %3091 = vmatpush1.xpose.msra.mxu0 0.0
  %3092 = vmatprep.subr.mxu0 0.0
  %3093 = vmatpush1.xpose.msra.mxu0 0.0
  %3094 = vmatprep.subr.mxu0 0.0
  %3095 = vmatpush1.xpose.msra.mxu0 0.0
  %3096 = vmatprep.subr.mxu0 0.0
  %3097 = vmatpush1.xpose.msra.mxu0 0.0
  %3098 = vmatprep.subr.mxu0 0.0
  %3099 = vmatpush1.xpose.msra.mxu0 0.0
  %3100 = vmatprep.subr.mxu0 0.0
  %3101 = vmatpush1.xpose.msra.mxu0 0.0
  %3102 = vmatprep.subr.mxu0 0.0
  %3103 = vmatpush1.xpose.msra.mxu0 0.0
  %3104 = vmatprep.subr.mxu0 0.0
  %3105 = vmatpush1.xpose.msra.mxu0 0.0
  %3106 = vmatprep.subr.mxu0 0.0
  %3107 = vmatpush1.xpose.msra.mxu0 0.0
  %3108 = vmatprep.subr.mxu0 0.0
  %3109 = vmatpush1.xpose.msra.mxu0 0.0
  %3110 = vmatprep.subr.mxu0 0.0
  %3111 = vmatpush1.xpose.msra.mxu0 0.0
  %3112 = vmatprep.subr.mxu0 0.0
  %3113 = vmatpush1.xpose.msra.mxu0 0.0
  %3114 = vmatprep.mubr.f32.mxu0 0.0
  %3115 = vmatmul.mubr.f32.gmra.mrb[0].mxu0 %v3038
  %v3116 = vpop.f32.mrb[0].mxu0
  %v3117 = vadd.f32 0.0, %v3116
  %v3118 = vpop.f32.mrb[0].mxu0
  %3119 = vmatprep.mubr.f32.mxu0 0.0
  %3120 = vmatmul.mubr.f32.gmra.mrb[0].mxu0 %v3040
  %v3121 = vpop.f32.mrb[0].mxu0
  %v3122 = vadd.f32 0.0, %v3121
  %v3123 = vpop.f32.mrb[0].mxu0
  %3124 = vmatprep.mubr.f32.mxu0 0.0
  %3125 = vmatmul.mubr.f32.gmra.mrb[0].mxu0 %v3042
  %v3126 = vpop.f32.mrb[0].mxu0
  %v3127 = vadd.f32 0.0, %v3126
  %v3128 = vpop.f32.mrb[0].mxu0
  %3129 = vdwg.mxu0
  %v3130 = vmul.f32 %v3117, 0.35355338
  %v3131 = vmul.f32 %v3122, 0.35355338
  %v3132 = vmul.f32 %v3127, 0.35355338
  %v3133 = vadd.f32 %v3130, %v455
  %v3134 = vadd.f32 %v3131, %v456
  %v3135 = vadd.f32 %v3132, %v457
  %v3136 = vsel %vm710, %v3133, -inf
  %3137 = vmax.xlane.f32.xlu0 %v3136
  %v3138 = vpop.xlane.xlu0 %3137
  %v3139 = vsel %vm710, %v3134, -inf
  %3140 = vmax.xlane.f32.xlu0 %v3139
  %v3141 = vpop.xlane.xlu0 %3140
  %v3142 = vsel %vm717, %v3135, -inf
  %3143 = vmax.xlane.f32.xlu0 %v3142
  %v3144 = vpop.xlane.xlu0 %3143
  %v3145 = vsub.f32 %v3133, %v3138
  %v3146 = vsub.f32 %v3134, %v3141
  %v3147 = vsub.f32 %v3135, %v3144
  %v3148 = vmul.f32 %v3145, 1.442695
  %v3149 = vpow.pop %v3148
  %v3150 = vmul.f32 %v3146, 1.442695
  %v3151 = vpow.pop %v3150
  %v3152 = vmul.f32 %v3147, 1.442695
  %v3153 = vpow.pop %v3152
  %v3154 = vsel %vm710, %v3149, 0.0
  %3155 = vadd.xlane.f32.xlu0 %v3154
  %v3156 = vpop.xlane.xlu0 %3155
  %v3157 = vsel %vm710, %v3151, 0.0
  %3158 = vadd.xlane.f32.xlu0 %v3157
  %v3159 = vpop.xlane.xlu0 %3158
  %v3160 = vsel %vm717, %v3153, 0.0
  %3161 = vadd.xlane.f32.xlu0 %v3160
  %v3162 = vpop.xlane.xlu0 %3161
  %v3163 = vrcp.pop %v3156
  %v3164 = vrcp.pop %v3159
  %v3165 = vrcp.pop %v3162
  %v3166 = vmul.f32 %v3149, %v3163
  %v3167 = vmul.f32 %v3151, %v3164
  %v3168 = vmul.f32 %v3153, %v3165
  %3169 = vrot.lane.b32.xlu0 %v2349, 48
  %v3170 = vpop.permute.xlu0 %3169
  %3171 = vrot.lane.b32.xlu0 %v2354, 48
  %v3172 = vpop.permute.xlu0 %3171
  %3173 = vrot.lane.b32.xlu0 %v2359, 48
  %v3174 = vpop.permute.xlu0 %3173
  %v3178 = vsel %vm710, %v3166, 0
  %v3181 = vsel %vm710, %v3167, 0
  %v3184 = vsel %vm710, %v3168, 0
  %v3186 = vsel %vm762, %v3174, 0
  %3188 = vmatprep.subr.mxu0 0.0
  %3189 = vmatpush1.msra.mxu0 %v3170
  %3190 = vmatprep.subr.mxu0 0.0
  %3191 = vmatpush1.msra.mxu0 %v3172
  %3192 = vmatprep.subr.mxu0 0.0
  %3193 = vmatpush1.msra.mxu0 %v3186
  %3194 = vmatprep.subr.mxu0 0.0
  %3195 = vmatpush1.msra.mxu0 0.0
  %3196 = vmatprep.subr.mxu0 0.0
  %3197 = vmatpush1.msra.mxu0 0.0
  %3198 = vmatprep.subr.mxu0 0.0
  %3199 = vmatpush1.msra.mxu0 0.0
  %3200 = vmatprep.subr.mxu0 0.0
  %3201 = vmatpush1.msra.mxu0 0.0
  %3202 = vmatprep.subr.mxu0 0.0
  %3203 = vmatpush1.msra.mxu0 0.0
  %3204 = vmatprep.subr.mxu0 0.0
  %3205 = vmatpush1.msra.mxu0 0.0
  %3206 = vmatprep.subr.mxu0 0.0
  %3207 = vmatpush1.msra.mxu0 0.0
  %3208 = vmatprep.subr.mxu0 0.0
  %3209 = vmatpush1.msra.mxu0 0.0
  %3210 = vmatprep.subr.mxu0 0.0
  %3211 = vmatpush1.msra.mxu0 0.0
  %3212 = vmatprep.subr.mxu0 0.0
  %3213 = vmatpush1.msra.mxu0 0.0
  %3214 = vmatprep.subr.mxu0 0.0
  %3215 = vmatpush1.msra.mxu0 0.0
  %3216 = vmatprep.subr.mxu0 0.0
  %3217 = vmatpush1.msra.mxu0 0.0
  %3218 = vmatprep.subr.mxu0 0.0
  %3219 = vmatpush1.msra.mxu0 0.0
  %3220 = vmatprep.subr.mxu0 0.0
  %3221 = vmatpush1.msra.mxu0 0.0
  %3222 = vmatprep.subr.mxu0 0.0
  %3223 = vmatpush1.msra.mxu0 0.0
  %3224 = vmatprep.subr.mxu0 0.0
  %3225 = vmatpush1.msra.mxu0 0.0
  %3226 = vmatprep.subr.mxu0 0.0
  %3227 = vmatpush1.msra.mxu0 0.0
  %3228 = vmatprep.subr.mxu0 0.0
  %3229 = vmatpush1.msra.mxu0 0.0
  %3230 = vmatprep.subr.mxu0 0.0
  %3231 = vmatpush1.msra.mxu0 0.0
  %3232 = vmatprep.subr.mxu0 0.0
  %3233 = vmatpush1.msra.mxu0 0.0
  %3234 = vmatprep.subr.mxu0 0.0
  %3235 = vmatpush1.msra.mxu0 0.0
  %3236 = vmatprep.subr.mxu0 0.0
  %3237 = vmatpush1.msra.mxu0 0.0
  %3238 = vmatprep.subr.mxu0 0.0
  %3239 = vmatpush1.msra.mxu0 0.0
  %3240 = vmatprep.subr.mxu0 0.0
  %3241 = vmatpush1.msra.mxu0 0.0
  %3242 = vmatprep.subr.mxu0 0.0
  %3243 = vmatpush1.msra.mxu0 0.0
  %3244 = vmatprep.subr.mxu0 0.0
  %3245 = vmatpush1.msra.mxu0 0.0
  %3246 = vmatprep.subr.mxu0 0.0
  %3247 = vmatpush1.msra.mxu0 0.0
  %3248 = vmatprep.subr.mxu0 0.0
  %3249 = vmatpush1.msra.mxu0 0.0
  %3250 = vmatprep.subr.mxu0 0.0
  %3251 = vmatpush1.msra.mxu0 0.0
  %3252 = vmatprep.mubr.f32.mxu0 0.0
  %3253 = vmatmul.mubr.f32.gmra.mrb[0].mxu0 %v3178
  %v3254 = vpop.f32.mrb[0].mxu0
  %v3255 = vadd.f32 0.0, %v3254
  %v3256 = vpop.f32.mrb[0].mxu0
  %3257 = vmatprep.mubr.f32.mxu0 0.0
  %3258 = vmatmul.mubr.f32.gmra.mrb[0].mxu0 %v3181
  %v3259 = vpop.f32.mrb[0].mxu0
  %v3260 = vadd.f32 0.0, %v3259
  %v3261 = vpop.f32.mrb[0].mxu0
  %3262 = vmatprep.mubr.f32.mxu0 0.0
  %3263 = vmatmul.mubr.f32.gmra.mrb[0].mxu0 %v3184
  %v3264 = vpop.f32.mrb[0].mxu0
  %v3265 = vadd.f32 0.0, %v3264
  %v3266 = vpop.f32.mrb[0].mxu0
  %3267 = vdwg.mxu0
  %v3269 = vsel %vm611, %v3255, 0
  %v3272 = vsel %vm611, %v3260, 0
  %v3275 = vsel %vm611, %v3265, 0
  %3277 = vmatprep.subr.mxu0 0.0
  %3278 = vmatpush1.msra.mxu0 %v2365
  %3279 = vmatprep.subr.mxu0 0.0
  %3280 = vmatpush1.msra.mxu0 0.0
  %3281 = vmatprep.subr.mxu0 0.0
  %3282 = vmatpush1.msra.mxu0 0.0
  %3283 = vmatprep.subr.mxu0 0.0
  %3284 = vmatpush1.msra.mxu0 0.0
  %3285 = vmatprep.subr.mxu0 0.0
  %3286 = vmatpush1.msra.mxu0 0.0
  %3287 = vmatprep.subr.mxu0 0.0
  %3288 = vmatpush1.msra.mxu0 0.0
  %3289 = vmatprep.subr.mxu0 0.0
  %3290 = vmatpush1.msra.mxu0 0.0
  %3291 = vmatprep.subr.mxu0 0.0
  %3292 = vmatpush1.msra.mxu0 0.0
  %3293 = vmatprep.subr.mxu0 0.0
  %3294 = vmatpush1.msra.mxu0 0.0
  %3295 = vmatprep.subr.mxu0 0.0
  %3296 = vmatpush1.msra.mxu0 0.0
  %3297 = vmatprep.subr.mxu0 0.0
  %3298 = vmatpush1.msra.mxu0 0.0
  %3299 = vmatprep.subr.mxu0 0.0
  %3300 = vmatpush1.msra.mxu0 0.0
  %3301 = vmatprep.subr.mxu0 0.0
  %3302 = vmatpush1.msra.mxu0 0.0
  %3303 = vmatprep.subr.mxu0 0.0
  %3304 = vmatpush1.msra.mxu0 0.0
  %3305 = vmatprep.subr.mxu0 0.0
  %3306 = vmatpush1.msra.mxu0 0.0
  %3307 = vmatprep.subr.mxu0 0.0
  %3308 = vmatpush1.msra.mxu0 0.0
  %3309 = vmatprep.subr.mxu0 0.0
  %3310 = vmatpush1.msra.mxu0 0.0
  %3311 = vmatprep.subr.mxu0 0.0
  %3312 = vmatpush1.msra.mxu0 0.0
  %3313 = vmatprep.subr.mxu0 0.0
  %3314 = vmatpush1.msra.mxu0 0.0
  %3315 = vmatprep.subr.mxu0 0.0
  %3316 = vmatpush1.msra.mxu0 0.0
  %3317 = vmatprep.subr.mxu0 0.0
  %3318 = vmatpush1.msra.mxu0 0.0
  %3319 = vmatprep.subr.mxu0 0.0
  %3320 = vmatpush1.msra.mxu0 0.0
  %3321 = vmatprep.subr.mxu0 0.0
  %3322 = vmatpush1.msra.mxu0 0.0
  %3323 = vmatprep.subr.mxu0 0.0
  %3324 = vmatpush1.msra.mxu0 0.0
  %3325 = vmatprep.subr.mxu0 0.0
  %3326 = vmatpush1.msra.mxu0 0.0
  %3327 = vmatprep.subr.mxu0 0.0
  %3328 = vmatpush1.msra.mxu0 0.0
  %3329 = vmatprep.subr.mxu0 0.0
  %3330 = vmatpush1.msra.mxu0 0.0
  %3331 = vmatprep.subr.mxu0 0.0
  %3332 = vmatpush1.msra.mxu0 0.0
  %3333 = vmatprep.subr.mxu0 0.0
  %3334 = vmatpush1.msra.mxu0 0.0
  %3335 = vmatprep.subr.mxu0 0.0
  %3336 = vmatpush1.msra.mxu0 0.0
  %3337 = vmatprep.subr.mxu0 0.0
  %3338 = vmatpush1.msra.mxu0 0.0
  %3339 = vmatprep.subr.mxu0 0.0
  %3340 = vmatpush1.msra.mxu0 0.0
  %3341 = vmatprep.mubr.f32.mxu0 0.0
  %3342 = vmatmul.mubr.f32.gmra.mrb[0].mxu0 %v3269
  %v3343 = vpop.f32.mrb[0].mxu0
  %v3344 = vadd.f32 0.0, %v3343
  %v3345 = vpop.f32.mrb[0].mxu0
  %3346 = vmatprep.mubr.f32.mxu0 0.0
  %3347 = vmatmul.mubr.f32.gmra.mrb[0].mxu0 %v3272
  %v3348 = vpop.f32.mrb[0].mxu0
  %v3349 = vadd.f32 0.0, %v3348
  %v3350 = vpop.f32.mrb[0].mxu0
  %3351 = vmatprep.mubr.f32.mxu0 0.0
  %3352 = vmatmul.mubr.f32.gmra.mrb[0].mxu0 %v3275
  %v3353 = vpop.f32.mrb[0].mxu0
  %v3354 = vadd.f32 0.0, %v3353
  %v3355 = vpop.f32.mrb[0].mxu0
  %3356 = vdwg.mxu0
  %v3357 = vadd.f32 %v3013, %v3344
  %v3358 = vadd.f32 %v3018, %v3349
  %v3359 = vadd.f32 %v3023, %v3354
  %3360 = vrot.lane.b32.xlu0 %v2349, 104
  %v3361 = vpop.permute.xlu0 %3360
  %3362 = vrot.lane.b32.xlu0 %v2354, 104
  %v3363 = vpop.permute.xlu0 %3362
  %3364 = vrot.lane.b32.xlu0 %v2359, 104
  %v3365 = vpop.permute.xlu0 %3364
  %3366 = vrot.lane.b32.xlu0 %v2349, 72
  %v3367 = vpop.permute.xlu0 %3366
  %3368 = vrot.lane.b32.xlu0 %v2354, 72
  %v3369 = vpop.permute.xlu0 %3368
  %3370 = vrot.lane.b32.xlu0 %v2359, 72
  %v3371 = vpop.permute.xlu0 %3370
  %v3372 = vsel %vm611, %v3361, 0
  %v3374 = vsel %vm611, %v3363, 0
  %v3376 = vsel %vm611, %v3365, 0
  %v3378 = vsel %vm611, %v3367, 0
  %v3380 = vsel %vm611, %v3369, 0
  %v3382 = vsel %vm611, %v3371, 0
  %3384 = vmatprep.subr.mxu0 0.0
  %3385 = vmatpush1.xpose.msra.mxu0 %v3378
  %3386 = vmatprep.subr.mxu0 0.0
  %3387 = vmatpush1.xpose.msra.mxu0 %v3380
  %3388 = vmatprep.subr.mxu0 0.0
  %3389 = vmatpush1.xpose.msra.mxu0 %v3382
  %3390 = vmatprep.subr.mxu0 0.0
  %3391 = vmatpush1.xpose.msra.mxu0 0.0
  %3392 = vmatprep.subr.mxu0 0.0
  %3393 = vmatpush1.xpose.msra.mxu0 0.0
  %3394 = vmatprep.subr.mxu0 0.0
  %3395 = vmatpush1.xpose.msra.mxu0 0.0
  %3396 = vmatprep.subr.mxu0 0.0
  %3397 = vmatpush1.xpose.msra.mxu0 0.0
  %3398 = vmatprep.subr.mxu0 0.0
  %3399 = vmatpush1.xpose.msra.mxu0 0.0
  %3400 = vmatprep.subr.mxu0 0.0
  %3401 = vmatpush1.xpose.msra.mxu0 0.0
  %3402 = vmatprep.subr.mxu0 0.0
  %3403 = vmatpush1.xpose.msra.mxu0 0.0
  %3404 = vmatprep.subr.mxu0 0.0
  %3405 = vmatpush1.xpose.msra.mxu0 0.0
  %3406 = vmatprep.subr.mxu0 0.0
  %3407 = vmatpush1.xpose.msra.mxu0 0.0
  %3408 = vmatprep.subr.mxu0 0.0
  %3409 = vmatpush1.xpose.msra.mxu0 0.0
  %3410 = vmatprep.subr.mxu0 0.0
  %3411 = vmatpush1.xpose.msra.mxu0 0.0
  %3412 = vmatprep.subr.mxu0 0.0
  %3413 = vmatpush1.xpose.msra.mxu0 0.0
  %3414 = vmatprep.subr.mxu0 0.0
  %3415 = vmatpush1.xpose.msra.mxu0 0.0
  %3416 = vmatprep.subr.mxu0 0.0
  %3417 = vmatpush1.xpose.msra.mxu0 0.0
  %3418 = vmatprep.subr.mxu0 0.0
  %3419 = vmatpush1.xpose.msra.mxu0 0.0
  %3420 = vmatprep.subr.mxu0 0.0
  %3421 = vmatpush1.xpose.msra.mxu0 0.0
  %3422 = vmatprep.subr.mxu0 0.0
  %3423 = vmatpush1.xpose.msra.mxu0 0.0
  %3424 = vmatprep.subr.mxu0 0.0
  %3425 = vmatpush1.xpose.msra.mxu0 0.0
  %3426 = vmatprep.subr.mxu0 0.0
  %3427 = vmatpush1.xpose.msra.mxu0 0.0
  %3428 = vmatprep.subr.mxu0 0.0
  %3429 = vmatpush1.xpose.msra.mxu0 0.0
  %3430 = vmatprep.subr.mxu0 0.0
  %3431 = vmatpush1.xpose.msra.mxu0 0.0
  %3432 = vmatprep.subr.mxu0 0.0
  %3433 = vmatpush1.xpose.msra.mxu0 0.0
  %3434 = vmatprep.subr.mxu0 0.0
  %3435 = vmatpush1.xpose.msra.mxu0 0.0
  %3436 = vmatprep.subr.mxu0 0.0
  %3437 = vmatpush1.xpose.msra.mxu0 0.0
  %3438 = vmatprep.subr.mxu0 0.0
  %3439 = vmatpush1.xpose.msra.mxu0 0.0
  %3440 = vmatprep.subr.mxu0 0.0
  %3441 = vmatpush1.xpose.msra.mxu0 0.0
  %3442 = vmatprep.subr.mxu0 0.0
  %3443 = vmatpush1.xpose.msra.mxu0 0.0
  %3444 = vmatprep.subr.mxu0 0.0
  %3445 = vmatpush1.xpose.msra.mxu0 0.0
  %3446 = vmatprep.subr.mxu0 0.0
  %3447 = vmatpush1.xpose.msra.mxu0 0.0
  %3448 = vmatprep.mubr.f32.mxu0 0.0
  %3449 = vmatmul.mubr.f32.gmra.mrb[0].mxu0 %v3372
  %v3450 = vpop.f32.mrb[0].mxu0
  %v3451 = vadd.f32 0.0, %v3450
  %v3452 = vpop.f32.mrb[0].mxu0
  %3453 = vmatprep.mubr.f32.mxu0 0.0
  %3454 = vmatmul.mubr.f32.gmra.mrb[0].mxu0 %v3374
  %v3455 = vpop.f32.mrb[0].mxu0
  %v3456 = vadd.f32 0.0, %v3455
  %v3457 = vpop.f32.mrb[0].mxu0
  %3458 = vmatprep.mubr.f32.mxu0 0.0
  %3459 = vmatmul.mubr.f32.gmra.mrb[0].mxu0 %v3376
  %v3460 = vpop.f32.mrb[0].mxu0
  %v3461 = vadd.f32 0.0, %v3460
  %v3462 = vpop.f32.mrb[0].mxu0
  %3463 = vdwg.mxu0
  %v3464 = vmul.f32 %v3451, 0.35355338
  %v3465 = vmul.f32 %v3456, 0.35355338
  %v3466 = vmul.f32 %v3461, 0.35355338
  %v3467 = vadd.f32 %v3464, %v455
  %v3468 = vadd.f32 %v3465, %v456
  %v3469 = vadd.f32 %v3466, %v457
  %v3470 = vsel %vm710, %v3467, -inf
  %3471 = vmax.xlane.f32.xlu0 %v3470
  %v3472 = vpop.xlane.xlu0 %3471
  %v3473 = vsel %vm710, %v3468, -inf
  %3474 = vmax.xlane.f32.xlu0 %v3473
  %v3475 = vpop.xlane.xlu0 %3474
  %v3476 = vsel %vm717, %v3469, -inf
  %3477 = vmax.xlane.f32.xlu0 %v3476
  %v3478 = vpop.xlane.xlu0 %3477
  %v3479 = vsub.f32 %v3467, %v3472
  %v3480 = vsub.f32 %v3468, %v3475
  %v3481 = vsub.f32 %v3469, %v3478
  %v3482 = vmul.f32 %v3479, 1.442695
  %v3483 = vpow.pop %v3482
  %v3484 = vmul.f32 %v3480, 1.442695
  %v3485 = vpow.pop %v3484
  %v3486 = vmul.f32 %v3481, 1.442695
  %v3487 = vpow.pop %v3486
  %v3488 = vsel %vm710, %v3483, 0.0
  %3489 = vadd.xlane.f32.xlu0 %v3488
  %v3490 = vpop.xlane.xlu0 %3489
  %v3491 = vsel %vm710, %v3485, 0.0
  %3492 = vadd.xlane.f32.xlu0 %v3491
  %v3493 = vpop.xlane.xlu0 %3492
  %v3494 = vsel %vm717, %v3487, 0.0
  %3495 = vadd.xlane.f32.xlu0 %v3494
  %v3496 = vpop.xlane.xlu0 %3495
  %v3497 = vrcp.pop %v3490
  %v3498 = vrcp.pop %v3493
  %v3499 = vrcp.pop %v3496
  %v3500 = vmul.f32 %v3483, %v3497
  %v3501 = vmul.f32 %v3485, %v3498
  %v3502 = vmul.f32 %v3487, %v3499
  %3503 = vrot.lane.b32.xlu0 %v2349, 40
  %v3504 = vpop.permute.xlu0 %3503
  %3505 = vrot.lane.b32.xlu0 %v2354, 40
  %v3506 = vpop.permute.xlu0 %3505
  %3507 = vrot.lane.b32.xlu0 %v2359, 40
  %v3508 = vpop.permute.xlu0 %3507
  %v3512 = vsel %vm710, %v3500, 0
  %v3515 = vsel %vm710, %v3501, 0
  %v3518 = vsel %vm710, %v3502, 0
  %v3520 = vsel %vm762, %v3508, 0
  %3522 = vmatprep.subr.mxu0 0.0
  %3523 = vmatpush1.msra.mxu0 %v3504
  %3524 = vmatprep.subr.mxu0 0.0
  %3525 = vmatpush1.msra.mxu0 %v3506
  %3526 = vmatprep.subr.mxu0 0.0
  %3527 = vmatpush1.msra.mxu0 %v3520
  %3528 = vmatprep.subr.mxu0 0.0
  %3529 = vmatpush1.msra.mxu0 0.0
  %3530 = vmatprep.subr.mxu0 0.0
  %3531 = vmatpush1.msra.mxu0 0.0
  %3532 = vmatprep.subr.mxu0 0.0
  %3533 = vmatpush1.msra.mxu0 0.0
  %3534 = vmatprep.subr.mxu0 0.0
  %3535 = vmatpush1.msra.mxu0 0.0
  %3536 = vmatprep.subr.mxu0 0.0
  %3537 = vmatpush1.msra.mxu0 0.0
  %3538 = vmatprep.subr.mxu0 0.0
  %3539 = vmatpush1.msra.mxu0 0.0
  %3540 = vmatprep.subr.mxu0 0.0
  %3541 = vmatpush1.msra.mxu0 0.0
  %3542 = vmatprep.subr.mxu0 0.0
  %3543 = vmatpush1.msra.mxu0 0.0
  %3544 = vmatprep.subr.mxu0 0.0
  %3545 = vmatpush1.msra.mxu0 0.0
  %3546 = vmatprep.subr.mxu0 0.0
  %3547 = vmatpush1.msra.mxu0 0.0
  %3548 = vmatprep.subr.mxu0 0.0
  %3549 = vmatpush1.msra.mxu0 0.0
  %3550 = vmatprep.subr.mxu0 0.0
  %3551 = vmatpush1.msra.mxu0 0.0
  %3552 = vmatprep.subr.mxu0 0.0
  %3553 = vmatpush1.msra.mxu0 0.0
  %3554 = vmatprep.subr.mxu0 0.0
  %3555 = vmatpush1.msra.mxu0 0.0
  %3556 = vmatprep.subr.mxu0 0.0
  %3557 = vmatpush1.msra.mxu0 0.0
  %3558 = vmatprep.subr.mxu0 0.0
  %3559 = vmatpush1.msra.mxu0 0.0
  %3560 = vmatprep.subr.mxu0 0.0
  %3561 = vmatpush1.msra.mxu0 0.0
  %3562 = vmatprep.subr.mxu0 0.0
  %3563 = vmatpush1.msra.mxu0 0.0
  %3564 = vmatprep.subr.mxu0 0.0
  %3565 = vmatpush1.msra.mxu0 0.0
  %3566 = vmatprep.subr.mxu0 0.0
  %3567 = vmatpush1.msra.mxu0 0.0
  %3568 = vmatprep.subr.mxu0 0.0
  %3569 = vmatpush1.msra.mxu0 0.0
  %3570 = vmatprep.subr.mxu0 0.0
  %3571 = vmatpush1.msra.mxu0 0.0
  %3572 = vmatprep.subr.mxu0 0.0
  %3573 = vmatpush1.msra.mxu0 0.0
  %3574 = vmatprep.subr.mxu0 0.0
  %3575 = vmatpush1.msra.mxu0 0.0
  %3576 = vmatprep.subr.mxu0 0.0
  %3577 = vmatpush1.msra.mxu0 0.0
  %3578 = vmatprep.subr.mxu0 0.0
  %3579 = vmatpush1.msra.mxu0 0.0
  %3580 = vmatprep.subr.mxu0 0.0
  %3581 = vmatpush1.msra.mxu0 0.0
  %3582 = vmatprep.subr.mxu0 0.0
  %3583 = vmatpush1.msra.mxu0 0.0
  %3584 = vmatprep.subr.mxu0 0.0
  %3585 = vmatpush1.msra.mxu0 0.0
  %3586 = vmatprep.mubr.f32.mxu0 0.0
  %3587 = vmatmul.mubr.f32.gmra.mrb[0].mxu0 %v3512
  %v3588 = vpop.f32.mrb[0].mxu0
  %v3589 = vadd.f32 0.0, %v3588
  %v3590 = vpop.f32.mrb[0].mxu0
  %3591 = vmatprep.mubr.f32.mxu0 0.0
  %3592 = vmatmul.mubr.f32.gmra.mrb[0].mxu0 %v3515
  %v3593 = vpop.f32.mrb[0].mxu0
  %v3594 = vadd.f32 0.0, %v3593
  %v3595 = vpop.f32.mrb[0].mxu0
  %3596 = vmatprep.mubr.f32.mxu0 0.0
  %3597 = vmatmul.mubr.f32.gmra.mrb[0].mxu0 %v3518
  %v3598 = vpop.f32.mrb[0].mxu0
  %v3599 = vadd.f32 0.0, %v3598
  %v3600 = vpop.f32.mrb[0].mxu0
  %3601 = vdwg.mxu0
  %v3603 = vsel %vm611, %v3589, 0
  %v3606 = vsel %vm611, %v3594, 0
  %v3609 = vsel %vm611, %v3599, 0
  %3611 = vmatprep.subr.mxu0 0.0
  %3612 = vmatpush1.msra.mxu0 %v2366
  %3613 = vmatprep.subr.mxu0 0.0
  %3614 = vmatpush1.msra.mxu0 0.0
  %3615 = vmatprep.subr.mxu0 0.0
  %3616 = vmatpush1.msra.mxu0 0.0
  %3617 = vmatprep.subr.mxu0 0.0
  %3618 = vmatpush1.msra.mxu0 0.0
  %3619 = vmatprep.subr.mxu0 0.0
  %3620 = vmatpush1.msra.mxu0 0.0
  %3621 = vmatprep.subr.mxu0 0.0
  %3622 = vmatpush1.msra.mxu0 0.0
  %3623 = vmatprep.subr.mxu0 0.0
  %3624 = vmatpush1.msra.mxu0 0.0
  %3625 = vmatprep.subr.mxu0 0.0
  %3626 = vmatpush1.msra.mxu0 0.0
  %3627 = vmatprep.subr.mxu0 0.0
  %3628 = vmatpush1.msra.mxu0 0.0
  %3629 = vmatprep.subr.mxu0 0.0
  %3630 = vmatpush1.msra.mxu0 0.0
  %3631 = vmatprep.subr.mxu0 0.0
  %3632 = vmatpush1.msra.mxu0 0.0
  %3633 = vmatprep.subr.mxu0 0.0
  %3634 = vmatpush1.msra.mxu0 0.0
  %3635 = vmatprep.subr.mxu0 0.0
  %3636 = vmatpush1.msra.mxu0 0.0
  %3637 = vmatprep.subr.mxu0 0.0
  %3638 = vmatpush1.msra.mxu0 0.0
  %3639 = vmatprep.subr.mxu0 0.0
  %3640 = vmatpush1.msra.mxu0 0.0
  %3641 = vmatprep.subr.mxu0 0.0
  %3642 = vmatpush1.msra.mxu0 0.0
  %3643 = vmatprep.subr.mxu0 0.0
  %3644 = vmatpush1.msra.mxu0 0.0
  %3645 = vmatprep.subr.mxu0 0.0
  %3646 = vmatpush1.msra.mxu0 0.0
  %3647 = vmatprep.subr.mxu0 0.0
  %3648 = vmatpush1.msra.mxu0 0.0
  %3649 = vmatprep.subr.mxu0 0.0
  %3650 = vmatpush1.msra.mxu0 0.0
  %3651 = vmatprep.subr.mxu0 0.0
  %3652 = vmatpush1.msra.mxu0 0.0
  %3653 = vmatprep.subr.mxu0 0.0
  %3654 = vmatpush1.msra.mxu0 0.0
  %3655 = vmatprep.subr.mxu0 0.0
  %3656 = vmatpush1.msra.mxu0 0.0
  %3657 = vmatprep.subr.mxu0 0.0
  %3658 = vmatpush1.msra.mxu0 0.0
  %3659 = vmatprep.subr.mxu0 0.0
  %3660 = vmatpush1.msra.mxu0 0.0
  %3661 = vmatprep.subr.mxu0 0.0
  %3662 = vmatpush1.msra.mxu0 0.0
  %3663 = vmatprep.subr.mxu0 0.0
  %3664 = vmatpush1.msra.mxu0 0.0
  %3665 = vmatprep.subr.mxu0 0.0
  %3666 = vmatpush1.msra.mxu0 0.0
  %3667 = vmatprep.subr.mxu0 0.0
  %3668 = vmatpush1.msra.mxu0 0.0
  %3669 = vmatprep.subr.mxu0 0.0
  %3670 = vmatpush1.msra.mxu0 0.0
  %3671 = vmatprep.subr.mxu0 0.0
  %3672 = vmatpush1.msra.mxu0 0.0
  %3673 = vmatprep.subr.mxu0 0.0
  %3674 = vmatpush1.msra.mxu0 0.0
  %3675 = vmatprep.mubr.f32.mxu0 0.0
  %3676 = vmatmul.mubr.f32.gmra.mrb[0].mxu0 %v3603
  %v3677 = vpop.f32.mrb[0].mxu0
  %v3678 = vadd.f32 0.0, %v3677
  %v3679 = vpop.f32.mrb[0].mxu0
  %3680 = vmatprep.mubr.f32.mxu0 0.0
  %3681 = vmatmul.mubr.f32.gmra.mrb[0].mxu0 %v3606
  %v3682 = vpop.f32.mrb[0].mxu0
  %v3683 = vadd.f32 0.0, %v3682
  %v3684 = vpop.f32.mrb[0].mxu0
  %3685 = vmatprep.mubr.f32.mxu0 0.0
  %3686 = vmatmul.mubr.f32.gmra.mrb[0].mxu0 %v3609
  %v3687 = vpop.f32.mrb[0].mxu0
  %v3688 = vadd.f32 0.0, %v3687
  %v3689 = vpop.f32.mrb[0].mxu0
  %3690 = vdwg.mxu0
  %v3691 = vadd.f32 %v3357, %v3678
  %v3692 = vadd.f32 %v3358, %v3683
  %v3693 = vadd.f32 %v3359, %v3688
  %v3694 = vadd.f32 %v2218, %v3691
  %v3695 = vadd.f32 %v2219, %v3692
  %v3696 = vadd.f32 %v2220, %v3693
  %s3697 = scalar_lea.vmem %s13, 1
  %v3698 = vld [vmem:[%s3697] sm:$0x1]
  %v3700 = vlaneseq
  %v3701 = vshrl.u32 %v3700, 7
  %v3702 = vsub.s32 0, %v3701
  %v3703 = vrot.slane %v3698, %v3702
  %v3705 = vadd.f32 %v3694, %v3703
  %v3706 = vadd.f32 %v3695, %v3703
  %v3707 = vadd.f32 %v3696, %v3703
  %v3708 = vsel %vm368, %v3705, 0.0
  %3709 = vadd.xlane.f32.xlu0 %v3708
  %v3710 = vpop.xlane.xlu0 %3709
  %v3711 = vsel %vm368, %v3706, 0.0
  %3712 = vadd.xlane.f32.xlu0 %v3711
  %v3713 = vpop.xlane.xlu0 %3712
  %v3714 = vsel %vm442, %v3707, 0.0
  %3715 = vadd.xlane.f32.xlu0 %v3714
  %v3716 = vpop.xlane.xlu0 %3715
  %v3717 = vmul.f32 %v3710, %v467
  %v3718 = vmul.f32 %v3713, %v467
  %v3719 = vmul.f32 %v3716, %v467
  %v3720 = vsub.f32 %v3705, %v3717
  %v3721 = vsub.f32 %v3706, %v3718
  %v3722 = vsub.f32 %v3707, %v3719
  %v3723 = vmul.f32 %v3720, %v3720
  %v3724 = vmul.f32 %v3721, %v3721
  %v3725 = vmul.f32 %v3722, %v3722
  %v3726 = vsel %vm368, %v3723, 0.0
  %3727 = vadd.xlane.f32.xlu0 %v3726
  %v3728 = vpop.xlane.xlu0 %3727
  %v3729 = vsel %vm368, %v3724, 0.0
  %3730 = vadd.xlane.f32.xlu0 %v3729
  %v3731 = vpop.xlane.xlu0 %3730
  %v3732 = vsel %vm442, %v3725, 0.0
  %3733 = vadd.xlane.f32.xlu0 %v3732
  %v3734 = vpop.xlane.xlu0 %3733
  %v3735 = vmul.f32 %v3728, %v467
  %v3736 = vmul.f32 %v3731, %v467
  %v3737 = vmul.f32 %v3734, %v467
  %v3738 = vadd.f32 %v3735, 1e-06
  %v3739 = vadd.f32 %v3736, 1e-06
  %v3740 = vadd.f32 %v3737, 1e-06
  %v3741 = vrsqrt.pop %v3738
  %v3742 = vrsqrt.pop %v3739
  %v3743 = vrsqrt.pop %v3740
  %v3744 = vmul.f32 %v3720, %v3741
  %v3745 = vmul.f32 %v3721, %v3742
  %v3746 = vmul.f32 %v3722, %v3743
  %s3747 = scalar_lea.vmem %s14, 32
  %v3748 = vld [vmem:[%s3747] sm:$0xff]
  %v3749 = vld [vmem:[%s3747 + $0x8] sm:$0xff]
  %v3750 = vld [vmem:[%s3747 + $0x10] sm:$0xff]
  %v3751 = vld [vmem:[%s3747 + $0x18] sm:$0xff]
  %s3752 = scalar_lea.vmem %s15, 1
  %v3753 = vld [vmem:[%s3752] sm:$0x1]
  %v3755 = vlaneseq
  %v3756 = vshrl.u32 %v3755, 7
  %v3757 = vsub.s32 0, %v3756
  %v3758 = vrot.slane %v3753, %v3757
  %v3761 = vsel %vm368, %v3744, 0
  %v3764 = vsel %vm368, %v3745, 0
  %v3767 = vsel %vm368, %v3746, 0
  %3769 = vmatprep.subr.mxu0 0.0
  %3770 = vmatpush1.msra.mxu0 %v3748
  %3771 = vmatprep.subr.mxu0 0.0
  %3772 = vmatpush1.msra.mxu0 %v3749
  %3773 = vmatprep.subr.mxu0 0.0
  %3774 = vmatpush1.msra.mxu0 %v3750
  %3775 = vmatprep.subr.mxu0 0.0
  %3776 = vmatpush1.msra.mxu0 %v3751
  %3777 = vmatprep.subr.mxu0 0.0
  %3778 = vmatpush1.msra.mxu0 0.0
  %3779 = vmatprep.subr.mxu0 0.0
  %3780 = vmatpush1.msra.mxu0 0.0
  %3781 = vmatprep.subr.mxu0 0.0
  %3782 = vmatpush1.msra.mxu0 0.0
  %3783 = vmatprep.subr.mxu0 0.0
  %3784 = vmatpush1.msra.mxu0 0.0
  %3785 = vmatprep.subr.mxu0 0.0
  %3786 = vmatpush1.msra.mxu0 0.0
  %3787 = vmatprep.subr.mxu0 0.0
  %3788 = vmatpush1.msra.mxu0 0.0
  %3789 = vmatprep.subr.mxu0 0.0
  %3790 = vmatpush1.msra.mxu0 0.0
  %3791 = vmatprep.subr.mxu0 0.0
  %3792 = vmatpush1.msra.mxu0 0.0
  %3793 = vmatprep.subr.mxu0 0.0
  %3794 = vmatpush1.msra.mxu0 0.0
  %3795 = vmatprep.subr.mxu0 0.0
  %3796 = vmatpush1.msra.mxu0 0.0
  %3797 = vmatprep.subr.mxu0 0.0
  %3798 = vmatpush1.msra.mxu0 0.0
  %3799 = vmatprep.subr.mxu0 0.0
  %3800 = vmatpush1.msra.mxu0 0.0
  %3801 = vmatprep.subr.mxu0 0.0
  %3802 = vmatpush1.msra.mxu0 0.0
  %3803 = vmatprep.subr.mxu0 0.0
  %3804 = vmatpush1.msra.mxu0 0.0
  %3805 = vmatprep.subr.mxu0 0.0
  %3806 = vmatpush1.msra.mxu0 0.0
  %3807 = vmatprep.subr.mxu0 0.0
  %3808 = vmatpush1.msra.mxu0 0.0
  %3809 = vmatprep.subr.mxu0 0.0
  %3810 = vmatpush1.msra.mxu0 0.0
  %3811 = vmatprep.subr.mxu0 0.0
  %3812 = vmatpush1.msra.mxu0 0.0
  %3813 = vmatprep.subr.mxu0 0.0
  %3814 = vmatpush1.msra.mxu0 0.0
  %3815 = vmatprep.subr.mxu0 0.0
  %3816 = vmatpush1.msra.mxu0 0.0
  %3817 = vmatprep.subr.mxu0 0.0
  %3818 = vmatpush1.msra.mxu0 0.0
  %3819 = vmatprep.subr.mxu0 0.0
  %3820 = vmatpush1.msra.mxu0 0.0
  %3821 = vmatprep.subr.mxu0 0.0
  %3822 = vmatpush1.msra.mxu0 0.0
  %3823 = vmatprep.subr.mxu0 0.0
  %3824 = vmatpush1.msra.mxu0 0.0
  %3825 = vmatprep.subr.mxu0 0.0
  %3826 = vmatpush1.msra.mxu0 0.0
  %3827 = vmatprep.subr.mxu0 0.0
  %3828 = vmatpush1.msra.mxu0 0.0
  %3829 = vmatprep.subr.mxu0 0.0
  %3830 = vmatpush1.msra.mxu0 0.0
  %3831 = vmatprep.subr.mxu0 0.0
  %3832 = vmatpush1.msra.mxu0 0.0
  %3833 = vmatprep.mubr.f32.mxu0 0.0
  %3834 = vmatmul.mubr.f32.gmra.mrb[0].mxu0 %v3761
  %v3835 = vpop.f32.mrb[0].mxu0
  %v3836 = vadd.f32 %v3758, %v3835
  %v3837 = vpop.f32.mrb[0].mxu0
  %3838 = vmatprep.mubr.f32.mxu0 0.0
  %3839 = vmatmul.mubr.f32.gmra.mrb[0].mxu0 %v3764
  %v3840 = vpop.f32.mrb[0].mxu0
  %v3841 = vadd.f32 %v3758, %v3840
  %v3842 = vpop.f32.mrb[0].mxu0
  %3843 = vmatprep.mubr.f32.mxu0 0.0
  %3844 = vmatmul.mubr.f32.gmra.mrb[0].mxu0 %v3767
  %v3845 = vpop.f32.mrb[0].mxu0
  %v3846 = vadd.f32 %v3758, %v3845
  %v3847 = vpop.f32.mrb[0].mxu0
  %3848 = vdwg.mxu0
  %v3849 = vmul.f32 %v3836, %v3836
  %v3850 = vmul.f32 %v3841, %v3841
  %v3851 = vmul.f32 %v3846, %v3846
  %v3852 = vmul.f32 %v3836, %v3849
  %v3853 = vmul.f32 %v3841, %v3850
  %v3854 = vmul.f32 %v3846, %v3851
  %v3855 = vmul.f32 %v3852, 0.044715
  %v3856 = vmul.f32 %v3853, 0.044715
  %v3857 = vmul.f32 %v3854, 0.044715
  %v3858 = vadd.f32 %v3836, %v3855
  %v3859 = vadd.f32 %v3841, %v3856
  %v3860 = vadd.f32 %v3846, %v3857
  %v3861 = vmul.f32 %v3858, 0.7978846
  %v3862 = vmul.f32 %v3859, 0.7978846
  %v3863 = vmul.f32 %v3860, 0.7978846
  %v3864 = vtanh.pop %v3861
  %v3865 = vtanh.pop %v3862
  %v3866 = vtanh.pop %v3863
  %v3867 = vadd.f32 %v3864, 1.0
  %v3868 = vadd.f32 %v3865, 1.0
  %v3869 = vadd.f32 %v3866, 1.0
  %v3870 = vmul.f32 %v3867, 0.5
  %v3871 = vmul.f32 %v3868, 0.5
  %v3872 = vmul.f32 %v3869, 0.5
  %v3873 = vmul.f32 %v3836, %v3870
  %v3874 = vmul.f32 %v3841, %v3871
  %v3875 = vmul.f32 %v3846, %v3872
  %s3876 = scalar_lea.vmem %s16, 128
  %v3877 = vld [vmem:[%s3876] sm:$0xff]
  %v3878 = vld [vmem:[%s3876 + $0x8] sm:$0xff]
  %v3879 = vld [vmem:[%s3876 + $0x10] sm:$0xff]
  %v3880 = vld [vmem:[%s3876 + $0x18] sm:$0xff]
  %v3881 = vld [vmem:[%s3876 + $0x20] sm:$0xff]
  %v3882 = vld [vmem:[%s3876 + $0x28] sm:$0xff]
  %v3883 = vld [vmem:[%s3876 + $0x30] sm:$0xff]
  %v3884 = vld [vmem:[%s3876 + $0x38] sm:$0xff]
  %v3885 = vld [vmem:[%s3876 + $0x40] sm:$0xff]
  %v3886 = vld [vmem:[%s3876 + $0x48] sm:$0xff]
  %v3887 = vld [vmem:[%s3876 + $0x50] sm:$0xff]
  %v3888 = vld [vmem:[%s3876 + $0x58] sm:$0xff]
  %v3889 = vld [vmem:[%s3876 + $0x60] sm:$0xff]
  %v3890 = vld [vmem:[%s3876 + $0x68] sm:$0xff]
  %v3891 = vld [vmem:[%s3876 + $0x70] sm:$0xff]
  %v3892 = vld [vmem:[%s3876 + $0x78] sm:$0xff]
  %3893 = vmatprep.subr.mxu0 0.0
  %3894 = vmatpush1.msra.mxu0 %v3877
  %3895 = vmatprep.subr.mxu0 0.0
  %3896 = vmatpush1.msra.mxu0 %v3878
  %3897 = vmatprep.subr.mxu0 0.0
  %3898 = vmatpush1.msra.mxu0 %v3879
  %3899 = vmatprep.subr.mxu0 0.0
  %3900 = vmatpush1.msra.mxu0 %v3880
  %3901 = vmatprep.subr.mxu0 0.0
  %3902 = vmatpush1.msra.mxu0 %v3881
  %3903 = vmatprep.subr.mxu0 0.0
  %3904 = vmatpush1.msra.mxu0 %v3882
  %3905 = vmatprep.subr.mxu0 0.0
  %3906 = vmatpush1.msra.mxu0 %v3883
  %3907 = vmatprep.subr.mxu0 0.0
  %3908 = vmatpush1.msra.mxu0 %v3884
  %3909 = vmatprep.subr.mxu0 0.0
  %3910 = vmatpush1.msra.mxu0 %v3885
  %3911 = vmatprep.subr.mxu0 0.0
  %3912 = vmatpush1.msra.mxu0 %v3886
  %3913 = vmatprep.subr.mxu0 0.0
  %3914 = vmatpush1.msra.mxu0 %v3887
  %3915 = vmatprep.subr.mxu0 0.0
  %3916 = vmatpush1.msra.mxu0 %v3888
  %3917 = vmatprep.subr.mxu0 0.0
  %3918 = vmatpush1.msra.mxu0 %v3889
  %3919 = vmatprep.subr.mxu0 0.0
  %3920 = vmatpush1.msra.mxu0 %v3890
  %3921 = vmatprep.subr.mxu0 0.0
  %3922 = vmatpush1.msra.mxu0 %v3891
  %3923 = vmatprep.subr.mxu0 0.0
  %3924 = vmatpush1.msra.mxu0 %v3892
  %3925 = vmatprep.subr.mxu0 0.0
  %3926 = vmatpush1.msra.mxu0 0.0
  %3927 = vmatprep.subr.mxu0 0.0
  %3928 = vmatpush1.msra.mxu0 0.0
  %3929 = vmatprep.subr.mxu0 0.0
  %3930 = vmatpush1.msra.mxu0 0.0
  %3931 = vmatprep.subr.mxu0 0.0
  %3932 = vmatpush1.msra.mxu0 0.0
  %3933 = vmatprep.subr.mxu0 0.0
  %3934 = vmatpush1.msra.mxu0 0.0
  %3935 = vmatprep.subr.mxu0 0.0
  %3936 = vmatpush1.msra.mxu0 0.0
  %3937 = vmatprep.subr.mxu0 0.0
  %3938 = vmatpush1.msra.mxu0 0.0
  %3939 = vmatprep.subr.mxu0 0.0
  %3940 = vmatpush1.msra.mxu0 0.0
  %3941 = vmatprep.subr.mxu0 0.0
  %3942 = vmatpush1.msra.mxu0 0.0
  %3943 = vmatprep.subr.mxu0 0.0
  %3944 = vmatpush1.msra.mxu0 0.0
  %3945 = vmatprep.subr.mxu0 0.0
  %3946 = vmatpush1.msra.mxu0 0.0
  %3947 = vmatprep.subr.mxu0 0.0
  %3948 = vmatpush1.msra.mxu0 0.0
  %3949 = vmatprep.subr.mxu0 0.0
  %3950 = vmatpush1.msra.mxu0 0.0
  %3951 = vmatprep.subr.mxu0 0.0
  %3952 = vmatpush1.msra.mxu0 0.0
  %3953 = vmatprep.subr.mxu0 0.0
  %3954 = vmatpush1.msra.mxu0 0.0
  %3955 = vmatprep.subr.mxu0 0.0
  %3956 = vmatpush1.msra.mxu0 0.0
  %3957 = vmatprep.mubr.f32.mxu0 0.0
  %3958 = vmatmul.mubr.f32.gmra.mrb[0].mxu0 %v3873
  %v3959 = vpop.f32.mrb[0].mxu0
  %v3960 = vadd.f32 0.0, %v3959
  %v3961 = vpop.f32.mrb[0].mxu0
  %3962 = vmatprep.mubr.f32.mxu0 0.0
  %3963 = vmatmul.mubr.f32.gmra.mrb[0].mxu0 %v3874
  %v3964 = vpop.f32.mrb[0].mxu0
  %v3965 = vadd.f32 0.0, %v3964
  %v3966 = vpop.f32.mrb[0].mxu0
  %3967 = vmatprep.mubr.f32.mxu0 0.0
  %3968 = vmatmul.mubr.f32.gmra.mrb[0].mxu0 %v3875
  %v3969 = vpop.f32.mrb[0].mxu0
  %v3970 = vadd.f32 0.0, %v3969
  %v3971 = vpop.f32.mrb[0].mxu0
  %3972 = vdwg.mxu0
  %v3973 = vadd.f32 %v3705, %v3960
  %v3974 = vadd.f32 %v3706, %v3965
  %v3975 = vadd.f32 %v3707, %v3970
  %s3976 = scalar_lea.vmem %s17, 1
  %v3977 = vld [vmem:[%s3976] sm:$0x1]
  %v3979 = vlaneseq
  %v3980 = vshrl.u32 %v3979, 7
  %v3981 = vsub.s32 0, %v3980
  %v3982 = vrot.slane %v3977, %v3981
  %v3984 = vadd.f32 %v3973, %v3982
  %v3985 = vadd.f32 %v3974, %v3982
  %v3986 = vadd.f32 %v3975, %v3982
  %v3987 = vsel %vm368, %v3984, 0.0
  %3988 = vadd.xlane.f32.xlu0 %v3987
  %v3989 = vpop.xlane.xlu0 %3988
  %v3990 = vsel %vm368, %v3985, 0.0
  %3991 = vadd.xlane.f32.xlu0 %v3990
  %v3992 = vpop.xlane.xlu0 %3991
  %v3993 = vsel %vm442, %v3986, 0.0
  %3994 = vadd.xlane.f32.xlu0 %v3993
  %v3995 = vpop.xlane.xlu0 %3994
  %v3996 = vmul.f32 %v3989, %v467
  %v3997 = vmul.f32 %v3992, %v467
  %v3998 = vmul.f32 %v3995, %v467
  %v3999 = vsub.f32 %v3984, %v3996
  %v4000 = vsub.f32 %v3985, %v3997
  %v4001 = vsub.f32 %v3986, %v3998
  %v4002 = vmul.f32 %v3999, %v3999
  %v4003 = vmul.f32 %v4000, %v4000
  %v4004 = vmul.f32 %v4001, %v4001
  %v4005 = vsel %vm368, %v4002, 0.0
  %4006 = vadd.xlane.f32.xlu0 %v4005
  %v4007 = vpop.xlane.xlu0 %4006
  %v4008 = vsel %vm368, %v4003, 0.0
  %4009 = vadd.xlane.f32.xlu0 %v4008
  %v4010 = vpop.xlane.xlu0 %4009
  %v4011 = vsel %vm442, %v4004, 0.0
  %4012 = vadd.xlane.f32.xlu0 %v4011
  %v4013 = vpop.xlane.xlu0 %4012
  %v4014 = vmul.f32 %v4007, %v467
  %v4015 = vmul.f32 %v4010, %v467
  %v4016 = vmul.f32 %v4013, %v467
  %v4017 = vadd.f32 %v4014, 1e-06
  %v4018 = vadd.f32 %v4015, 1e-06
  %v4019 = vadd.f32 %v4016, 1e-06
  %v4020 = vrsqrt.pop %v4017
  %v4021 = vrsqrt.pop %v4018
  %v4022 = vrsqrt.pop %v4019
  %v4023 = vmul.f32 %v3999, %v4020
  %v4024 = vmul.f32 %v4000, %v4021
  %v4025 = vmul.f32 %v4001, %v4022
  %v4026 = vld [vmem:[%s18] sm:$0xff]
  %v4027 = vld [vmem:[%s18 + $0x8] sm:$0xff]
  %v4028 = vld [vmem:[%s18 + $0x10] sm:$0xff]
  %v4029 = vld [vmem:[%s18 + $0x18] sm:$0xff]
  %v4030 = vld [vmem:[%s19] sm:$0x1]
  %v4032 = vlaneseq
  %v4033 = vshrl.u32 %v4032, 7
  %v4034 = vsub.s32 0, %v4033
  %v4035 = vrot.slane %v4030, %v4034
  %v4038 = vsel %vm368, %v4023, 0
  %v4041 = vsel %vm368, %v4024, 0
  %v4044 = vsel %vm368, %v4025, 0
  %4046 = vmatprep.subr.mxu0 0.0
  %4047 = vmatpush1.msra.mxu0 %v4026
  %4048 = vmatprep.subr.mxu0 0.0
  %4049 = vmatpush1.msra.mxu0 %v4027
  %4050 = vmatprep.subr.mxu0 0.0
  %4051 = vmatpush1.msra.mxu0 %v4028
  %4052 = vmatprep.subr.mxu0 0.0
  %4053 = vmatpush1.msra.mxu0 %v4029
  %4054 = vmatprep.subr.mxu0 0.0
  %4055 = vmatpush1.msra.mxu0 0.0
  %4056 = vmatprep.subr.mxu0 0.0
  %4057 = vmatpush1.msra.mxu0 0.0
  %4058 = vmatprep.subr.mxu0 0.0
  %4059 = vmatpush1.msra.mxu0 0.0
  %4060 = vmatprep.subr.mxu0 0.0
  %4061 = vmatpush1.msra.mxu0 0.0
  %4062 = vmatprep.subr.mxu0 0.0
  %4063 = vmatpush1.msra.mxu0 0.0
  %4064 = vmatprep.subr.mxu0 0.0
  %4065 = vmatpush1.msra.mxu0 0.0
  %4066 = vmatprep.subr.mxu0 0.0
  %4067 = vmatpush1.msra.mxu0 0.0
  %4068 = vmatprep.subr.mxu0 0.0
  %4069 = vmatpush1.msra.mxu0 0.0
  %4070 = vmatprep.subr.mxu0 0.0
  %4071 = vmatpush1.msra.mxu0 0.0
  %4072 = vmatprep.subr.mxu0 0.0
  %4073 = vmatpush1.msra.mxu0 0.0
  %4074 = vmatprep.subr.mxu0 0.0
  %4075 = vmatpush1.msra.mxu0 0.0
  %4076 = vmatprep.subr.mxu0 0.0
  %4077 = vmatpush1.msra.mxu0 0.0
  %4078 = vmatprep.subr.mxu0 0.0
  %4079 = vmatpush1.msra.mxu0 0.0
  %4080 = vmatprep.subr.mxu0 0.0
  %4081 = vmatpush1.msra.mxu0 0.0
  %4082 = vmatprep.subr.mxu0 0.0
  %4083 = vmatpush1.msra.mxu0 0.0
  %4084 = vmatprep.subr.mxu0 0.0
  %4085 = vmatpush1.msra.mxu0 0.0
  %4086 = vmatprep.subr.mxu0 0.0
  %4087 = vmatpush1.msra.mxu0 0.0
  %4088 = vmatprep.subr.mxu0 0.0
  %4089 = vmatpush1.msra.mxu0 0.0
  %4090 = vmatprep.subr.mxu0 0.0
  %4091 = vmatpush1.msra.mxu0 0.0
  %4092 = vmatprep.subr.mxu0 0.0
  %4093 = vmatpush1.msra.mxu0 0.0
  %4094 = vmatprep.subr.mxu0 0.0
  %4095 = vmatpush1.msra.mxu0 0.0
  %4096 = vmatprep.subr.mxu0 0.0
  %4097 = vmatpush1.msra.mxu0 0.0
  %4098 = vmatprep.subr.mxu0 0.0
  %4099 = vmatpush1.msra.mxu0 0.0
  %4100 = vmatprep.subr.mxu0 0.0
  %4101 = vmatpush1.msra.mxu0 0.0
  %4102 = vmatprep.subr.mxu0 0.0
  %4103 = vmatpush1.msra.mxu0 0.0
  %4104 = vmatprep.subr.mxu0 0.0
  %4105 = vmatpush1.msra.mxu0 0.0
  %4106 = vmatprep.subr.mxu0 0.0
  %4107 = vmatpush1.msra.mxu0 0.0
  %4108 = vmatprep.subr.mxu0 0.0
  %4109 = vmatpush1.msra.mxu0 0.0
  %4110 = vmatprep.mubr.f32.mxu0 0.0
  %4111 = vmatmul.mubr.f32.gmra.mrb[0].mxu0 %v4038
  %v4112 = vpop.f32.mrb[0].mxu0
  %v4113 = vadd.f32 %v4035, %v4112
  %v4114 = vpop.f32.mrb[0].mxu0
  %4115 = vmatprep.mubr.f32.mxu0 0.0
  %4116 = vmatmul.mubr.f32.gmra.mrb[0].mxu0 %v4041
  %v4117 = vpop.f32.mrb[0].mxu0
  %v4118 = vadd.f32 %v4035, %v4117
  %v4119 = vpop.f32.mrb[0].mxu0
  %4120 = vmatprep.mubr.f32.mxu0 0.0
  %4121 = vmatmul.mubr.f32.gmra.mrb[0].mxu0 %v4044
  %v4122 = vpop.f32.mrb[0].mxu0
  %v4123 = vadd.f32 %v4035, %v4122
  %v4124 = vpop.f32.mrb[0].mxu0
  %4125 = vdwg.mxu0
  %4126 = vst [vmem:[%s20] sm:$0xff] %v4113
  %4127 = vst [vmem:[%s20 + $0x8] sm:$0xff] %v4118
  %4128 = vst [vmem:[%s20 + $0x10] sm:$0x3] %v4123
  // Predicated region
  $region82: #{dit_forward.1} parent=0 // pred_check
    _
  $region83: #{dit_forward.1} parent=0 // pred_check_branch
    %4130 = sbr.rel (0) target = $region85
  $region84: #{dit_forward.1} parent=0 // pred_region
    _
  $region85: #{dit_forward.1} parent=0 // pred_fallthru
    _
  // Predicated region
  $region86: #{dit_forward.1} parent=0 // pred_check
    _
  $region87: #{dit_forward.1} parent=0 // pred_check_branch
    %4132 = sbr.rel (0) target = $region89
  $region88: #{dit_forward.1} parent=0 // pred_region
    _
  $region89: #{dit_forward.1} parent=0 // pred_fallthru
    _

</llo_original>
